<compile_context>
chip_gen: v6e
topology: v6e:2x2x1
jax: 0.10.0
libtpu: 0.0.40
codegen_flags: <defaults>
</compile_context>

<pallas_src>
import functools

import jax
import jax.numpy as jnp
from jax.experimental import pallas as pl
from jax.experimental.pallas import tpu as pltpu


# ---------------- Fused hyper-network + prediction kernel ----------------
def metamf_kernel(uemb_ref,            # (TB, user_emb)        f32
                  we1s_ref,            # (TB, item_mem*hidden) bf16  selected emb_layer_1 block (hidden-last)
                  be1s_ref,            # (TB, item_mem)        f32   selected emb_layer_1 bias block
                  mem_ref,             # (user_emb, mem)       bf16
                  whc_ref, bhc_ref,    # (mem, 3*hidden) bf16 / (1, 3*hidden) f32
                  w1c_ref, b1c_ref,    # (hidden, 384)   bf16 / (1, 384) f32   [perm(W1) | b1 | pad]
                  w2c_ref, b2c_ref,    # (hidden, 128)   bf16 / (1, 128) f32   [W2 | b2 | pad]
                  we2_ref, be2_ref,    # (hidden, mem_n*emb) bf16 / (1, mem_n*emb) f32
                  out_ref,             # (TB, 1) f32
                  *, hidden, item_mem, item_emb, out_sz):
    f32 = jnp.float32
    bf16 = jnp.bfloat16
    H, M, E, O = hidden, item_mem, item_emb, out_sz

    # ---- hyper-network: all big GEMMs are bf16 x bf16 -> f32 accumulate (native MXU path) ----
    cf = jnp.dot(uemb_ref[...].astype(bf16), mem_ref[...],
                 preferred_element_type=f32)                                    # (TB, mem)
    hid = jnp.dot(cf.astype(bf16), whc_ref[...],
                  preferred_element_type=f32) + bhc_ref[...]
    hid = jnp.maximum(hid, 0.0)                                                 # (TB, 3H) f32
    hidb = hid.astype(bf16)
    hid1 = hidb[:, :H]
    hid2 = hidb[:, H:2 * H]
    hid3 = hidb[:, 2 * H:]
    out1 = jnp.dot(hid1, w1c_ref[...], preferred_element_type=f32) + b1c_ref[...]   # (TB, 384)
    out2 = jnp.dot(hid2, w2c_ref[...], preferred_element_type=f32) + b2c_ref[...]   # (TB, 128)
    rightf = jnp.dot(hid3, we2_ref[...], preferred_element_type=f32) + be2_ref[...] # (TB, M*E)

    # ---- per-example prediction, fully fused (no one-hot, item_num never enters the kernel) ----
    hid3f = hid[:, 2 * H:]                                                      # (TB, H) f32
    be1s = be1s_ref[...]                                                        # (TB, M) f32

    def left_col(m):
        # left[:, m] = hid3 . we1_sel[:, m, :] + be1_sel[:, m]
        blk = we1s_ref[:, m * H:(m + 1) * H].astype(f32)                        # (TB, H)
        return jnp.sum(hid3f * blk, axis=-1, keepdims=True) + be1s[:, m:m + 1]  # (TB, 1)

    # item_row[:, e] = sum_m left[:, m] * right[:, m, e]   (right stored m-major, lane-dense)
    item_row = left_col(0) * rightf[:, 0:E]
    for m in range(1, M):
        item_row = item_row + left_col(m) * rightf[:, m * E:(m + 1) * E]        # (TB, E)

    w1f = out1[:, :E * O]            # columns pre-permuted so [:, o*E:(o+1)*E] == W1[:, :, o]
    b1f = out1[:, E * O:E * O + O]
    w2f = out2[:, :O]
    b2f = out2[:, O:O + 1]

    acc = b2f                                                                   # (TB, 1)
    for o in range(O):
        pre = jnp.sum(item_row * w1f[:, o * E:(o + 1) * E],
                      axis=-1, keepdims=True) + b1f[:, o:o + 1]                 # (TB, 1)
        acc = acc + jnp.maximum(pre, 0.0) * w2f[:, o:o + 1]
    out_ref[...] = acc


# ---------------- Param preparation (one-time, outside the kernel) ----------------
def prepare_params(p, cfg):
    bf16 = jnp.bfloat16
    item_num = cfg['item_num']
    item_mem = cfg['item_mem_num']
    item_emb = cfg['item_emb_size']
    hidden = cfg['hidden_size']
    out_sz = item_emb // 4

    def pad_cols(x, mult=128):
        n_pad = (-x.shape[1]) % mult
        return jnp.pad(x, ((0, 0), (0, n_pad))) if n_pad else x

    q = {}
    q['user_embedding'] = p['user_embedding']                                   # f32 gather table (glue)
    q['memory'] = p['memory'].astype(bf16)
    # fused first-stage hidden layers 1|2|3
    q['whc'] = jnp.concatenate([p['wh1'], p['wh2'], p['wh3']], axis=1).astype(bf16)   # (mem, 3*hidden)
    q['bhc'] = jnp.concatenate([p['bh1'], p['bh2'], p['bh3']], axis=1)                # (1, 3*hidden)
    # head 1: permute weight columns (e,o)->(o,e) so the kernel reduces lane-dense E-wide stripes,
    # append the bias head, pad lane width to a multiple of 128.
    ww1p = (p['ww1'].reshape(hidden, item_emb, out_sz)
            .transpose(0, 2, 1).reshape(hidden, out_sz * item_emb))
    bw1p = (p['bw1'].reshape(1, item_emb, out_sz)
            .transpose(0, 2, 1).reshape(1, out_sz * item_emb))
    q['w1c'] = pad_cols(jnp.concatenate([ww1p, p['wb1']], axis=1)).astype(bf16)       # (hidden, 384)
    q['b1c'] = pad_cols(jnp.concatenate([bw1p, p['bb1']], axis=1))                    # (1, 384)
    # head 2: [W2 | b2], lane-padded to 128
    q['w2c'] = pad_cols(jnp.concatenate([p['ww2'], p['wb2']], axis=1)).astype(bf16)   # (hidden, 128)
    q['b2c'] = pad_cols(jnp.concatenate([p['bw2'], p['bb2']], axis=1))                # (1, 128)
    # head 3 right factor (emb_layer_2), already m-major and a 128 multiple
    q['we2'] = p['we2'].astype(bf16)                                                  # (hidden, mem_n*emb)
    q['be2'] = p['be2']
    # emb_layer_1 re-laid-out per item, hidden LAST (lane-dense gather rows):
    # (hidden, item_num*item_mem) -> (item_num, item_mem*hidden)
    q['we1_r'] = (p['we1'].reshape(hidden, item_num, item_mem)
                  .transpose(1, 2, 0).reshape(item_num, item_mem * hidden).astype(bf16))
    q['be1_r'] = p['be1'].reshape(item_num, item_mem)
    return q


# ---------------- Forward wrapper ----------------
def metamf_forward(q, user_id, item_id, cfg):
    B = user_id.shape[0]
    hidden = cfg['hidden_size']
    item_mem = cfg['item_mem_num']
    item_emb = cfg['item_emb_size']
    out_sz = item_emb // 4
    user_emb_size = q['user_embedding'].shape[1]

    # batch padding: 16 rows (bf16 sublane packing); tile TB rows per grid step
    Bp = max(16, ((B + 15) // 16) * 16)
    TB = min(Bp, 128)
    Bp = ((Bp + TB - 1) // TB) * TB
    nb = Bp // TB

    # plain-JAX glue: embedding gather + gather of the selected item's emb_layer_1 block
    uemb = q['user_embedding'][user_id]                     # (B, user_emb) f32
    we1s = q['we1_r'][item_id]                              # (B, item_mem*hidden) bf16
    be1s = q['be1_r'][item_id]                              # (B, item_mem) f32
    pad = Bp - B
    if pad:
        uemb = jnp.pad(uemb, ((0, pad), (0, 0)))
        we1s = jnp.pad(we1s, ((0, pad), (0, 0)))
        be1s = jnp.pad(be1s, ((0, pad), (0, 0)))

    kernel = functools.partial(metamf_kernel, hidden=hidden, item_mem=item_mem,
                               item_emb=item_emb, out_sz=out_sz)

    def row_spec(shape):           # tiled over the batch-row grid axis
        return pl.BlockSpec(shape, lambda i: (i, 0))

    def full_spec(shape):          # whole weight slab, same block every step
        return pl.BlockSpec(shape, lambda i: (0, 0))

    in_specs = [
        row_spec((TB, user_emb_size)),
        row_spec((TB, item_mem * hidden)),
        row_spec((TB, item_mem)),
        full_spec(q['memory'].shape),
        full_spec(q['whc'].shape),
        full_spec(q['bhc'].shape),
        full_spec(q['w1c'].shape),
        full_spec(q['b1c'].shape),
        full_spec(q['w2c'].shape),
        full_spec(q['b2c'].shape),
        full_spec(q['we2'].shape),
        full_spec(q['be2'].shape),
    ]

    out = pl.pallas_call(
        kernel,
        grid=(nb,),
        in_specs=in_specs,
        out_specs=pl.BlockSpec((TB, 1), lambda i: (i, 0)),
        out_shape=jax.ShapeDtypeStruct((Bp, 1), jnp.float32),
        compiler_params=pltpu.CompilerParams(dimension_semantics=("parallel",)),
    )(uemb, we1s, be1s, q['memory'], q['whc'], q['bhc'],
      q['w1c'], q['b1c'], q['w2c'], q['b2c'], q['we2'], q['be2'])

    return out[:B, 0]              # torch.squeeze: -> (B,)


# ---------------- Pure-JAX reference (faithful to the PyTorch module, f32) ----------------
def metamf_reference(params, user_id, item_id, cfg):
    item_num = cfg['item_num']
    item_emb = cfg['item_emb_size']
    item_mem = cfg['item_mem_num']
    out_sz = item_emb // 4
    B = user_id.shape[0]

    uemb = params['user_embedding'][user_id]
    cf = uemb @ params['memory']

    def head(wh, bh, wa, ba, wb, bb):
        hid = jax.nn.relu(cf @ wh + bh)
        return hid @ wa + ba, hid @ wb + bb

    w1f, b1f = head(params['wh1'], params['bh1'], params['ww1'], params['bw1'],
                    params['wb1'], params['bb1'])
    w2f, b2f = head(params['wh2'], params['bh2'], params['ww2'], params['bw2'],
                    params['wb2'], params['bb2'])
    lf, rf = head(params['wh3'], params['bh3'], params['we1'], params['be1'],
                  params['we2'], params['be2'])

    w1 = w1f.reshape(B, item_emb, out_sz)
    b1 = b1f.reshape(B, 1, out_sz)
    w2 = w2f.reshape(B, out_sz, 1)
    b2 = b2f.reshape(B, 1, 1)
    emb_left = lf.reshape(B, item_num, item_mem)
    emb_right = rf.reshape(B, item_mem, item_emb)

    item_embedding = jnp.matmul(emb_left, emb_right)
    one_hot = jax.nn.one_hot(item_id, item_num, dtype=jnp.float32)[:, None, :]
    item_e = jnp.matmul(one_hot, item_embedding)
    out = jax.nn.relu(jnp.matmul(item_e, w1) + b1)
    out = jnp.matmul(out, w2) + b2
    return jnp.squeeze(out)


# ---------------- Deterministic parameter init ----------------
def init_params(key, cfg):
    def lin(k, fin, fout):
        k1, k2 = jax.random.split(k)
        w = jax.random.normal(k1, (fin, fout), jnp.float32) / jnp.sqrt(float(fin))
        # weights are deployed in bf16; keep the master copy bf16-exact so the f32 reference
        # and the bf16-stored kernel weights are numerically identical.
        w = w.astype(jnp.bfloat16).astype(jnp.float32)
        b = 0.01 * jax.random.normal(k2, (1, fout), jnp.float32)
        return w, b

    ks = jax.random.split(key, 11)
    un, inum = cfg['user_num'], cfg['item_num']
    ie, im = cfg['item_emb_size'], cfg['item_mem_num']
    ue, ms, hs = cfg['user_emb_size'], cfg['mem_size'], cfg['hidden_size']
    out_sz = ie // 4

    p = {}
    p['user_embedding'] = jax.random.normal(ks[0], (un, ue), jnp.float32)                 # nn.Embedding
    mem = jax.random.normal(ks[1], (ue, ms), jnp.float32) * jnp.sqrt(2.0 / (ue + ms))     # xavier_normal_
    p['memory'] = mem.astype(jnp.bfloat16).astype(jnp.float32)
    p['wh1'], p['bh1'] = lin(ks[2], ms, hs)
    p['ww1'], p['bw1'] = lin(ks[3], hs, ie * out_sz)
    p['wb1'], p['bb1'] = lin(ks[4], hs, out_sz)
    p['wh2'], p['bh2'] = lin(ks[5], ms, hs)
    p['ww2'], p['bw2'] = lin(ks[6], hs, out_sz * 1)
    p['wb2'], p['bb2'] = lin(ks[7], hs, 1)
    p['wh3'], p['bh3'] = lin(ks[8], ms, hs)
    p['we1'], p['be1'] = lin(ks[9], hs, inum * im)
    p['we2'], p['be2'] = lin(ks[10], hs, im * ie)
    return p


if __name__ == "__main__":
    cfg = dict(user_num=16, item_num=64, item_emb_size=32, item_mem_num=8,
               user_emb_size=32, mem_size=128, hidden_size=512)
    key = jax.random.PRNGKey(0)
    kp, ku, ki = jax.random.split(key, 3)
    params = init_params(kp, cfg)
    prepped = prepare_params(params, cfg)      # one-time: concat/permute fusion + bf16 + we1 re-layout

    B = 4
    user_id = jax.random.randint(ku, (B,), 0, cfg['user_num'], dtype=jnp.int32)
    item_id = jax.random.randint(ki, (B,), 0, cfg['item_num'], dtype=jnp.int32)

    out = metamf_forward(prepped, user_id, item_id, cfg)
    out = jax.block_until_ready(out)

    ref = metamf_reference(params, user_id, item_id, cfg)
    assert out.shape == ref.shape == (B,)
    assert bool(jnp.all(jnp.isfinite(out)))
    assert jnp.allclose(out, ref, rtol=5e-2, atol=5e-2), (out, ref)
    print("KERNEL_OK")
</pallas_src>

<mosaic_0001>
module attributes {stable_mosaic.version = 11 : i64} {
  func.func @metamf_kernel(%arg0: i32, %arg1: memref<16x32xf32, #tpu.memory_space<vmem>>, %arg2: memref<16x4096xbf16, #tpu.memory_space<vmem>>, %arg3: memref<16x8xf32, #tpu.memory_space<vmem>>, %arg4: memref<32x128xbf16, #tpu.memory_space<vmem>>, %arg5: memref<128x1536xbf16, #tpu.memory_space<vmem>>, %arg6: memref<1x1536xf32, #tpu.memory_space<vmem>>, %arg7: memref<512x384xbf16, #tpu.memory_space<vmem>>, %arg8: memref<1x384xf32, #tpu.memory_space<vmem>>, %arg9: memref<512x128xbf16, #tpu.memory_space<vmem>>, %arg10: memref<1x128xf32, #tpu.memory_space<vmem>>, %arg11: memref<512x256xbf16, #tpu.memory_space<vmem>>, %arg12: memref<1x256xf32, #tpu.memory_space<vmem>>, %arg13: memref<16x1xf32, #tpu.memory_space<vmem>>) attributes {dimension_semantics = [#tpu.dimension_semantics<parallel>], iteration_bounds = array<i64: 1>, scalar_prefetch = 0 : i64, scratch_operands = 0 : i64, tpu.core_type = #tpu.core_type<tc>, window_params = [{transform_indices = @transform_0, window_bounds = array<i64: 16, 32>}, {transform_indices = @transform_1, window_bounds = array<i64: 16, 4096>}, {transform_indices = @transform_2, window_bounds = array<i64: 16, 8>}, {pipeline_mode = #tpu.pipeline_mode<synchronous>, transform_indices = @transform_3, window_bounds = array<i64: 32, 128>}, {pipeline_mode = #tpu.pipeline_mode<synchronous>, transform_indices = @transform_4, window_bounds = array<i64: 128, 1536>}, {pipeline_mode = #tpu.pipeline_mode<synchronous>, transform_indices = @transform_5, window_bounds = array<i64: 1, 1536>}, {pipeline_mode = #tpu.pipeline_mode<synchronous>, transform_indices = @transform_6, window_bounds = array<i64: 512, 384>}, {pipeline_mode = #tpu.pipeline_mode<synchronous>, transform_indices = @transform_7, window_bounds = array<i64: 1, 384>}, {pipeline_mode = #tpu.pipeline_mode<synchronous>, transform_indices = @transform_8, window_bounds = array<i64: 512, 128>}, {pipeline_mode = #tpu.pipeline_mode<synchronous>, transform_indices = @transform_9, window_bounds = array<i64: 1, 128>}, {pipeline_mode = #tpu.pipeline_mode<synchronous>, transform_indices = @transform_10, window_bounds = array<i64: 512, 256>}, {pipeline_mode = #tpu.pipeline_mode<synchronous>, transform_indices = @transform_11, window_bounds = array<i64: 1, 256>}, {transform_indices = @transform_12, window_bounds = array<i64: 16, 1>}]} {
    %c0 = arith.constant 0 : index
    %c0_0 = arith.constant 0 : index
    %0 = vector.load %arg1[%c0, %c0_0] : memref<16x32xf32, #tpu.memory_space<vmem>>, vector<16x32xf32>
    %1 = arith.truncf %0 : vector<16x32xf32> to vector<16x32xbf16>
    %c0_1 = arith.constant 0 : index
    %c0_2 = arith.constant 0 : index
    %2 = vector.load %arg4[%c0_1, %c0_2] : memref<32x128xbf16, #tpu.memory_space<vmem>>, vector<32x128xbf16>
    %cst = arith.constant dense<0.000000e+00> : vector<16x128xf32>
    %3 = tpu.matmul %1, %2, %cst {dimension_numbers = #tpu.dot_dimension_numbers<[1], [0], [0], [1], [0, 0, 1, 1], [], []>} : vector<16x32xbf16>, vector<32x128xbf16>, vector<16x128xf32> -> vector<16x128xf32>
    %4 = arith.truncf %3 : vector<16x128xf32> to vector<16x128xbf16>
    %c0_3 = arith.constant 0 : index
    %c0_4 = arith.constant 0 : index
    %5 = vector.load %arg5[%c0_3, %c0_4] : memref<128x1536xbf16, #tpu.memory_space<vmem>>, vector<128x1536xbf16>
    %cst_5 = arith.constant dense<0.000000e+00> : vector<16x1536xf32>
    %6 = tpu.matmul %4, %5, %cst_5 {dimension_numbers = #tpu.dot_dimension_numbers<[1], [0], [0], [1], [0, 0, 1, 1], [], []>} : vector<16x128xbf16>, vector<128x1536xbf16>, vector<16x1536xf32> -> vector<16x1536xf32>
    %c0_6 = arith.constant 0 : index
    %c0_7 = arith.constant 0 : index
    %7 = vector.load %arg6[%c0_6, %c0_7] : memref<1x1536xf32, #tpu.memory_space<vmem>>, vector<1x1536xf32>
    %8 = vector.broadcast %7 : vector<1x1536xf32> to vector<16x1536xf32>
    %9 = arith.addf %6, %8 : vector<16x1536xf32>
    %cst_8 = arith.constant 0.000000e+00 : f32
    %10 = vector.broadcast %cst_8 : f32 to vector<16x1536xf32>
    %11 = arith.maximumf %9, %10 : vector<16x1536xf32>
    %12 = arith.truncf %11 : vector<16x1536xf32> to vector<16x1536xbf16>
    %13 = vector.extract_strided_slice %12 {offsets = [0, 0], sizes = [16, 512], strides = [1, 1]} : vector<16x1536xbf16> to vector<16x512xbf16>
    %14 = vector.extract_strided_slice %12 {offsets = [0, 512], sizes = [16, 512], strides = [1, 1]} : vector<16x1536xbf16> to vector<16x512xbf16>
    %15 = vector.extract_strided_slice %12 {offsets = [0, 1024], sizes = [16, 512], strides = [1, 1]} : vector<16x1536xbf16> to vector<16x512xbf16>
    %c0_9 = arith.constant 0 : index
    %c0_10 = arith.constant 0 : index
    %16 = vector.load %arg7[%c0_9, %c0_10] : memref<512x384xbf16, #tpu.memory_space<vmem>>, vector<512x384xbf16>
    %cst_11 = arith.constant dense<0.000000e+00> : vector<16x384xf32>
    %17 = tpu.matmul %13, %16, %cst_11 {dimension_numbers = #tpu.dot_dimension_numbers<[1], [0], [0], [1], [0, 0, 1, 1], [], []>} : vector<16x512xbf16>, vector<512x384xbf16>, vector<16x384xf32> -> vector<16x384xf32>
    %c0_12 = arith.constant 0 : index
    %c0_13 = arith.constant 0 : index
    %18 = vector.load %arg8[%c0_12, %c0_13] : memref<1x384xf32, #tpu.memory_space<vmem>>, vector<1x384xf32>
    %19 = vector.broadcast %18 : vector<1x384xf32> to vector<16x384xf32>
    %20 = arith.addf %17, %19 : vector<16x384xf32>
    %c0_14 = arith.constant 0 : index
    %c0_15 = arith.constant 0 : index
    %21 = vector.load %arg9[%c0_14, %c0_15] : memref<512x128xbf16, #tpu.memory_space<vmem>>, vector<512x128xbf16>
    %cst_16 = arith.constant dense<0.000000e+00> : vector<16x128xf32>
    %22 = tpu.matmul %14, %21, %cst_16 {dimension_numbers = #tpu.dot_dimension_numbers<[1], [0], [0], [1], [0, 0, 1, 1], [], []>} : vector<16x512xbf16>, vector<512x128xbf16>, vector<16x128xf32> -> vector<16x128xf32>
    %c0_17 = arith.constant 0 : index
    %c0_18 = arith.constant 0 : index
    %23 = vector.load %arg10[%c0_17, %c0_18] : memref<1x128xf32, #tpu.memory_space<vmem>>, vector<1x128xf32>
    %24 = vector.broadcast %23 : vector<1x128xf32> to vector<16x128xf32>
    %25 = arith.addf %22, %24 : vector<16x128xf32>
    %c0_19 = arith.constant 0 : index
    %c0_20 = arith.constant 0 : index
    %26 = vector.load %arg11[%c0_19, %c0_20] : memref<512x256xbf16, #tpu.memory_space<vmem>>, vector<512x256xbf16>
    %cst_21 = arith.constant dense<0.000000e+00> : vector<16x256xf32>
    %27 = tpu.matmul %15, %26, %cst_21 {dimension_numbers = #tpu.dot_dimension_numbers<[1], [0], [0], [1], [0, 0, 1, 1], [], []>} : vector<16x512xbf16>, vector<512x256xbf16>, vector<16x256xf32> -> vector<16x256xf32>
    %c0_22 = arith.constant 0 : index
    %c0_23 = arith.constant 0 : index
    %28 = vector.load %arg12[%c0_22, %c0_23] : memref<1x256xf32, #tpu.memory_space<vmem>>, vector<1x256xf32>
    %29 = vector.broadcast %28 : vector<1x256xf32> to vector<16x256xf32>
    %30 = arith.addf %27, %29 : vector<16x256xf32>
    %31 = vector.extract_strided_slice %11 {offsets = [0, 1024], sizes = [16, 512], strides = [1, 1]} : vector<16x1536xf32> to vector<16x512xf32>
    %c0_24 = arith.constant 0 : index
    %c0_25 = arith.constant 0 : index
    %32 = vector.load %arg3[%c0_24, %c0_25] : memref<16x8xf32, #tpu.memory_space<vmem>>, vector<16x8xf32>
    %c0_26 = arith.constant 0 : index
    %c0_27 = arith.constant 0 : index
    %33 = vector.load %arg2[%c0_26, %c0_27] : memref<16x4096xbf16, #tpu.memory_space<vmem>>, vector<16x512xbf16>
    %34 = arith.extf %33 : vector<16x512xbf16> to vector<16x512xf32>
    %35 = arith.mulf %31, %34 : vector<16x512xf32>
    %cst_28 = arith.constant dense<0.000000e+00> : vector<16xf32>
    %36 = vector.multi_reduction <add>, %35, %cst_28 [1] : vector<16x512xf32> to vector<16xf32>
    %37 = vector.shape_cast %36 : vector<16xf32> to vector<16x1xf32>
    %38 = vector.extract_strided_slice %32 {offsets = [0, 0], sizes = [16, 1], strides = [1, 1]} : vector<16x8xf32> to vector<16x1xf32>
    %39 = arith.addf %37, %38 : vector<16x1xf32>
    %40 = vector.extract_strided_slice %30 {offsets = [0, 0], sizes = [16, 32], strides = [1, 1]} : vector<16x256xf32> to vector<16x32xf32>
    %41 = vector.broadcast %39 : vector<16x1xf32> to vector<16x32xf32>
    %42 = arith.mulf %41, %40 : vector<16x32xf32>
    %c0_29 = arith.constant 0 : index
    %c512 = arith.constant 512 : index
    %43 = vector.load %arg2[%c0_29, %c512] : memref<16x4096xbf16, #tpu.memory_space<vmem>>, vector<16x512xbf16>
    %44 = arith.extf %43 : vector<16x512xbf16> to vector<16x512xf32>
    %45 = arith.mulf %31, %44 : vector<16x512xf32>
    %cst_30 = arith.constant dense<0.000000e+00> : vector<16xf32>
    %46 = vector.multi_reduction <add>, %45, %cst_30 [1] : vector<16x512xf32> to vector<16xf32>
    %47 = vector.shape_cast %46 : vector<16xf32> to vector<16x1xf32>
    %48 = vector.extract_strided_slice %32 {offsets = [0, 1], sizes = [16, 1], strides = [1, 1]} : vector<16x8xf32> to vector<16x1xf32>
    %49 = arith.addf %47, %48 : vector<16x1xf32>
    %50 = vector.extract_strided_slice %30 {offsets = [0, 32], sizes = [16, 32], strides = [1, 1]} : vector<16x256xf32> to vector<16x32xf32>
    %51 = vector.broadcast %49 : vector<16x1xf32> to vector<16x32xf32>
    %52 = arith.mulf %51, %50 : vector<16x32xf32>
    %53 = arith.addf %42, %52 : vector<16x32xf32>
    %c0_31 = arith.constant 0 : index
    %c1024 = arith.constant 1024 : index
    %54 = vector.load %arg2[%c0_31, %c1024] : memref<16x4096xbf16, #tpu.memory_space<vmem>>, vector<16x512xbf16>
    %55 = arith.extf %54 : vector<16x512xbf16> to vector<16x512xf32>
    %56 = arith.mulf %31, %55 : vector<16x512xf32>
    %cst_32 = arith.constant dense<0.000000e+00> : vector<16xf32>
    %57 = vector.multi_reduction <add>, %56, %cst_32 [1] : vector<16x512xf32> to vector<16xf32>
    %58 = vector.shape_cast %57 : vector<16xf32> to vector<16x1xf32>
    %59 = vector.extract_strided_slice %32 {offsets = [0, 2], sizes = [16, 1], strides = [1, 1]} : vector<16x8xf32> to vector<16x1xf32>
    %60 = arith.addf %58, %59 : vector<16x1xf32>
    %61 = vector.extract_strided_slice %30 {offsets = [0, 64], sizes = [16, 32], strides = [1, 1]} : vector<16x256xf32> to vector<16x32xf32>
    %62 = vector.broadcast %60 : vector<16x1xf32> to vector<16x32xf32>
    %63 = arith.mulf %62, %61 : vector<16x32xf32>
    %64 = arith.addf %53, %63 : vector<16x32xf32>
    %c0_33 = arith.constant 0 : index
    %c1536 = arith.constant 1536 : index
    %65 = vector.load %arg2[%c0_33, %c1536] : memref<16x4096xbf16, #tpu.memory_space<vmem>>, vector<16x512xbf16>
    %66 = arith.extf %65 : vector<16x512xbf16> to vector<16x512xf32>
    %67 = arith.mulf %31, %66 : vector<16x512xf32>
    %cst_34 = arith.constant dense<0.000000e+00> : vector<16xf32>
    %68 = vector.multi_reduction <add>, %67, %cst_34 [1] : vector<16x512xf32> to vector<16xf32>
    %69 = vector.shape_cast %68 : vector<16xf32> to vector<16x1xf32>
    %70 = vector.extract_strided_slice %32 {offsets = [0, 3], sizes = [16, 1], strides = [1, 1]} : vector<16x8xf32> to vector<16x1xf32>
    %71 = arith.addf %69, %70 : vector<16x1xf32>
    %72 = vector.extract_strided_slice %30 {offsets = [0, 96], sizes = [16, 32], strides = [1, 1]} : vector<16x256xf32> to vector<16x32xf32>
    %73 = vector.broadcast %71 : vector<16x1xf32> to vector<16x32xf32>
    %74 = arith.mulf %73, %72 : vector<16x32xf32>
    %75 = arith.addf %64, %74 : vector<16x32xf32>
    %c0_35 = arith.constant 0 : index
    %c2048 = arith.constant 2048 : index
    %76 = vector.load %arg2[%c0_35, %c2048] : memref<16x4096xbf16, #tpu.memory_space<vmem>>, vector<16x512xbf16>
    %77 = arith.extf %76 : vector<16x512xbf16> to vector<16x512xf32>
    %78 = arith.mulf %31, %77 : vector<16x512xf32>
    %cst_36 = arith.constant dense<0.000000e+00> : vector<16xf32>
    %79 = vector.multi_reduction <add>, %78, %cst_36 [1] : vector<16x512xf32> to vector<16xf32>
    %80 = vector.shape_cast %79 : vector<16xf32> to vector<16x1xf32>
    %81 = vector.extract_strided_slice %32 {offsets = [0, 4], sizes = [16, 1], strides = [1, 1]} : vector<16x8xf32> to vector<16x1xf32>
    %82 = arith.addf %80, %81 : vector<16x1xf32>
    %83 = vector.extract_strided_slice %30 {offsets = [0, 128], sizes = [16, 32], strides = [1, 1]} : vector<16x256xf32> to vector<16x32xf32>
    %84 = vector.broadcast %82 : vector<16x1xf32> to vector<16x32xf32>
    %85 = arith.mulf %84, %83 : vector<16x32xf32>
    %86 = arith.addf %75, %85 : vector<16x32xf32>
    %c0_37 = arith.constant 0 : index
    %c2560 = arith.constant 2560 : index
    %87 = vector.load %arg2[%c0_37, %c2560] : memref<16x4096xbf16, #tpu.memory_space<vmem>>, vector<16x512xbf16>
    %88 = arith.extf %87 : vector<16x512xbf16> to vector<16x512xf32>
    %89 = arith.mulf %31, %88 : vector<16x512xf32>
    %cst_38 = arith.constant dense<0.000000e+00> : vector<16xf32>
    %90 = vector.multi_reduction <add>, %89, %cst_38 [1] : vector<16x512xf32> to vector<16xf32>
    %91 = vector.shape_cast %90 : vector<16xf32> to vector<16x1xf32>
    %92 = vector.extract_strided_slice %32 {offsets = [0, 5], sizes = [16, 1], strides = [1, 1]} : vector<16x8xf32> to vector<16x1xf32>
    %93 = arith.addf %91, %92 : vector<16x1xf32>
    %94 = vector.extract_strided_slice %30 {offsets = [0, 160], sizes = [16, 32], strides = [1, 1]} : vector<16x256xf32> to vector<16x32xf32>
    %95 = vector.broadcast %93 : vector<16x1xf32> to vector<16x32xf32>
    %96 = arith.mulf %95, %94 : vector<16x32xf32>
    %97 = arith.addf %86, %96 : vector<16x32xf32>
    %c0_39 = arith.constant 0 : index
    %c3072 = arith.constant 3072 : index
    %98 = vector.load %arg2[%c0_39, %c3072] : memref<16x4096xbf16, #tpu.memory_space<vmem>>, vector<16x512xbf16>
    %99 = arith.extf %98 : vector<16x512xbf16> to vector<16x512xf32>
    %100 = arith.mulf %31, %99 : vector<16x512xf32>
    %cst_40 = arith.constant dense<0.000000e+00> : vector<16xf32>
    %101 = vector.multi_reduction <add>, %100, %cst_40 [1] : vector<16x512xf32> to vector<16xf32>
    %102 = vector.shape_cast %101 : vector<16xf32> to vector<16x1xf32>
    %103 = vector.extract_strided_slice %32 {offsets = [0, 6], sizes = [16, 1], strides = [1, 1]} : vector<16x8xf32> to vector<16x1xf32>
    %104 = arith.addf %102, %103 : vector<16x1xf32>
    %105 = vector.extract_strided_slice %30 {offsets = [0, 192], sizes = [16, 32], strides = [1, 1]} : vector<16x256xf32> to vector<16x32xf32>
    %106 = vector.broadcast %104 : vector<16x1xf32> to vector<16x32xf32>
    %107 = arith.mulf %106, %105 : vector<16x32xf32>
    %108 = arith.addf %97, %107 : vector<16x32xf32>
    %c0_41 = arith.constant 0 : index
    %c3584 = arith.constant 3584 : index
    %109 = vector.load %arg2[%c0_41, %c3584] : memref<16x4096xbf16, #tpu.memory_space<vmem>>, vector<16x512xbf16>
    %110 = arith.extf %109 : vector<16x512xbf16> to vector<16x512xf32>
    %111 = arith.mulf %31, %110 : vector<16x512xf32>
    %cst_42 = arith.constant dense<0.000000e+00> : vector<16xf32>
    %112 = vector.multi_reduction <add>, %111, %cst_42 [1] : vector<16x512xf32> to vector<16xf32>
    %113 = vector.shape_cast %112 : vector<16xf32> to vector<16x1xf32>
    %114 = vector.extract_strided_slice %32 {offsets = [0, 7], sizes = [16, 1], strides = [1, 1]} : vector<16x8xf32> to vector<16x1xf32>
    %115 = arith.addf %113, %114 : vector<16x1xf32>
    %116 = vector.extract_strided_slice %30 {offsets = [0, 224], sizes = [16, 32], strides = [1, 1]} : vector<16x256xf32> to vector<16x32xf32>
    %117 = vector.broadcast %115 : vector<16x1xf32> to vector<16x32xf32>
    %118 = arith.mulf %117, %116 : vector<16x32xf32>
    %119 = arith.addf %108, %118 : vector<16x32xf32>
    %120 = vector.extract_strided_slice %20 {offsets = [0, 0], sizes = [16, 256], strides = [1, 1]} : vector<16x384xf32> to vector<16x256xf32>
    %121 = vector.extract_strided_slice %20 {offsets = [0, 256], sizes = [16, 8], strides = [1, 1]} : vector<16x384xf32> to vector<16x8xf32>
    %122 = vector.extract_strided_slice %25 {offsets = [0, 0], sizes = [16, 8], strides = [1, 1]} : vector<16x128xf32> to vector<16x8xf32>
    %123 = vector.extract_strided_slice %25 {offsets = [0, 8], sizes = [16, 1], strides = [1, 1]} : vector<16x128xf32> to vector<16x1xf32>
    %124 = vector.extract_strided_slice %120 {offsets = [0, 0], sizes = [16, 32], strides = [1, 1]} : vector<16x256xf32> to vector<16x32xf32>
    %125 = arith.mulf %119, %124 : vector<16x32xf32>
    %cst_43 = arith.constant dense<0.000000e+00> : vector<16xf32>
    %126 = vector.multi_reduction <add>, %125, %cst_43 [1] : vector<16x32xf32> to vector<16xf32>
    %127 = vector.shape_cast %126 : vector<16xf32> to vector<16x1xf32>
    %128 = vector.extract_strided_slice %121 {offsets = [0, 0], sizes = [16, 1], strides = [1, 1]} : vector<16x8xf32> to vector<16x1xf32>
    %129 = arith.addf %127, %128 : vector<16x1xf32>
    %cst_44 = arith.constant 0.000000e+00 : f32
    %130 = vector.broadcast %cst_44 : f32 to vector<16x1xf32>
    %131 = arith.maximumf %129, %130 : vector<16x1xf32>
    %132 = vector.extract_strided_slice %122 {offsets = [0, 0], sizes = [16, 1], strides = [1, 1]} : vector<16x8xf32> to vector<16x1xf32>
    %133 = arith.mulf %131, %132 : vector<16x1xf32>
    %134 = arith.addf %123, %133 : vector<16x1xf32>
    %135 = vector.extract_strided_slice %120 {offsets = [0, 32], sizes = [16, 32], strides = [1, 1]} : vector<16x256xf32> to vector<16x32xf32>
    %136 = arith.mulf %119, %135 : vector<16x32xf32>
    %cst_45 = arith.constant dense<0.000000e+00> : vector<16xf32>
    %137 = vector.multi_reduction <add>, %136, %cst_45 [1] : vector<16x32xf32> to vector<16xf32>
    %138 = vector.shape_cast %137 : vector<16xf32> to vector<16x1xf32>
    %139 = vector.extract_strided_slice %121 {offsets = [0, 1], sizes = [16, 1], strides = [1, 1]} : vector<16x8xf32> to vector<16x1xf32>
    %140 = arith.addf %138, %139 : vector<16x1xf32>
    %cst_46 = arith.constant 0.000000e+00 : f32
    %141 = vector.broadcast %cst_46 : f32 to vector<16x1xf32>
    %142 = arith.maximumf %140, %141 : vector<16x1xf32>
    %143 = vector.extract_strided_slice %122 {offsets = [0, 1], sizes = [16, 1], strides = [1, 1]} : vector<16x8xf32> to vector<16x1xf32>
    %144 = arith.mulf %142, %143 : vector<16x1xf32>
    %145 = arith.addf %134, %144 : vector<16x1xf32>
    %146 = vector.extract_strided_slice %120 {offsets = [0, 64], sizes = [16, 32], strides = [1, 1]} : vector<16x256xf32> to vector<16x32xf32>
    %147 = arith.mulf %119, %146 : vector<16x32xf32>
    %cst_47 = arith.constant dense<0.000000e+00> : vector<16xf32>
    %148 = vector.multi_reduction <add>, %147, %cst_47 [1] : vector<16x32xf32> to vector<16xf32>
    %149 = vector.shape_cast %148 : vector<16xf32> to vector<16x1xf32>
    %150 = vector.extract_strided_slice %121 {offsets = [0, 2], sizes = [16, 1], strides = [1, 1]} : vector<16x8xf32> to vector<16x1xf32>
    %151 = arith.addf %149, %150 : vector<16x1xf32>
    %cst_48 = arith.constant 0.000000e+00 : f32
    %152 = vector.broadcast %cst_48 : f32 to vector<16x1xf32>
    %153 = arith.maximumf %151, %152 : vector<16x1xf32>
    %154 = vector.extract_strided_slice %122 {offsets = [0, 2], sizes = [16, 1], strides = [1, 1]} : vector<16x8xf32> to vector<16x1xf32>
    %155 = arith.mulf %153, %154 : vector<16x1xf32>
    %156 = arith.addf %145, %155 : vector<16x1xf32>
    %157 = vector.extract_strided_slice %120 {offsets = [0, 96], sizes = [16, 32], strides = [1, 1]} : vector<16x256xf32> to vector<16x32xf32>
    %158 = arith.mulf %119, %157 : vector<16x32xf32>
    %cst_49 = arith.constant dense<0.000000e+00> : vector<16xf32>
    %159 = vector.multi_reduction <add>, %158, %cst_49 [1] : vector<16x32xf32> to vector<16xf32>
    %160 = vector.shape_cast %159 : vector<16xf32> to vector<16x1xf32>
    %161 = vector.extract_strided_slice %121 {offsets = [0, 3], sizes = [16, 1], strides = [1, 1]} : vector<16x8xf32> to vector<16x1xf32>
    %162 = arith.addf %160, %161 : vector<16x1xf32>
    %cst_50 = arith.constant 0.000000e+00 : f32
    %163 = vector.broadcast %cst_50 : f32 to vector<16x1xf32>
    %164 = arith.maximumf %162, %163 : vector<16x1xf32>
    %165 = vector.extract_strided_slice %122 {offsets = [0, 3], sizes = [16, 1], strides = [1, 1]} : vector<16x8xf32> to vector<16x1xf32>
    %166 = arith.mulf %164, %165 : vector<16x1xf32>
    %167 = arith.addf %156, %166 : vector<16x1xf32>
    %168 = vector.extract_strided_slice %120 {offsets = [0, 128], sizes = [16, 32], strides = [1, 1]} : vector<16x256xf32> to vector<16x32xf32>
    %169 = arith.mulf %119, %168 : vector<16x32xf32>
    %cst_51 = arith.constant dense<0.000000e+00> : vector<16xf32>
    %170 = vector.multi_reduction <add>, %169, %cst_51 [1] : vector<16x32xf32> to vector<16xf32>
    %171 = vector.shape_cast %170 : vector<16xf32> to vector<16x1xf32>
    %172 = vector.extract_strided_slice %121 {offsets = [0, 4], sizes = [16, 1], strides = [1, 1]} : vector<16x8xf32> to vector<16x1xf32>
    %173 = arith.addf %171, %172 : vector<16x1xf32>
    %cst_52 = arith.constant 0.000000e+00 : f32
    %174 = vector.broadcast %cst_52 : f32 to vector<16x1xf32>
    %175 = arith.maximumf %173, %174 : vector<16x1xf32>
    %176 = vector.extract_strided_slice %122 {offsets = [0, 4], sizes = [16, 1], strides = [1, 1]} : vector<16x8xf32> to vector<16x1xf32>
    %177 = arith.mulf %175, %176 : vector<16x1xf32>
    %178 = arith.addf %167, %177 : vector<16x1xf32>
    %179 = vector.extract_strided_slice %120 {offsets = [0, 160], sizes = [16, 32], strides = [1, 1]} : vector<16x256xf32> to vector<16x32xf32>
    %180 = arith.mulf %119, %179 : vector<16x32xf32>
    %cst_53 = arith.constant dense<0.000000e+00> : vector<16xf32>
    %181 = vector.multi_reduction <add>, %180, %cst_53 [1] : vector<16x32xf32> to vector<16xf32>
    %182 = vector.shape_cast %181 : vector<16xf32> to vector<16x1xf32>
    %183 = vector.extract_strided_slice %121 {offsets = [0, 5], sizes = [16, 1], strides = [1, 1]} : vector<16x8xf32> to vector<16x1xf32>
    %184 = arith.addf %182, %183 : vector<16x1xf32>
    %cst_54 = arith.constant 0.000000e+00 : f32
    %185 = vector.broadcast %cst_54 : f32 to vector<16x1xf32>
    %186 = arith.maximumf %184, %185 : vector<16x1xf32>
    %187 = vector.extract_strided_slice %122 {offsets = [0, 5], sizes = [16, 1], strides = [1, 1]} : vector<16x8xf32> to vector<16x1xf32>
    %188 = arith.mulf %186, %187 : vector<16x1xf32>
    %189 = arith.addf %178, %188 : vector<16x1xf32>
    %190 = vector.extract_strided_slice %120 {offsets = [0, 192], sizes = [16, 32], strides = [1, 1]} : vector<16x256xf32> to vector<16x32xf32>
    %191 = arith.mulf %119, %190 : vector<16x32xf32>
    %cst_55 = arith.constant dense<0.000000e+00> : vector<16xf32>
    %192 = vector.multi_reduction <add>, %191, %cst_55 [1] : vector<16x32xf32> to vector<16xf32>
    %193 = vector.shape_cast %192 : vector<16xf32> to vector<16x1xf32>
    %194 = vector.extract_strided_slice %121 {offsets = [0, 6], sizes = [16, 1], strides = [1, 1]} : vector<16x8xf32> to vector<16x1xf32>
    %195 = arith.addf %193, %194 : vector<16x1xf32>
    %cst_56 = arith.constant 0.000000e+00 : f32
    %196 = vector.broadcast %cst_56 : f32 to vector<16x1xf32>
    %197 = arith.maximumf %195, %196 : vector<16x1xf32>
    %198 = vector.extract_strided_slice %122 {offsets = [0, 6], sizes = [16, 1], strides = [1, 1]} : vector<16x8xf32> to vector<16x1xf32>
    %199 = arith.mulf %197, %198 : vector<16x1xf32>
    %200 = arith.addf %189, %199 : vector<16x1xf32>
    %201 = vector.extract_strided_slice %120 {offsets = [0, 224], sizes = [16, 32], strides = [1, 1]} : vector<16x256xf32> to vector<16x32xf32>
    %202 = arith.mulf %119, %201 : vector<16x32xf32>
    %cst_57 = arith.constant dense<0.000000e+00> : vector<16xf32>
    %203 = vector.multi_reduction <add>, %202, %cst_57 [1] : vector<16x32xf32> to vector<16xf32>
    %204 = vector.shape_cast %203 : vector<16xf32> to vector<16x1xf32>
    %205 = vector.extract_strided_slice %121 {offsets = [0, 7], sizes = [16, 1], strides = [1, 1]} : vector<16x8xf32> to vector<16x1xf32>
    %206 = arith.addf %204, %205 : vector<16x1xf32>
    %cst_58 = arith.constant 0.000000e+00 : f32
    %207 = vector.broadcast %cst_58 : f32 to vector<16x1xf32>
    %208 = arith.maximumf %206, %207 : vector<16x1xf32>
    %209 = vector.extract_strided_slice %122 {offsets = [0, 7], sizes = [16, 1], strides = [1, 1]} : vector<16x8xf32> to vector<16x1xf32>
    %210 = arith.mulf %208, %209 : vector<16x1xf32>
    %211 = arith.addf %200, %210 : vector<16x1xf32>
    %c0_59 = arith.constant 0 : index
    %c0_60 = arith.constant 0 : index
    %212 = vector.load %arg13[%c0_59, %c0_60] : memref<16x1xf32, #tpu.memory_space<vmem>>, vector<16x1xf32>
    tpu.vector_store %arg13[%c0_59, %c0_60], %211 {strides = array<i32>} : memref<16x1xf32, #tpu.memory_space<vmem>>, vector<16x1xf32>,
    return
  }
  func.func @transform_0(%arg0: i32) -> (i32, i32) {
    %c0_i32 = arith.constant 0 : i32
    %c0_i32_0 = arith.constant 0 : i32
    return %arg0, %c0_i32 : i32, i32
  }
  func.func @transform_1(%arg0: i32) -> (i32, i32) {
    %c0_i32 = arith.constant 0 : i32
    %c0_i32_0 = arith.constant 0 : i32
    return %arg0, %c0_i32 : i32, i32
  }
  func.func @transform_2(%arg0: i32) -> (i32, i32) {
    %c0_i32 = arith.constant 0 : i32
    %c0_i32_0 = arith.constant 0 : i32
    return %arg0, %c0_i32 : i32, i32
  }
  func.func @transform_3(%arg0: i32) -> (i32, i32) {
    %c0_i32 = arith.constant 0 : i32
    %c0_i32_0 = arith.constant 0 : i32
    %c0_i32_1 = arith.constant 0 : i32
    return %c0_i32, %c0_i32_0 : i32, i32
  }
  func.func @transform_4(%arg0: i32) -> (i32, i32) {
    %c0_i32 = arith.constant 0 : i32
    %c0_i32_0 = arith.constant 0 : i32
    %c0_i32_1 = arith.constant 0 : i32
    return %c0_i32, %c0_i32_0 : i32, i32
  }
  func.func @transform_5(%arg0: i32) -> (i32, i32) {
    %c0_i32 = arith.constant 0 : i32
    %c0_i32_0 = arith.constant 0 : i32
    %c0_i32_1 = arith.constant 0 : i32
    return %c0_i32, %c0_i32_0 : i32, i32
  }
  func.func @transform_6(%arg0: i32) -> (i32, i32) {
    %c0_i32 = arith.constant 0 : i32
    %c0_i32_0 = arith.constant 0 : i32
    %c0_i32_1 = arith.constant 0 : i32
    return %c0_i32, %c0_i32_0 : i32, i32
  }
  func.func @transform_7(%arg0: i32) -> (i32, i32) {
    %c0_i32 = arith.constant 0 : i32
    %c0_i32_0 = arith.constant 0 : i32
    %c0_i32_1 = arith.constant 0 : i32
    return %c0_i32, %c0_i32_0 : i32, i32
  }
  func.func @transform_8(%arg0: i32) -> (i32, i32) {
    %c0_i32 = arith.constant 0 : i32
    %c0_i32_0 = arith.constant 0 : i32
    %c0_i32_1 = arith.constant 0 : i32
    return %c0_i32, %c0_i32_0 : i32, i32
  }
  func.func @transform_9(%arg0: i32) -> (i32, i32) {
    %c0_i32 = arith.constant 0 : i32
    %c0_i32_0 = arith.constant 0 : i32
    %c0_i32_1 = arith.constant 0 : i32
    return %c0_i32, %c0_i32_0 : i32, i32
  }
  func.func @transform_10(%arg0: i32) -> (i32, i32) {
    %c0_i32 = arith.constant 0 : i32
    %c0_i32_0 = arith.constant 0 : i32
    %c0_i32_1 = arith.constant 0 : i32
    return %c0_i32, %c0_i32_0 : i32, i32
  }
  func.func @transform_11(%arg0: i32) -> (i32, i32) {
    %c0_i32 = arith.constant 0 : i32
    %c0_i32_0 = arith.constant 0 : i32
    %c0_i32_1 = arith.constant 0 : i32
    return %c0_i32, %c0_i32_0 : i32, i32
  }
  func.func @transform_12(%arg0: i32) -> (i32, i32) {
    %c0_i32 = arith.constant 0 : i32
    %c0_i32_0 = arith.constant 0 : i32
    return %arg0, %c0_i32 : i32, i32
  }
}

</mosaic_0001>

<llo_original>
// kernel: tpu_custom_call.1
$region0: #{tpu_custom_call.1}
  #allocation0 [shape = 'u32[]', space=smem, size = 0x4, offset = 0x4, fixed_abs, tag = 'smem constant byte address 0x4 - core index']
  #allocation1 [shape = 'u32[144,128]{1,0:T(1,128)}', space=vmem, size = 0x12000, scoped, tag = 'internal scratch']
  %s0 = inlined_call_operand.vmem [shape: f32[16,32], index: 0, kind: input, shape index: {}]
  %s1 = inlined_call_operand.hbm [shape: bf16[16,4096], index: 1, kind: input, shape index: {}]
  %s2 = inlined_call_operand.vmem [shape: f32[16,8], index: 2, kind: input, shape index: {}]
  %s3 = inlined_call_operand.hbm [shape: bf16[32,128], index: 3, kind: input, shape index: {}]
  %s4 = inlined_call_operand.hbm [shape: bf16[128,1536], index: 4, kind: input, shape index: {}]
  %s5 = inlined_call_operand.vmem [shape: f32[1,1536], index: 5, kind: input, shape index: {}]
  %s6 = inlined_call_operand.hbm [shape: bf16[512,384], index: 6, kind: input, shape index: {}]
  %s7 = inlined_call_operand.vmem [shape: f32[1,384], index: 7, kind: input, shape index: {}]
  %s8 = inlined_call_operand.hbm [shape: bf16[512,128], index: 8, kind: input, shape index: {}]
  %s9 = inlined_call_operand.vmem [shape: f32[1,128], index: 9, kind: input, shape index: {}]
  %s10 = inlined_call_operand.hbm [shape: bf16[512,256], index: 10, kind: input, shape index: {}]
  %s11 = inlined_call_operand.vmem [shape: f32[1,256], index: 11, kind: input, shape index: {}]
  %s12 = inlined_call_operand.vmem [shape: f32[16,1], index: 12, kind: output, shape index: {}]
  %s13 = sld [smem:[#allocation0]]
  $region82: #{tpu_custom_call.1} parent=0
    _
  %s15 = ssub.s32 1, %s13
  %s16 = scalar_select 0, %s15, %s13
  $region1: #{tpu_custom_call.1} parent=0
    #allocation2 [shape = 'u8[131072]{0}', space=vmem, size = 0x20000, scoped, tag = 'input window, operand 1, single buffered']
    #allocation3 [shape = 's32[1]{0}', space=sflag, size = 0x4, scoped, tag = 'scoped memory for tpu_custom_call.1']
    #allocation4 [shape = 'u8[8192]{0}', space=vmem, size = 0x2000, scoped, tag = 'input window, operand 3, single buffered']
    #allocation5 [shape = 's32[1]{0}', space=sflag, size = 0x4, scoped, tag = 'scoped memory for tpu_custom_call.1']
    #allocation6 [shape = 'u8[393216]{0}', space=vmem, size = 0x60000, scoped, tag = 'input window, operand 4, single buffered']
    #allocation7 [shape = 'u8[393216]{0}', space=vmem, size = 0x60000, scoped, tag = 'input window, operand 6, single buffered']
    #allocation8 [shape = 's32[1]{0}', space=sflag, size = 0x4, scoped, tag = 'scoped memory for tpu_custom_call.1']
    #allocation9 [shape = 'u8[131072]{0}', space=vmem, size = 0x20000, scoped, tag = 'input window, operand 8, single buffered']
    #allocation10 [shape = 'u8[262144]{0}', space=vmem, size = 0x40000, scoped, tag = 'input window, operand 10, single buffered']
    #allocation11 [shape = 's32[1]{0}', space=sflag, size = 0x4, scoped, tag = 'scoped memory for tpu_custom_call.1']
    %17 = vsyncpa [#allocation3], 0
    %18 = vsyncpa [#allocation5], 0
    %19 = vsyncpa [#allocation8], 0
    %20 = vsyncpa [#allocation11], 0
    // Predicated region
    $region2: #{tpu_custom_call.1} parent=1 // pred_check
      _
    $region3: #{tpu_custom_call.1} parent=1 // pred_check_branch
      %22 = sbr.rel (0) target = $region5
    $region4: #{tpu_custom_call.1} parent=1 // pred_region
      _
    $region5: #{tpu_custom_call.1} parent=1 // pred_fallthru
      _
    // Predicated region
    $region6: #{tpu_custom_call.1} parent=1 // pred_check
      _
    $region7: #{tpu_custom_call.1} parent=1 // pred_check_branch
      %24 = sbr.rel (0) target = $region9
    $region8: #{tpu_custom_call.1} parent=1 // pred_region
      %s26 = ssub.s32 4096, 4096
      %27 = vsyncadd [#allocation3], %s26
      %s28 = sshll.u32 [#allocation2], 4
      %s29 = int_to_ptr.vmem [resolvable:$true] %s28
      %34 = dma.hbm_to_vmem [thread:$0]  %s1, 4096, %s29, [#allocation3], 2048, 2048, 128
    $region9: #{tpu_custom_call.1} parent=1 // pred_fallthru
      _
    // Predicated region
    $region10: #{tpu_custom_call.1} parent=1 // pred_check
      _
    $region11: #{tpu_custom_call.1} parent=1 // pred_check_branch
      %36 = sbr.rel (0) target = $region13
    $region12: #{tpu_custom_call.1} parent=1 // pred_region
      _
    $region13: #{tpu_custom_call.1} parent=1 // pred_fallthru
      _
    // Predicated region
    $region14: #{tpu_custom_call.1} parent=1 // pred_check
      _
    $region15: #{tpu_custom_call.1} parent=1 // pred_check_branch
      %38 = sbr.rel (0) target = $region17
    $region16: #{tpu_custom_call.1} parent=1 // pred_region
      %s40 = ssub.s32 256, 256
      %41 = vsyncadd [#allocation5], %s40
      %s42 = sshll.u32 [#allocation4], 4
      %s43 = int_to_ptr.vmem [resolvable:$true] %s42
      %48 = dma.hbm_to_vmem [thread:$0]  %s3, 256, %s43, [#allocation5], 64, 64, 4
    $region17: #{tpu_custom_call.1} parent=1 // pred_fallthru
      _
    // Predicated region
    $region18: #{tpu_custom_call.1} parent=1 // pred_check
      _
    $region19: #{tpu_custom_call.1} parent=1 // pred_check_branch
      %50 = sbr.rel (0) target = $region21
    $region20: #{tpu_custom_call.1} parent=1 // pred_region
      %s52 = ssub.s32 12288, 12288
      %53 = vsyncadd [#allocation5], %s52
      %s54 = sshll.u32 [#allocation6], 4
      %s55 = int_to_ptr.vmem [resolvable:$true] %s54
      %60 = dma.hbm_to_vmem [thread:$0]  %s4, 12288, %s55, [#allocation5], 768, 768, 48
    $region21: #{tpu_custom_call.1} parent=1 // pred_fallthru
      _
    // Predicated region
    $region22: #{tpu_custom_call.1} parent=1 // pred_check
      _
    $region23: #{tpu_custom_call.1} parent=1 // pred_check_branch
      %62 = sbr.rel (0) target = $region25
    $region24: #{tpu_custom_call.1} parent=1 // pred_region
      _
    $region25: #{tpu_custom_call.1} parent=1 // pred_fallthru
      _
    // Predicated region
    $region26: #{tpu_custom_call.1} parent=1 // pred_check
      _
    $region27: #{tpu_custom_call.1} parent=1 // pred_check_branch
      %64 = sbr.rel (0) target = $region29
    $region28: #{tpu_custom_call.1} parent=1 // pred_region
      %s66 = ssub.s32 12288, 12288
      %67 = vsyncadd [#allocation8], %s66
      %s68 = sshll.u32 [#allocation7], 4
      %s69 = int_to_ptr.vmem [resolvable:$true] %s68
      %74 = dma.hbm_to_vmem [thread:$0]  %s6, 12288, %s69, [#allocation8], 192, 192, 12
    $region29: #{tpu_custom_call.1} parent=1 // pred_fallthru
      _
    // Predicated region
    $region30: #{tpu_custom_call.1} parent=1 // pred_check
      _
    $region31: #{tpu_custom_call.1} parent=1 // pred_check_branch
      %76 = sbr.rel (0) target = $region33
    $region32: #{tpu_custom_call.1} parent=1 // pred_region
      _
    $region33: #{tpu_custom_call.1} parent=1 // pred_fallthru
      _
    // Predicated region
    $region34: #{tpu_custom_call.1} parent=1 // pred_check
      _
    $region35: #{tpu_custom_call.1} parent=1 // pred_check_branch
      %78 = sbr.rel (0) target = $region37
    $region36: #{tpu_custom_call.1} parent=1 // pred_region
      %s80 = ssub.s32 4096, 4096
      %81 = vsyncadd [#allocation8], %s80
      %s82 = sshll.u32 [#allocation9], 4
      %s83 = int_to_ptr.vmem [resolvable:$true] %s82
      %88 = dma.hbm_to_vmem [thread:$0]  %s8, 4096, %s83, [#allocation8], 64, 64, 4
    $region37: #{tpu_custom_call.1} parent=1 // pred_fallthru
      _
    // Predicated region
    $region38: #{tpu_custom_call.1} parent=1 // pred_check
      _
    $region39: #{tpu_custom_call.1} parent=1 // pred_check_branch
      %90 = sbr.rel (0) target = $region41
    $region40: #{tpu_custom_call.1} parent=1 // pred_region
      _
    $region41: #{tpu_custom_call.1} parent=1 // pred_fallthru
      _
    // Predicated region
    $region42: #{tpu_custom_call.1} parent=1 // pred_check
      _
    $region43: #{tpu_custom_call.1} parent=1 // pred_check_branch
      %92 = sbr.rel (0) target = $region45
    $region44: #{tpu_custom_call.1} parent=1 // pred_region
      %s94 = ssub.s32 8192, 8192
      %95 = vsyncadd [#allocation11], %s94
      %s96 = sshll.u32 [#allocation10], 4
      %s97 = int_to_ptr.vmem [resolvable:$true] %s96
      %102 = dma.hbm_to_vmem [thread:$0]  %s10, 8192, %s97, [#allocation11], 128, 128, 8
    $region45: #{tpu_custom_call.1} parent=1 // pred_fallthru
      _
    // Predicated region
    $region46: #{tpu_custom_call.1} parent=1 // pred_check
      _
    $region47: #{tpu_custom_call.1} parent=1 // pred_check_branch
      %104 = sbr.rel (0) target = $region49
    $region48: #{tpu_custom_call.1} parent=1 // pred_region
      _
    $region49: #{tpu_custom_call.1} parent=1 // pred_fallthru
      _
    // Predicated region
    $region50: #{tpu_custom_call.1} parent=1 // pred_check
      _
    $region51: #{tpu_custom_call.1} parent=1 // pred_check_branch
      %106 = sbr.rel (0) target = $region53
    $region52: #{tpu_custom_call.1} parent=1 // pred_region
      %107 = dma.done [#allocation3], 4096
    $region53: #{tpu_custom_call.1} parent=1 // pred_fallthru
      _
    // Predicated region
    $region54: #{tpu_custom_call.1} parent=1 // pred_check
      _
    $region55: #{tpu_custom_call.1} parent=1 // pred_check_branch
      %109 = sbr.rel (0) target = $region57
    $region56: #{tpu_custom_call.1} parent=1 // pred_region
      %110 = dma.done [#allocation5], 256
    $region57: #{tpu_custom_call.1} parent=1 // pred_fallthru
      _
    // Predicated region
    $region58: #{tpu_custom_call.1} parent=1 // pred_check
      _
    $region59: #{tpu_custom_call.1} parent=1 // pred_check_branch
      %112 = sbr.rel (0) target = $region61
    $region60: #{tpu_custom_call.1} parent=1 // pred_region
      %113 = dma.done [#allocation5], 12288
    $region61: #{tpu_custom_call.1} parent=1 // pred_fallthru
      _
    // Predicated region
    $region62: #{tpu_custom_call.1} parent=1 // pred_check
      _
    $region63: #{tpu_custom_call.1} parent=1 // pred_check_branch
      %115 = sbr.rel (0) target = $region65
    $region64: #{tpu_custom_call.1} parent=1 // pred_region
      %116 = dma.done [#allocation8], 12288
    $region65: #{tpu_custom_call.1} parent=1 // pred_fallthru
      _
    // Predicated region
    $region66: #{tpu_custom_call.1} parent=1 // pred_check
      _
    $region67: #{tpu_custom_call.1} parent=1 // pred_check_branch
      %118 = sbr.rel (0) target = $region69
    $region68: #{tpu_custom_call.1} parent=1 // pred_region
      %119 = dma.done [#allocation8], 4096
    $region69: #{tpu_custom_call.1} parent=1 // pred_fallthru
      _
    // Predicated region
    $region70: #{tpu_custom_call.1} parent=1 // pred_check
      _
    $region71: #{tpu_custom_call.1} parent=1 // pred_check_branch
      %121 = sbr.rel (0) target = $region73
    $region72: #{tpu_custom_call.1} parent=1 // pred_region
      %122 = dma.done [#allocation11], 8192
    $region73: #{tpu_custom_call.1} parent=1 // pred_fallthru
      _
    %v124 = vld [vmem:[%s0] sm:$0xff]
    %v125 = vld [vmem:[%s0 + $0x8] sm:$0xff]
    %v126 = vpack.c.bf16 %v125, %v124
    %v127 = vld [vmem:[#allocation4] sm:$0xf]
    %v128 = vld [vmem:[#allocation4 + $0x4] sm:$0xf]
    %v129 = vld [vmem:[#allocation4 + $0x8] sm:$0xf]
    %v130 = vld [vmem:[#allocation4 + $0xc] sm:$0xf]
    %v135 = vunpack.c.l.b16 %v127
    %v136 = vunpack.c.l.b16 %v128
    %v137 = vunpack.c.l.b16 %v129
    %v138 = vunpack.c.l.b16 %v130
    %v139 = vpack.c.b16 %v136, %v135
    %v140 = vpack.c.b16 %v138, %v137
    %vm143 = vcmask 261120
    %v145 = vsel %vm143, %v126, 0
    %147 = vmatprep.subr.bf16.mxu0 0
    %148 = vmatpush1.bf16.msra.mxu0 0
    %149 = vmatprep.subr.bf16.mxu0 0
    %150 = vmatpush1.bf16.msra.mxu0 0
    %151 = vmatprep.subr.bf16.mxu0 0
    %152 = vmatpush1.bf16.msra.mxu0 0
    %153 = vmatprep.subr.bf16.mxu0 0
    %154 = vmatpush1.bf16.msra.mxu0 0
    %155 = vmatprep.subr.bf16.mxu0 0
    %156 = vmatpush1.bf16.msra.mxu0 0
    %157 = vmatprep.subr.bf16.mxu0 0
    %158 = vmatpush1.bf16.msra.mxu0 0
    %159 = vmatprep.subr.bf16.mxu0 0
    %160 = vmatpush1.bf16.msra.mxu0 %v140
    %161 = vmatprep.subr.bf16.mxu0 0
    %162 = vmatpush1.bf16.msra.mxu0 %v139
    %163 = vmatprep.subr.bf16.mxu0 0
    %164 = vmatpush2.bf16.msra.mxu0 0
    %165 = vmatprep.subr.bf16.mxu0 0
    %166 = vmatpush2.bf16.msra.mxu0 0
    %167 = vmatprep.subr.bf16.mxu0 0
    %168 = vmatpush2.bf16.msra.mxu0 0
    %169 = vmatprep.subr.bf16.mxu0 0
    %170 = vmatpush2.bf16.msra.mxu0 0
    %171 = vmatprep.subr.bf16.mxu0 0
    %172 = vmatpush2.bf16.msra.mxu0 0
    %173 = vmatprep.subr.bf16.mxu0 0
    %174 = vmatpush2.bf16.msra.mxu0 0
    %175 = vmatprep.subr.bf16.mxu0 0
    %176 = vmatpush2.bf16.msra.mxu0 0
    %177 = vmatprep.subr.bf16.mxu0 0
    %178 = vmatpush2.bf16.msra.mxu0 0
    %179 = vmatprep.mubr.bf16.mxu0 0
    %180 = vmatmul.mubr.bf16.gmra.mxu0 %v145
    %v181 = vpop.f32.mrf.mxu0
    %v182 = vadd.f32 0.0, %v181
    %v183 = vpop.f32.mrf.mxu0
    %v184 = vpop.f32.mrf.mxu0
    %v185 = vadd.f32 0.0, %v184
    %v186 = vpop.f32.mrf.mxu0
    %187 = vdwg.mxu0
    %v188 = vpack.c.bf16 %v185, %v182
    %v189 = vld [vmem:[#allocation6] sm:$0xff]
    %v190 = vld [vmem:[#allocation6 + $0x8] sm:$0xff]
    %v191 = vld [vmem:[#allocation6 + $0x10] sm:$0xff]
    %v192 = vld [vmem:[#allocation6 + $0x18] sm:$0xff]
    %v193 = vld [vmem:[#allocation6 + $0x20] sm:$0xff]
    %v194 = vld [vmem:[#allocation6 + $0x28] sm:$0xff]
    %v195 = vld [vmem:[#allocation6 + $0x30] sm:$0xff]
    %v196 = vld [vmem:[#allocation6 + $0x38] sm:$0xff]
    %v197 = vld [vmem:[#allocation6 + $0x40] sm:$0xff]
    %v198 = vld [vmem:[#allocation6 + $0x48] sm:$0xff]
    %v199 = vld [vmem:[#allocation6 + $0x50] sm:$0xff]
    %v200 = vld [vmem:[#allocation6 + $0x58] sm:$0xff]
    %v201 = vld [vmem:[#allocation6 + $0x60] sm:$0xff]
    %v202 = vld [vmem:[#allocation6 + $0x68] sm:$0xff]
    %v203 = vld [vmem:[#allocation6 + $0x70] sm:$0xff]
    %v204 = vld [vmem:[#allocation6 + $0x78] sm:$0xff]
    %v205 = vld [vmem:[#allocation6 + $0x80] sm:$0xff]
    %v206 = vld [vmem:[#allocation6 + $0x88] sm:$0xff]
    %v207 = vld [vmem:[#allocation6 + $0x90] sm:$0xff]
    %v208 = vld [vmem:[#allocation6 + $0x98] sm:$0xff]
    %v209 = vld [vmem:[#allocation6 + $0xa0] sm:$0xff]
    %v210 = vld [vmem:[#allocation6 + $0xa8] sm:$0xff]
    %v211 = vld [vmem:[#allocation6 + $0xb0] sm:$0xff]
    %v212 = vld [vmem:[#allocation6 + $0xb8] sm:$0xff]
    %v213 = vld [vmem:[#allocation6 + $0xc0] sm:$0xff]
    %v214 = vld [vmem:[#allocation6 + $0xc8] sm:$0xff]
    %v215 = vld [vmem:[#allocation6 + $0xd0] sm:$0xff]
    %v216 = vld [vmem:[#allocation6 + $0xd8] sm:$0xff]
    %v217 = vld [vmem:[#allocation6 + $0xe0] sm:$0xff]
    %v218 = vld [vmem:[#allocation6 + $0xe8] sm:$0xff]
    %v219 = vld [vmem:[#allocation6 + $0xf0] sm:$0xff]
    %v220 = vld [vmem:[#allocation6 + $0xf8] sm:$0xff]
    %v221 = vld [vmem:[#allocation6 + $0x100] sm:$0xff]
    %v222 = vld [vmem:[#allocation6 + $0x108] sm:$0xff]
    %v223 = vld [vmem:[#allocation6 + $0x110] sm:$0xff]
    %v224 = vld [vmem:[#allocation6 + $0x118] sm:$0xff]
    %v225 = vld [vmem:[#allocation6 + $0x120] sm:$0xff]
    %v226 = vld [vmem:[#allocation6 + $0x128] sm:$0xff]
    %v227 = vld [vmem:[#allocation6 + $0x130] sm:$0xff]
    %v228 = vld [vmem:[#allocation6 + $0x138] sm:$0xff]
    %v229 = vld [vmem:[#allocation6 + $0x140] sm:$0xff]
    %v230 = vld [vmem:[#allocation6 + $0x148] sm:$0xff]
    %v231 = vld [vmem:[#allocation6 + $0x150] sm:$0xff]
    %v232 = vld [vmem:[#allocation6 + $0x158] sm:$0xff]
    %v233 = vld [vmem:[#allocation6 + $0x160] sm:$0xff]
    %v234 = vld [vmem:[#allocation6 + $0x168] sm:$0xff]
    %v235 = vld [vmem:[#allocation6 + $0x170] sm:$0xff]
    %v236 = vld [vmem:[#allocation6 + $0x178] sm:$0xff]
    %v237 = vld [vmem:[#allocation6 + $0x180] sm:$0xff]
    %v238 = vld [vmem:[#allocation6 + $0x188] sm:$0xff]
    %v239 = vld [vmem:[#allocation6 + $0x190] sm:$0xff]
    %v240 = vld [vmem:[#allocation6 + $0x198] sm:$0xff]
    %v241 = vld [vmem:[#allocation6 + $0x1a0] sm:$0xff]
    %v242 = vld [vmem:[#allocation6 + $0x1a8] sm:$0xff]
    %v243 = vld [vmem:[#allocation6 + $0x1b0] sm:$0xff]
    %v244 = vld [vmem:[#allocation6 + $0x1b8] sm:$0xff]
    %v245 = vld [vmem:[#allocation6 + $0x1c0] sm:$0xff]
    %v246 = vld [vmem:[#allocation6 + $0x1c8] sm:$0xff]
    %v247 = vld [vmem:[#allocation6 + $0x1d0] sm:$0xff]
    %v248 = vld [vmem:[#allocation6 + $0x1d8] sm:$0xff]
    %v249 = vld [vmem:[#allocation6 + $0x1e0] sm:$0xff]
    %v250 = vld [vmem:[#allocation6 + $0x1e8] sm:$0xff]
    %v251 = vld [vmem:[#allocation6 + $0x1f0] sm:$0xff]
    %v252 = vld [vmem:[#allocation6 + $0x1f8] sm:$0xff]
    %v253 = vld [vmem:[#allocation6 + $0x200] sm:$0xff]
    %v254 = vld [vmem:[#allocation6 + $0x208] sm:$0xff]
    %v255 = vld [vmem:[#allocation6 + $0x210] sm:$0xff]
    %v256 = vld [vmem:[#allocation6 + $0x218] sm:$0xff]
    %v257 = vld [vmem:[#allocation6 + $0x220] sm:$0xff]
    %v258 = vld [vmem:[#allocation6 + $0x228] sm:$0xff]
    %v259 = vld [vmem:[#allocation6 + $0x230] sm:$0xff]
    %v260 = vld [vmem:[#allocation6 + $0x238] sm:$0xff]
    %v261 = vld [vmem:[#allocation6 + $0x240] sm:$0xff]
    %v262 = vld [vmem:[#allocation6 + $0x248] sm:$0xff]
    %v263 = vld [vmem:[#allocation6 + $0x250] sm:$0xff]
    %v264 = vld [vmem:[#allocation6 + $0x258] sm:$0xff]
    %v265 = vld [vmem:[#allocation6 + $0x260] sm:$0xff]
    %v266 = vld [vmem:[#allocation6 + $0x268] sm:$0xff]
    %v267 = vld [vmem:[#allocation6 + $0x270] sm:$0xff]
    %v268 = vld [vmem:[#allocation6 + $0x278] sm:$0xff]
    %v269 = vld [vmem:[#allocation6 + $0x280] sm:$0xff]
    %v270 = vld [vmem:[#allocation6 + $0x288] sm:$0xff]
    %v271 = vld [vmem:[#allocation6 + $0x290] sm:$0xff]
    %v272 = vld [vmem:[#allocation6 + $0x298] sm:$0xff]
    %v273 = vld [vmem:[#allocation6 + $0x2a0] sm:$0xff]
    %v274 = vld [vmem:[#allocation6 + $0x2a8] sm:$0xff]
    %v275 = vld [vmem:[#allocation6 + $0x2b0] sm:$0xff]
    %v276 = vld [vmem:[#allocation6 + $0x2b8] sm:$0xff]
    %v277 = vld [vmem:[#allocation6 + $0x2c0] sm:$0xff]
    %v278 = vld [vmem:[#allocation6 + $0x2c8] sm:$0xff]
    %v279 = vld [vmem:[#allocation6 + $0x2d0] sm:$0xff]
    %v280 = vld [vmem:[#allocation6 + $0x2d8] sm:$0xff]
    %v281 = vld [vmem:[#allocation6 + $0x2e0] sm:$0xff]
    %v282 = vld [vmem:[#allocation6 + $0x2e8] sm:$0xff]
    %v283 = vld [vmem:[#allocation6 + $0x2f0] sm:$0xff]
    %v284 = vld [vmem:[#allocation6 + $0x2f8] sm:$0xff]
    %v285 = vld [vmem:[%s5] sm:$0xff]
    %v286 = vld [vmem:[%s5 + $0x8] sm:$0xf]
    %v289 = vlaneseq
    %v290 = vshrl.u32 %v289, 7
    %v291 = vsub.s32 0, %v290
    %v292 = vrot.slane %v285, %v291
    %v293 = vlaneseq
    %v294 = vshrl.u32 %v293, 7
    %v295 = vsub.s32 1, %v294
    %v296 = vrot.slane %v285, %v295
    %v297 = vlaneseq
    %v298 = vshrl.u32 %v297, 7
    %v299 = vsub.s32 2, %v298
    %v300 = vrot.slane %v285, %v299
    %v301 = vlaneseq
    %v302 = vshrl.u32 %v301, 7
    %v303 = vsub.s32 3, %v302
    %v304 = vrot.slane %v285, %v303
    %v305 = vlaneseq
    %v306 = vshrl.u32 %v305, 7
    %v307 = vsub.s32 4, %v306
    %v308 = vrot.slane %v285, %v307
    %v309 = vlaneseq
    %v310 = vshrl.u32 %v309, 7
    %v311 = vsub.s32 5, %v310
    %v312 = vrot.slane %v285, %v311
    %v313 = vlaneseq
    %v314 = vshrl.u32 %v313, 7
    %v315 = vsub.s32 6, %v314
    %v316 = vrot.slane %v285, %v315
    %v317 = vlaneseq
    %v318 = vshrl.u32 %v317, 7
    %v319 = vsub.s32 7, %v318
    %v320 = vrot.slane %v285, %v319
    %v321 = vlaneseq
    %v322 = vshrl.u32 %v321, 7
    %v323 = vsub.s32 0, %v322
    %v324 = vrot.slane %v286, %v323
    %v325 = vlaneseq
    %v326 = vshrl.u32 %v325, 7
    %v327 = vsub.s32 1, %v326
    %v328 = vrot.slane %v286, %v327
    %v329 = vlaneseq
    %v330 = vshrl.u32 %v329, 7
    %v331 = vsub.s32 2, %v330
    %v332 = vrot.slane %v286, %v331
    %v333 = vlaneseq
    %v334 = vshrl.u32 %v333, 7
    %v335 = vsub.s32 3, %v334
    %v336 = vrot.slane %v286, %v335
    %v445 = vunpack.c.l.b16 %v189
    %v446 = vunpack.c.h.b16 %v189
    %v447 = vunpack.c.l.b16 %v190
    %v448 = vunpack.c.h.b16 %v190
    %v449 = vunpack.c.l.b16 %v191
    %v450 = vunpack.c.h.b16 %v191
    %v451 = vunpack.c.l.b16 %v192
    %v452 = vunpack.c.h.b16 %v192
    %v453 = vunpack.c.l.b16 %v193
    %v454 = vunpack.c.h.b16 %v193
    %v455 = vunpack.c.l.b16 %v194
    %v456 = vunpack.c.h.b16 %v194
    %v457 = vunpack.c.l.b16 %v195
    %v458 = vunpack.c.h.b16 %v195
    %v459 = vunpack.c.l.b16 %v196
    %v460 = vunpack.c.h.b16 %v196
    %v461 = vunpack.c.l.b16 %v197
    %v462 = vunpack.c.h.b16 %v197
    %v463 = vunpack.c.l.b16 %v198
    %v464 = vunpack.c.h.b16 %v198
    %v465 = vunpack.c.l.b16 %v199
    %v466 = vunpack.c.h.b16 %v199
    %v467 = vunpack.c.l.b16 %v200
    %v468 = vunpack.c.h.b16 %v200
    %v469 = vunpack.c.l.b16 %v201
    %v470 = vunpack.c.h.b16 %v201
    %v471 = vunpack.c.l.b16 %v202
    %v472 = vunpack.c.h.b16 %v202
    %v473 = vunpack.c.l.b16 %v203
    %v474 = vunpack.c.h.b16 %v203
    %v475 = vunpack.c.l.b16 %v204
    %v476 = vunpack.c.h.b16 %v204
    %v477 = vunpack.c.l.b16 %v205
    %v478 = vunpack.c.h.b16 %v205
    %v479 = vunpack.c.l.b16 %v206
    %v480 = vunpack.c.h.b16 %v206
    %v481 = vunpack.c.l.b16 %v207
    %v482 = vunpack.c.h.b16 %v207
    %v483 = vunpack.c.l.b16 %v208
    %v484 = vunpack.c.h.b16 %v208
    %v485 = vunpack.c.l.b16 %v209
    %v486 = vunpack.c.h.b16 %v209
    %v487 = vunpack.c.l.b16 %v210
    %v488 = vunpack.c.h.b16 %v210
    %v489 = vunpack.c.l.b16 %v211
    %v490 = vunpack.c.h.b16 %v211
    %v491 = vunpack.c.l.b16 %v212
    %v492 = vunpack.c.h.b16 %v212
    %v493 = vunpack.c.l.b16 %v213
    %v494 = vunpack.c.h.b16 %v213
    %v495 = vunpack.c.l.b16 %v214
    %v496 = vunpack.c.h.b16 %v214
    %v497 = vunpack.c.l.b16 %v215
    %v498 = vunpack.c.h.b16 %v215
    %v499 = vunpack.c.l.b16 %v216
    %v500 = vunpack.c.h.b16 %v216
    %v501 = vunpack.c.l.b16 %v217
    %v502 = vunpack.c.h.b16 %v217
    %v503 = vunpack.c.l.b16 %v218
    %v504 = vunpack.c.h.b16 %v218
    %v505 = vunpack.c.l.b16 %v219
    %v506 = vunpack.c.h.b16 %v219
    %v507 = vunpack.c.l.b16 %v220
    %v508 = vunpack.c.h.b16 %v220
    %v509 = vunpack.c.l.b16 %v221
    %v510 = vunpack.c.h.b16 %v221
    %v511 = vunpack.c.l.b16 %v222
    %v512 = vunpack.c.h.b16 %v222
    %v513 = vunpack.c.l.b16 %v223
    %v514 = vunpack.c.h.b16 %v223
    %v515 = vunpack.c.l.b16 %v224
    %v516 = vunpack.c.h.b16 %v224
    %v517 = vunpack.c.l.b16 %v225
    %v518 = vunpack.c.h.b16 %v225
    %v519 = vunpack.c.l.b16 %v226
    %v520 = vunpack.c.h.b16 %v226
    %v521 = vunpack.c.l.b16 %v227
    %v522 = vunpack.c.h.b16 %v227
    %v523 = vunpack.c.l.b16 %v228
    %v524 = vunpack.c.h.b16 %v228
    %v525 = vunpack.c.l.b16 %v229
    %v526 = vunpack.c.h.b16 %v229
    %v527 = vunpack.c.l.b16 %v230
    %v528 = vunpack.c.h.b16 %v230
    %v529 = vunpack.c.l.b16 %v231
    %v530 = vunpack.c.h.b16 %v231
    %v531 = vunpack.c.l.b16 %v232
    %v532 = vunpack.c.h.b16 %v232
    %v533 = vunpack.c.l.b16 %v233
    %v534 = vunpack.c.h.b16 %v233
    %v535 = vunpack.c.l.b16 %v234
    %v536 = vunpack.c.h.b16 %v234
    %v537 = vunpack.c.l.b16 %v235
    %v538 = vunpack.c.h.b16 %v235
    %v539 = vunpack.c.l.b16 %v236
    %v540 = vunpack.c.h.b16 %v236
    %v541 = vunpack.c.l.b16 %v237
    %v542 = vunpack.c.h.b16 %v237
    %v543 = vunpack.c.l.b16 %v238
    %v544 = vunpack.c.h.b16 %v238
    %v545 = vunpack.c.l.b16 %v239
    %v546 = vunpack.c.h.b16 %v239
    %v547 = vunpack.c.l.b16 %v240
    %v548 = vunpack.c.h.b16 %v240
    %v549 = vunpack.c.l.b16 %v241
    %v550 = vunpack.c.h.b16 %v241
    %v551 = vunpack.c.l.b16 %v242
    %v552 = vunpack.c.h.b16 %v242
    %v553 = vunpack.c.l.b16 %v243
    %v554 = vunpack.c.h.b16 %v243
    %v555 = vunpack.c.l.b16 %v244
    %v556 = vunpack.c.h.b16 %v244
    %v557 = vunpack.c.l.b16 %v245
    %v558 = vunpack.c.h.b16 %v245
    %v559 = vunpack.c.l.b16 %v246
    %v560 = vunpack.c.h.b16 %v246
    %v561 = vunpack.c.l.b16 %v247
    %v562 = vunpack.c.h.b16 %v247
    %v563 = vunpack.c.l.b16 %v248
    %v564 = vunpack.c.h.b16 %v248
    %v565 = vunpack.c.l.b16 %v249
    %v566 = vunpack.c.h.b16 %v249
    %v567 = vunpack.c.l.b16 %v250
    %v568 = vunpack.c.h.b16 %v250
    %v569 = vunpack.c.l.b16 %v251
    %v570 = vunpack.c.h.b16 %v251
    %v571 = vunpack.c.l.b16 %v252
    %v572 = vunpack.c.h.b16 %v252
    %v573 = vunpack.c.l.b16 %v253
    %v574 = vunpack.c.h.b16 %v253
    %v575 = vunpack.c.l.b16 %v254
    %v576 = vunpack.c.h.b16 %v254
    %v577 = vunpack.c.l.b16 %v255
    %v578 = vunpack.c.h.b16 %v255
    %v579 = vunpack.c.l.b16 %v256
    %v580 = vunpack.c.h.b16 %v256
    %v581 = vunpack.c.l.b16 %v257
    %v582 = vunpack.c.h.b16 %v257
    %v583 = vunpack.c.l.b16 %v258
    %v584 = vunpack.c.h.b16 %v258
    %v585 = vunpack.c.l.b16 %v259
    %v586 = vunpack.c.h.b16 %v259
    %v587 = vunpack.c.l.b16 %v260
    %v588 = vunpack.c.h.b16 %v260
    %v589 = vunpack.c.l.b16 %v261
    %v590 = vunpack.c.h.b16 %v261
    %v591 = vunpack.c.l.b16 %v262
    %v592 = vunpack.c.h.b16 %v262
    %v593 = vunpack.c.l.b16 %v263
    %v594 = vunpack.c.h.b16 %v263
    %v595 = vunpack.c.l.b16 %v264
    %v596 = vunpack.c.h.b16 %v264
    %v597 = vunpack.c.l.b16 %v265
    %v598 = vunpack.c.h.b16 %v265
    %v599 = vunpack.c.l.b16 %v266
    %v600 = vunpack.c.h.b16 %v266
    %v601 = vunpack.c.l.b16 %v267
    %v602 = vunpack.c.h.b16 %v267
    %v603 = vunpack.c.l.b16 %v268
    %v604 = vunpack.c.h.b16 %v268
    %v605 = vunpack.c.l.b16 %v269
    %v606 = vunpack.c.h.b16 %v269
    %v607 = vunpack.c.l.b16 %v270
    %v608 = vunpack.c.h.b16 %v270
    %v609 = vunpack.c.l.b16 %v271
    %v610 = vunpack.c.h.b16 %v271
    %v611 = vunpack.c.l.b16 %v272
    %v612 = vunpack.c.h.b16 %v272
    %v613 = vunpack.c.l.b16 %v273
    %v614 = vunpack.c.h.b16 %v273
    %v615 = vunpack.c.l.b16 %v274
    %v616 = vunpack.c.h.b16 %v274
    %v617 = vunpack.c.l.b16 %v275
    %v618 = vunpack.c.h.b16 %v275
    %v619 = vunpack.c.l.b16 %v276
    %v620 = vunpack.c.h.b16 %v276
    %v621 = vunpack.c.l.b16 %v277
    %v622 = vunpack.c.h.b16 %v277
    %v623 = vunpack.c.l.b16 %v278
    %v624 = vunpack.c.h.b16 %v278
    %v625 = vunpack.c.l.b16 %v279
    %v626 = vunpack.c.h.b16 %v279
    %v627 = vunpack.c.l.b16 %v280
    %v628 = vunpack.c.h.b16 %v280
    %v629 = vunpack.c.l.b16 %v281
    %v630 = vunpack.c.h.b16 %v281
    %v631 = vunpack.c.l.b16 %v282
    %v632 = vunpack.c.h.b16 %v282
    %v633 = vunpack.c.l.b16 %v283
    %v634 = vunpack.c.h.b16 %v283
    %v635 = vunpack.c.l.b16 %v284
    %v636 = vunpack.c.h.b16 %v284
    %v637 = vpack.c.b16 %v457, %v445
    %v638 = vpack.c.b16 %v458, %v446
    %v639 = vpack.c.b16 %v459, %v447
    %v640 = vpack.c.b16 %v460, %v448
    %v641 = vpack.c.b16 %v461, %v449
    %v642 = vpack.c.b16 %v462, %v450
    %v643 = vpack.c.b16 %v463, %v451
    %v644 = vpack.c.b16 %v464, %v452
    %v645 = vpack.c.b16 %v465, %v453
    %v646 = vpack.c.b16 %v466, %v454
    %v647 = vpack.c.b16 %v467, %v455
    %v648 = vpack.c.b16 %v468, %v456
    %v649 = vpack.c.b16 %v481, %v469
    %v650 = vpack.c.b16 %v482, %v470
    %v651 = vpack.c.b16 %v483, %v471
    %v652 = vpack.c.b16 %v484, %v472
    %v653 = vpack.c.b16 %v485, %v473
    %v654 = vpack.c.b16 %v486, %v474
    %v655 = vpack.c.b16 %v487, %v475
    %v656 = vpack.c.b16 %v488, %v476
    %v657 = vpack.c.b16 %v489, %v477
    %v658 = vpack.c.b16 %v490, %v478
    %v659 = vpack.c.b16 %v491, %v479
    %v660 = vpack.c.b16 %v492, %v480
    %v661 = vpack.c.b16 %v505, %v493
    %v662 = vpack.c.b16 %v506, %v494
    %v663 = vpack.c.b16 %v507, %v495
    %v664 = vpack.c.b16 %v508, %v496
    %v665 = vpack.c.b16 %v509, %v497
    %v666 = vpack.c.b16 %v510, %v498
    %v667 = vpack.c.b16 %v511, %v499
    %v668 = vpack.c.b16 %v512, %v500
    %v669 = vpack.c.b16 %v513, %v501
    %v670 = vpack.c.b16 %v514, %v502
    %v671 = vpack.c.b16 %v515, %v503
    %v672 = vpack.c.b16 %v516, %v504
    %v673 = vpack.c.b16 %v529, %v517
    %v674 = vpack.c.b16 %v530, %v518
    %v675 = vpack.c.b16 %v531, %v519
    %v676 = vpack.c.b16 %v532, %v520
    %v677 = vpack.c.b16 %v533, %v521
    %v678 = vpack.c.b16 %v534, %v522
    %v679 = vpack.c.b16 %v535, %v523
    %v680 = vpack.c.b16 %v536, %v524
    %v681 = vpack.c.b16 %v537, %v525
    %v682 = vpack.c.b16 %v538, %v526
    %v683 = vpack.c.b16 %v539, %v527
    %v684 = vpack.c.b16 %v540, %v528
    %v685 = vpack.c.b16 %v553, %v541
    %v686 = vpack.c.b16 %v554, %v542
    %v687 = vpack.c.b16 %v555, %v543
    %v688 = vpack.c.b16 %v556, %v544
    %v689 = vpack.c.b16 %v557, %v545
    %v690 = vpack.c.b16 %v558, %v546
    %v691 = vpack.c.b16 %v559, %v547
    %v692 = vpack.c.b16 %v560, %v548
    %v693 = vpack.c.b16 %v561, %v549
    %v694 = vpack.c.b16 %v562, %v550
    %v695 = vpack.c.b16 %v563, %v551
    %v696 = vpack.c.b16 %v564, %v552
    %v697 = vpack.c.b16 %v577, %v565
    %v698 = vpack.c.b16 %v578, %v566
    %v699 = vpack.c.b16 %v579, %v567
    %v700 = vpack.c.b16 %v580, %v568
    %v701 = vpack.c.b16 %v581, %v569
    %v702 = vpack.c.b16 %v582, %v570
    %v703 = vpack.c.b16 %v583, %v571
    %v704 = vpack.c.b16 %v584, %v572
    %v705 = vpack.c.b16 %v585, %v573
    %v706 = vpack.c.b16 %v586, %v574
    %v707 = vpack.c.b16 %v587, %v575
    %v708 = vpack.c.b16 %v588, %v576
    %v709 = vpack.c.b16 %v601, %v589
    %v710 = vpack.c.b16 %v602, %v590
    %v711 = vpack.c.b16 %v603, %v591
    %v712 = vpack.c.b16 %v604, %v592
    %v713 = vpack.c.b16 %v605, %v593
    %v714 = vpack.c.b16 %v606, %v594
    %v715 = vpack.c.b16 %v607, %v595
    %v716 = vpack.c.b16 %v608, %v596
    %v717 = vpack.c.b16 %v609, %v597
    %v718 = vpack.c.b16 %v610, %v598
    %v719 = vpack.c.b16 %v611, %v599
    %v720 = vpack.c.b16 %v612, %v600
    %v721 = vpack.c.b16 %v625, %v613
    %v722 = vpack.c.b16 %v626, %v614
    %v723 = vpack.c.b16 %v627, %v615
    %v724 = vpack.c.b16 %v628, %v616
    %v725 = vpack.c.b16 %v629, %v617
    %v726 = vpack.c.b16 %v630, %v618
    %v727 = vpack.c.b16 %v631, %v619
    %v728 = vpack.c.b16 %v632, %v620
    %v729 = vpack.c.b16 %v633, %v621
    %v730 = vpack.c.b16 %v634, %v622
    %v731 = vpack.c.b16 %v635, %v623
    %v732 = vpack.c.b16 %v636, %v624
    %829 = vmatprep.subr.bf16.mxu0 %v722
    %830 = vmatpush1.bf16.msra.mxu0 %v721
    %831 = vmatprep.subr.bf16.mxu0 %v710
    %832 = vmatpush1.bf16.msra.mxu0 %v709
    %833 = vmatprep.subr.bf16.mxu0 %v698
    %834 = vmatpush1.bf16.msra.mxu0 %v697
    %835 = vmatprep.subr.bf16.mxu0 %v686
    %836 = vmatpush1.bf16.msra.mxu0 %v685
    %837 = vmatprep.subr.bf16.mxu0 %v674
    %838 = vmatpush1.bf16.msra.mxu0 %v673
    %839 = vmatprep.subr.bf16.mxu0 %v662
    %840 = vmatpush1.bf16.msra.mxu0 %v661
    %841 = vmatprep.subr.bf16.mxu0 %v650
    %842 = vmatpush1.bf16.msra.mxu0 %v649
    %843 = vmatprep.subr.bf16.mxu0 %v638
    %844 = vmatpush1.bf16.msra.mxu0 %v637
    %845 = vmatprep.subr.bf16.mxu0 0
    %846 = vmatpush2.bf16.msra.mxu0 0
    %847 = vmatprep.subr.bf16.mxu0 0
    %848 = vmatpush2.bf16.msra.mxu0 0
    %849 = vmatprep.subr.bf16.mxu0 0
    %850 = vmatpush2.bf16.msra.mxu0 0
    %851 = vmatprep.subr.bf16.mxu0 0
    %852 = vmatpush2.bf16.msra.mxu0 0
    %853 = vmatprep.subr.bf16.mxu0 0
    %854 = vmatpush2.bf16.msra.mxu0 0
    %855 = vmatprep.subr.bf16.mxu0 0
    %856 = vmatpush2.bf16.msra.mxu0 0
    %857 = vmatprep.subr.bf16.mxu0 0
    %858 = vmatpush2.bf16.msra.mxu0 0
    %859 = vmatprep.subr.bf16.mxu0 0
    %860 = vmatpush2.bf16.msra.mxu0 0
    %861 = vmatprep.mubr.bf16.mxu0 0
    %862 = vmatmul.mubr.bf16.gmra.mxu0 %v188
    %v863 = vpop.f32.mrf.mxu0
    %v864 = vadd.f32 %v292, %v863
    %v865 = vpop.f32.mrf.mxu0
    %v866 = vadd.f32 %v296, %v865
    %v867 = vpop.f32.mrf.mxu0
    %v868 = vadd.f32 %v292, %v867
    %v869 = vpop.f32.mrf.mxu0
    %v870 = vadd.f32 %v296, %v869
    %871 = vdwg.mxu0
    %872 = vmatprep.subr.bf16.mxu0 %v724
    %873 = vmatpush1.bf16.msra.mxu0 %v723
    %874 = vmatprep.subr.bf16.mxu0 %v712
    %875 = vmatpush1.bf16.msra.mxu0 %v711
    %876 = vmatprep.subr.bf16.mxu0 %v700
    %877 = vmatpush1.bf16.msra.mxu0 %v699
    %878 = vmatprep.subr.bf16.mxu0 %v688
    %879 = vmatpush1.bf16.msra.mxu0 %v687
    %880 = vmatprep.subr.bf16.mxu0 %v676
    %881 = vmatpush1.bf16.msra.mxu0 %v675
    %882 = vmatprep.subr.bf16.mxu0 %v664
    %883 = vmatpush1.bf16.msra.mxu0 %v663
    %884 = vmatprep.subr.bf16.mxu0 %v652
    %885 = vmatpush1.bf16.msra.mxu0 %v651
    %886 = vmatprep.subr.bf16.mxu0 %v640
    %887 = vmatpush1.bf16.msra.mxu0 %v639
    %888 = vmatprep.subr.bf16.mxu0 0
    %889 = vmatpush2.bf16.msra.mxu0 0
    %890 = vmatprep.subr.bf16.mxu0 0
    %891 = vmatpush2.bf16.msra.mxu0 0
    %892 = vmatprep.subr.bf16.mxu0 0
    %893 = vmatpush2.bf16.msra.mxu0 0
    %894 = vmatprep.subr.bf16.mxu0 0
    %895 = vmatpush2.bf16.msra.mxu0 0
    %896 = vmatprep.subr.bf16.mxu0 0
    %897 = vmatpush2.bf16.msra.mxu0 0
    %898 = vmatprep.subr.bf16.mxu0 0
    %899 = vmatpush2.bf16.msra.mxu0 0
    %900 = vmatprep.subr.bf16.mxu0 0
    %901 = vmatpush2.bf16.msra.mxu0 0
    %902 = vmatprep.subr.bf16.mxu0 0
    %903 = vmatpush2.bf16.msra.mxu0 0
    %904 = vmatprep.mubr.bf16.mxu0 0
    %905 = vmatmul.mubr.bf16.gmra.mxu0 %v188
    %v906 = vpop.f32.mrf.mxu0
    %v907 = vadd.f32 %v300, %v906
    %v908 = vpop.f32.mrf.mxu0
    %v909 = vadd.f32 %v304, %v908
    %v910 = vpop.f32.mrf.mxu0
    %v911 = vadd.f32 %v300, %v910
    %v912 = vpop.f32.mrf.mxu0
    %v913 = vadd.f32 %v304, %v912
    %914 = vdwg.mxu0
    %915 = vmatprep.subr.bf16.mxu0 %v726
    %916 = vmatpush1.bf16.msra.mxu0 %v725
    %917 = vmatprep.subr.bf16.mxu0 %v714
    %918 = vmatpush1.bf16.msra.mxu0 %v713
    %919 = vmatprep.subr.bf16.mxu0 %v702
    %920 = vmatpush1.bf16.msra.mxu0 %v701
    %921 = vmatprep.subr.bf16.mxu0 %v690
    %922 = vmatpush1.bf16.msra.mxu0 %v689
    %923 = vmatprep.subr.bf16.mxu0 %v678
    %924 = vmatpush1.bf16.msra.mxu0 %v677
    %925 = vmatprep.subr.bf16.mxu0 %v666
    %926 = vmatpush1.bf16.msra.mxu0 %v665
    %927 = vmatprep.subr.bf16.mxu0 %v654
    %928 = vmatpush1.bf16.msra.mxu0 %v653
    %929 = vmatprep.subr.bf16.mxu0 %v642
    %930 = vmatpush1.bf16.msra.mxu0 %v641
    %931 = vmatprep.subr.bf16.mxu0 0
    %932 = vmatpush2.bf16.msra.mxu0 0
    %933 = vmatprep.subr.bf16.mxu0 0
    %934 = vmatpush2.bf16.msra.mxu0 0
    %935 = vmatprep.subr.bf16.mxu0 0
    %936 = vmatpush2.bf16.msra.mxu0 0
    %937 = vmatprep.subr.bf16.mxu0 0
    %938 = vmatpush2.bf16.msra.mxu0 0
    %939 = vmatprep.subr.bf16.mxu0 0
    %940 = vmatpush2.bf16.msra.mxu0 0
    %941 = vmatprep.subr.bf16.mxu0 0
    %942 = vmatpush2.bf16.msra.mxu0 0
    %943 = vmatprep.subr.bf16.mxu0 0
    %944 = vmatpush2.bf16.msra.mxu0 0
    %945 = vmatprep.subr.bf16.mxu0 0
    %946 = vmatpush2.bf16.msra.mxu0 0
    %947 = vmatprep.mubr.bf16.mxu0 0
    %948 = vmatmul.mubr.bf16.gmra.mxu0 %v188
    %v949 = vpop.f32.mrf.mxu0
    %v950 = vadd.f32 %v308, %v949
    %v951 = vpop.f32.mrf.mxu0
    %v952 = vadd.f32 %v312, %v951
    %v953 = vpop.f32.mrf.mxu0
    %v954 = vadd.f32 %v308, %v953
    %v955 = vpop.f32.mrf.mxu0
    %v956 = vadd.f32 %v312, %v955
    %957 = vdwg.mxu0
    %958 = vmatprep.subr.bf16.mxu0 %v728
    %959 = vmatpush1.bf16.msra.mxu0 %v727
    %960 = vmatprep.subr.bf16.mxu0 %v716
    %961 = vmatpush1.bf16.msra.mxu0 %v715
    %962 = vmatprep.subr.bf16.mxu0 %v704
    %963 = vmatpush1.bf16.msra.mxu0 %v703
    %964 = vmatprep.subr.bf16.mxu0 %v692
    %965 = vmatpush1.bf16.msra.mxu0 %v691
    %966 = vmatprep.subr.bf16.mxu0 %v680
    %967 = vmatpush1.bf16.msra.mxu0 %v679
    %968 = vmatprep.subr.bf16.mxu0 %v668
    %969 = vmatpush1.bf16.msra.mxu0 %v667
    %970 = vmatprep.subr.bf16.mxu0 %v656
    %971 = vmatpush1.bf16.msra.mxu0 %v655
    %972 = vmatprep.subr.bf16.mxu0 %v644
    %973 = vmatpush1.bf16.msra.mxu0 %v643
    %974 = vmatprep.subr.bf16.mxu0 0
    %975 = vmatpush2.bf16.msra.mxu0 0
    %976 = vmatprep.subr.bf16.mxu0 0
    %977 = vmatpush2.bf16.msra.mxu0 0
    %978 = vmatprep.subr.bf16.mxu0 0
    %979 = vmatpush2.bf16.msra.mxu0 0
    %980 = vmatprep.subr.bf16.mxu0 0
    %981 = vmatpush2.bf16.msra.mxu0 0
    %982 = vmatprep.subr.bf16.mxu0 0
    %983 = vmatpush2.bf16.msra.mxu0 0
    %984 = vmatprep.subr.bf16.mxu0 0
    %985 = vmatpush2.bf16.msra.mxu0 0
    %986 = vmatprep.subr.bf16.mxu0 0
    %987 = vmatpush2.bf16.msra.mxu0 0
    %988 = vmatprep.subr.bf16.mxu0 0
    %989 = vmatpush2.bf16.msra.mxu0 0
    %990 = vmatprep.mubr.bf16.mxu0 0
    %991 = vmatmul.mubr.bf16.gmra.mxu0 %v188
    %v992 = vpop.f32.mrf.mxu0
    %v993 = vadd.f32 %v316, %v992
    %v994 = vpop.f32.mrf.mxu0
    %v995 = vadd.f32 %v320, %v994
    %v996 = vpop.f32.mrf.mxu0
    %v997 = vadd.f32 %v316, %v996
    %v998 = vpop.f32.mrf.mxu0
    %v999 = vadd.f32 %v320, %v998
    %1000 = vdwg.mxu0
    %1001 = vmatprep.subr.bf16.mxu0 %v730
    %1002 = vmatpush1.bf16.msra.mxu0 %v729
    %1003 = vmatprep.subr.bf16.mxu0 %v718
    %1004 = vmatpush1.bf16.msra.mxu0 %v717
    %1005 = vmatprep.subr.bf16.mxu0 %v706
    %1006 = vmatpush1.bf16.msra.mxu0 %v705
    %1007 = vmatprep.subr.bf16.mxu0 %v694
    %1008 = vmatpush1.bf16.msra.mxu0 %v693
    %1009 = vmatprep.subr.bf16.mxu0 %v682
    %1010 = vmatpush1.bf16.msra.mxu0 %v681
    %1011 = vmatprep.subr.bf16.mxu0 %v670
    %1012 = vmatpush1.bf16.msra.mxu0 %v669
    %1013 = vmatprep.subr.bf16.mxu0 %v658
    %1014 = vmatpush1.bf16.msra.mxu0 %v657
    %1015 = vmatprep.subr.bf16.mxu0 %v646
    %1016 = vmatpush1.bf16.msra.mxu0 %v645
    %1017 = vmatprep.subr.bf16.mxu0 0
    %1018 = vmatpush2.bf16.msra.mxu0 0
    %1019 = vmatprep.subr.bf16.mxu0 0
    %1020 = vmatpush2.bf16.msra.mxu0 0
    %1021 = vmatprep.subr.bf16.mxu0 0
    %1022 = vmatpush2.bf16.msra.mxu0 0
    %1023 = vmatprep.subr.bf16.mxu0 0
    %1024 = vmatpush2.bf16.msra.mxu0 0
    %1025 = vmatprep.subr.bf16.mxu0 0
    %1026 = vmatpush2.bf16.msra.mxu0 0
    %1027 = vmatprep.subr.bf16.mxu0 0
    %1028 = vmatpush2.bf16.msra.mxu0 0
    %1029 = vmatprep.subr.bf16.mxu0 0
    %1030 = vmatpush2.bf16.msra.mxu0 0
    %1031 = vmatprep.subr.bf16.mxu0 0
    %1032 = vmatpush2.bf16.msra.mxu0 0
    %1033 = vmatprep.mubr.bf16.mxu0 0
    %1034 = vmatmul.mubr.bf16.gmra.mxu0 %v188
    %v1035 = vpop.f32.mrf.mxu0
    %v1036 = vadd.f32 %v324, %v1035
    %v1037 = vpop.f32.mrf.mxu0
    %v1038 = vadd.f32 %v328, %v1037
    %v1039 = vpop.f32.mrf.mxu0
    %v1040 = vadd.f32 %v324, %v1039
    %v1041 = vpop.f32.mrf.mxu0
    %v1042 = vadd.f32 %v328, %v1041
    %1043 = vdwg.mxu0
    %1044 = vmatprep.subr.bf16.mxu0 %v732
    %1045 = vmatpush1.bf16.msra.mxu0 %v731
    %1046 = vmatprep.subr.bf16.mxu0 %v720
    %1047 = vmatpush1.bf16.msra.mxu0 %v719
    %1048 = vmatprep.subr.bf16.mxu0 %v708
    %1049 = vmatpush1.bf16.msra.mxu0 %v707
    %1050 = vmatprep.subr.bf16.mxu0 %v696
    %1051 = vmatpush1.bf16.msra.mxu0 %v695
    %1052 = vmatprep.subr.bf16.mxu0 %v684
    %1053 = vmatpush1.bf16.msra.mxu0 %v683
    %1054 = vmatprep.subr.bf16.mxu0 %v672
    %1055 = vmatpush1.bf16.msra.mxu0 %v671
    %1056 = vmatprep.subr.bf16.mxu0 %v660
    %1057 = vmatpush1.bf16.msra.mxu0 %v659
    %1058 = vmatprep.subr.bf16.mxu0 %v648
    %1059 = vmatpush1.bf16.msra.mxu0 %v647
    %1060 = vmatprep.subr.bf16.mxu0 0
    %1061 = vmatpush2.bf16.msra.mxu0 0
    %1062 = vmatprep.subr.bf16.mxu0 0
    %1063 = vmatpush2.bf16.msra.mxu0 0
    %1064 = vmatprep.subr.bf16.mxu0 0
    %1065 = vmatpush2.bf16.msra.mxu0 0
    %1066 = vmatprep.subr.bf16.mxu0 0
    %1067 = vmatpush2.bf16.msra.mxu0 0
    %1068 = vmatprep.subr.bf16.mxu0 0
    %1069 = vmatpush2.bf16.msra.mxu0 0
    %1070 = vmatprep.subr.bf16.mxu0 0
    %1071 = vmatpush2.bf16.msra.mxu0 0
    %1072 = vmatprep.subr.bf16.mxu0 0
    %1073 = vmatpush2.bf16.msra.mxu0 0
    %1074 = vmatprep.subr.bf16.mxu0 0
    %1075 = vmatpush2.bf16.msra.mxu0 0
    %1076 = vmatprep.mubr.bf16.mxu0 0
    %1077 = vmatmul.mubr.bf16.gmra.mxu0 %v188
    %v1078 = vpop.f32.mrf.mxu0
    %v1079 = vadd.f32 %v332, %v1078
    %v1080 = vpop.f32.mrf.mxu0
    %v1081 = vadd.f32 %v336, %v1080
    %v1082 = vpop.f32.mrf.mxu0
    %v1083 = vadd.f32 %v332, %v1082
    %v1084 = vpop.f32.mrf.mxu0
    %v1085 = vadd.f32 %v336, %v1084
    %1086 = vdwg.mxu0
    %v1087 = vmax.f32 %v864, 0.0
    %v1088 = vmax.f32 %v866, 0.0
    %v1089 = vmax.f32 %v907, 0.0
    %v1090 = vmax.f32 %v909, 0.0
    %v1091 = vmax.f32 %v950, 0.0
    %v1092 = vmax.f32 %v952, 0.0
    %v1093 = vmax.f32 %v993, 0.0
    %v1094 = vmax.f32 %v995, 0.0
    %v1095 = vmax.f32 %v1036, 0.0
    %v1096 = vmax.f32 %v1038, 0.0
    %v1097 = vmax.f32 %v1079, 0.0
    %v1098 = vmax.f32 %v1081, 0.0
    %v1099 = vmax.f32 %v868, 0.0
    %v1100 = vmax.f32 %v870, 0.0
    %v1101 = vmax.f32 %v911, 0.0
    %v1102 = vmax.f32 %v913, 0.0
    %v1103 = vmax.f32 %v954, 0.0
    %v1104 = vmax.f32 %v956, 0.0
    %v1105 = vmax.f32 %v997, 0.0
    %v1106 = vmax.f32 %v999, 0.0
    %v1107 = vmax.f32 %v1040, 0.0
    %v1108 = vmax.f32 %v1042, 0.0
    %v1109 = vmax.f32 %v1083, 0.0
    %v1110 = vmax.f32 %v1085, 0.0
    %v1111 = vpack.c.bf16 %v1099, %v1087
    %v1112 = vpack.c.bf16 %v1100, %v1088
    %v1113 = vpack.c.bf16 %v1101, %v1089
    %v1114 = vpack.c.bf16 %v1102, %v1090
    %v1115 = vpack.c.bf16 %v1103, %v1091
    %v1116 = vpack.c.bf16 %v1104, %v1092
    %v1117 = vpack.c.bf16 %v1105, %v1093
    %v1118 = vpack.c.bf16 %v1106, %v1094
    %v1119 = vpack.c.bf16 %v1107, %v1095
    %v1120 = vpack.c.bf16 %v1108, %v1096
    %v1121 = vpack.c.bf16 %v1109, %v1097
    %v1122 = vpack.c.bf16 %v1110, %v1098
    %v1123 = vld [vmem:[#allocation7] sm:$0xff]
    %v1124 = vld [vmem:[#allocation7 + $0x8] sm:$0xf]
    %v1125 = vld [vmem:[#allocation7 + $0xc] sm:$0xff]
    %v1126 = vld [vmem:[#allocation7 + $0x14] sm:$0xf]
    %v1127 = vld [vmem:[#allocation7 + $0x18] sm:$0xff]
    %v1128 = vld [vmem:[#allocation7 + $0x20] sm:$0xf]
    %v1129 = vld [vmem:[#allocation7 + $0x24] sm:$0xff]
    %v1130 = vld [vmem:[#allocation7 + $0x2c] sm:$0xf]
    %v1131 = vld [vmem:[#allocation7 + $0x30] sm:$0xff]
    %v1132 = vld [vmem:[#allocation7 + $0x38] sm:$0xf]
    %v1133 = vld [vmem:[#allocation7 + $0x3c] sm:$0xff]
    %v1134 = vld [vmem:[#allocation7 + $0x44] sm:$0xf]
    %v1135 = vld [vmem:[#allocation7 + $0x48] sm:$0xff]
    %v1136 = vld [vmem:[#allocation7 + $0x50] sm:$0xf]
    %v1137 = vld [vmem:[#allocation7 + $0x54] sm:$0xff]
    %v1138 = vld [vmem:[#allocation7 + $0x5c] sm:$0xf]
    %v1139 = vld [vmem:[#allocation7 + $0x60] sm:$0xff]
    %v1140 = vld [vmem:[#allocation7 + $0x68] sm:$0xf]
    %v1141 = vld [vmem:[#allocation7 + $0x6c] sm:$0xff]
    %v1142 = vld [vmem:[#allocation7 + $0x74] sm:$0xf]
    %v1143 = vld [vmem:[#allocation7 + $0x78] sm:$0xff]
    %v1144 = vld [vmem:[#allocation7 + $0x80] sm:$0xf]
    %v1145 = vld [vmem:[#allocation7 + $0x84] sm:$0xff]
    %v1146 = vld [vmem:[#allocation7 + $0x8c] sm:$0xf]
    %v1147 = vld [vmem:[#allocation7 + $0x90] sm:$0xff]
    %v1148 = vld [vmem:[#allocation7 + $0x98] sm:$0xf]
    %v1149 = vld [vmem:[#allocation7 + $0x9c] sm:$0xff]
    %v1150 = vld [vmem:[#allocation7 + $0xa4] sm:$0xf]
    %v1151 = vld [vmem:[#allocation7 + $0xa8] sm:$0xff]
    %v1152 = vld [vmem:[#allocation7 + $0xb0] sm:$0xf]
    %v1153 = vld [vmem:[#allocation7 + $0xb4] sm:$0xff]
    %v1154 = vld [vmem:[#allocation7 + $0xbc] sm:$0xf]
    %v1155 = vld [vmem:[#allocation7 + $0xc0] sm:$0xff]
    %v1156 = vld [vmem:[#allocation7 + $0xc8] sm:$0xf]
    %v1157 = vld [vmem:[#allocation7 + $0xcc] sm:$0xff]
    %v1158 = vld [vmem:[#allocation7 + $0xd4] sm:$0xf]
    %v1159 = vld [vmem:[#allocation7 + $0xd8] sm:$0xff]
    %v1160 = vld [vmem:[#allocation7 + $0xe0] sm:$0xf]
    %v1161 = vld [vmem:[#allocation7 + $0xe4] sm:$0xff]
    %v1162 = vld [vmem:[#allocation7 + $0xec] sm:$0xf]
    %v1163 = vld [vmem:[#allocation7 + $0xf0] sm:$0xff]
    %v1164 = vld [vmem:[#allocation7 + $0xf8] sm:$0xf]
    %v1165 = vld [vmem:[#allocation7 + $0xfc] sm:$0xff]
    %v1166 = vld [vmem:[#allocation7 + $0x104] sm:$0xf]
    %v1167 = vld [vmem:[#allocation7 + $0x108] sm:$0xff]
    %v1168 = vld [vmem:[#allocation7 + $0x110] sm:$0xf]
    %v1169 = vld [vmem:[#allocation7 + $0x114] sm:$0xff]
    %v1170 = vld [vmem:[#allocation7 + $0x11c] sm:$0xf]
    %v1171 = vld [vmem:[#allocation7 + $0x120] sm:$0xff]
    %v1172 = vld [vmem:[#allocation7 + $0x128] sm:$0xf]
    %v1173 = vld [vmem:[#allocation7 + $0x12c] sm:$0xff]
    %v1174 = vld [vmem:[#allocation7 + $0x134] sm:$0xf]
    %v1175 = vld [vmem:[#allocation7 + $0x138] sm:$0xff]
    %v1176 = vld [vmem:[#allocation7 + $0x140] sm:$0xf]
    %v1177 = vld [vmem:[#allocation7 + $0x144] sm:$0xff]
    %v1178 = vld [vmem:[#allocation7 + $0x14c] sm:$0xf]
    %v1179 = vld [vmem:[#allocation7 + $0x150] sm:$0xff]
    %v1180 = vld [vmem:[#allocation7 + $0x158] sm:$0xf]
    %v1181 = vld [vmem:[#allocation7 + $0x15c] sm:$0xff]
    %v1182 = vld [vmem:[#allocation7 + $0x164] sm:$0xf]
    %v1183 = vld [vmem:[#allocation7 + $0x168] sm:$0xff]
    %v1184 = vld [vmem:[#allocation7 + $0x170] sm:$0xf]
    %v1185 = vld [vmem:[#allocation7 + $0x174] sm:$0xff]
    %v1186 = vld [vmem:[#allocation7 + $0x17c] sm:$0xf]
    %v1187 = vld [vmem:[#allocation7 + $0x180] sm:$0xff]
    %v1188 = vld [vmem:[#allocation7 + $0x188] sm:$0xf]
    %v1189 = vld [vmem:[#allocation7 + $0x18c] sm:$0xff]
    %v1190 = vld [vmem:[#allocation7 + $0x194] sm:$0xf]
    %v1191 = vld [vmem:[#allocation7 + $0x198] sm:$0xff]
    %v1192 = vld [vmem:[#allocation7 + $0x1a0] sm:$0xf]
    %v1193 = vld [vmem:[#allocation7 + $0x1a4] sm:$0xff]
    %v1194 = vld [vmem:[#allocation7 + $0x1ac] sm:$0xf]
    %v1195 = vld [vmem:[#allocation7 + $0x1b0] sm:$0xff]
    %v1196 = vld [vmem:[#allocation7 + $0x1b8] sm:$0xf]
    %v1197 = vld [vmem:[#allocation7 + $0x1bc] sm:$0xff]
    %v1198 = vld [vmem:[#allocation7 + $0x1c4] sm:$0xf]
    %v1199 = vld [vmem:[#allocation7 + $0x1c8] sm:$0xff]
    %v1200 = vld [vmem:[#allocation7 + $0x1d0] sm:$0xf]
    %v1201 = vld [vmem:[#allocation7 + $0x1d4] sm:$0xff]
    %v1202 = vld [vmem:[#allocation7 + $0x1dc] sm:$0xf]
    %v1203 = vld [vmem:[#allocation7 + $0x1e0] sm:$0xff]
    %v1204 = vld [vmem:[#allocation7 + $0x1e8] sm:$0xf]
    %v1205 = vld [vmem:[#allocation7 + $0x1ec] sm:$0xff]
    %v1206 = vld [vmem:[#allocation7 + $0x1f4] sm:$0xf]
    %v1207 = vld [vmem:[#allocation7 + $0x1f8] sm:$0xff]
    %v1208 = vld [vmem:[#allocation7 + $0x200] sm:$0xf]
    %v1209 = vld [vmem:[#allocation7 + $0x204] sm:$0xff]
    %v1210 = vld [vmem:[#allocation7 + $0x20c] sm:$0xf]
    %v1211 = vld [vmem:[#allocation7 + $0x210] sm:$0xff]
    %v1212 = vld [vmem:[#allocation7 + $0x218] sm:$0xf]
    %v1213 = vld [vmem:[#allocation7 + $0x21c] sm:$0xff]
    %v1214 = vld [vmem:[#allocation7 + $0x224] sm:$0xf]
    %v1215 = vld [vmem:[#allocation7 + $0x228] sm:$0xff]
    %v1216 = vld [vmem:[#allocation7 + $0x230] sm:$0xf]
    %v1217 = vld [vmem:[#allocation7 + $0x234] sm:$0xff]
    %v1218 = vld [vmem:[#allocation7 + $0x23c] sm:$0xf]
    %v1219 = vld [vmem:[#allocation7 + $0x240] sm:$0xff]
    %v1220 = vld [vmem:[#allocation7 + $0x248] sm:$0xf]
    %v1221 = vld [vmem:[#allocation7 + $0x24c] sm:$0xff]
    %v1222 = vld [vmem:[#allocation7 + $0x254] sm:$0xf]
    %v1223 = vld [vmem:[#allocation7 + $0x258] sm:$0xff]
    %v1224 = vld [vmem:[#allocation7 + $0x260] sm:$0xf]
    %v1225 = vld [vmem:[#allocation7 + $0x264] sm:$0xff]
    %v1226 = vld [vmem:[#allocation7 + $0x26c] sm:$0xf]
    %v1227 = vld [vmem:[#allocation7 + $0x270] sm:$0xff]
    %v1228 = vld [vmem:[#allocation7 + $0x278] sm:$0xf]
    %v1229 = vld [vmem:[#allocation7 + $0x27c] sm:$0xff]
    %v1230 = vld [vmem:[#allocation7 + $0x284] sm:$0xf]
    %v1231 = vld [vmem:[#allocation7 + $0x288] sm:$0xff]
    %v1232 = vld [vmem:[#allocation7 + $0x290] sm:$0xf]
    %v1233 = vld [vmem:[#allocation7 + $0x294] sm:$0xff]
    %v1234 = vld [vmem:[#allocation7 + $0x29c] sm:$0xf]
    %v1235 = vld [vmem:[#allocation7 + $0x2a0] sm:$0xff]
    %v1236 = vld [vmem:[#allocation7 + $0x2a8] sm:$0xf]
    %v1237 = vld [vmem:[#allocation7 + $0x2ac] sm:$0xff]
    %v1238 = vld [vmem:[#allocation7 + $0x2b4] sm:$0xf]
    %v1239 = vld [vmem:[#allocation7 + $0x2b8] sm:$0xff]
    %v1240 = vld [vmem:[#allocation7 + $0x2c0] sm:$0xf]
    %v1241 = vld [vmem:[#allocation7 + $0x2c4] sm:$0xff]
    %v1242 = vld [vmem:[#allocation7 + $0x2cc] sm:$0xf]
    %v1243 = vld [vmem:[#allocation7 + $0x2d0] sm:$0xff]
    %v1244 = vld [vmem:[#allocation7 + $0x2d8] sm:$0xf]
    %v1245 = vld [vmem:[#allocation7 + $0x2dc] sm:$0xff]
    %v1246 = vld [vmem:[#allocation7 + $0x2e4] sm:$0xf]
    %v1247 = vld [vmem:[#allocation7 + $0x2e8] sm:$0xff]
    %v1248 = vld [vmem:[#allocation7 + $0x2f0] sm:$0xf]
    %v1249 = vld [vmem:[#allocation7 + $0x2f4] sm:$0xff]
    %v1250 = vld [vmem:[#allocation7 + $0x2fc] sm:$0xf]
    %v1251 = vld [vmem:[%s7] sm:$0x7]
    %v1253 = vlaneseq
    %v1254 = vshrl.u32 %v1253, 7
    %v1255 = vsub.s32 0, %v1254
    %v1256 = vrot.slane %v1251, %v1255
    %v1257 = vlaneseq
    %v1258 = vshrl.u32 %v1257, 7
    %v1259 = vsub.s32 1, %v1258
    %v1260 = vrot.slane %v1251, %v1259
    %v1261 = vlaneseq
    %v1262 = vshrl.u32 %v1261, 7
    %v1263 = vsub.s32 2, %v1262
    %v1264 = vrot.slane %v1251, %v1263
    %v1396 = vunpack.c.l.b16 %v1123
    %v1397 = vunpack.c.h.b16 %v1123
    %v1398 = vunpack.c.l.b16 %v1124
    %v1399 = vunpack.c.l.b16 %v1125
    %v1400 = vunpack.c.h.b16 %v1125
    %v1401 = vunpack.c.l.b16 %v1126
    %v1402 = vunpack.c.l.b16 %v1127
    %v1403 = vunpack.c.h.b16 %v1127
    %v1404 = vunpack.c.l.b16 %v1128
    %v1405 = vunpack.c.l.b16 %v1129
    %v1406 = vunpack.c.h.b16 %v1129
    %v1407 = vunpack.c.l.b16 %v1130
    %v1408 = vunpack.c.l.b16 %v1131
    %v1409 = vunpack.c.h.b16 %v1131
    %v1410 = vunpack.c.l.b16 %v1132
    %v1411 = vunpack.c.l.b16 %v1133
    %v1412 = vunpack.c.h.b16 %v1133
    %v1413 = vunpack.c.l.b16 %v1134
    %v1414 = vunpack.c.l.b16 %v1135
    %v1415 = vunpack.c.h.b16 %v1135
    %v1416 = vunpack.c.l.b16 %v1136
    %v1417 = vunpack.c.l.b16 %v1137
    %v1418 = vunpack.c.h.b16 %v1137
    %v1419 = vunpack.c.l.b16 %v1138
    %v1420 = vunpack.c.l.b16 %v1139
    %v1421 = vunpack.c.h.b16 %v1139
    %v1422 = vunpack.c.l.b16 %v1140
    %v1423 = vunpack.c.l.b16 %v1141
    %v1424 = vunpack.c.h.b16 %v1141
    %v1425 = vunpack.c.l.b16 %v1142
    %v1426 = vunpack.c.l.b16 %v1143
    %v1427 = vunpack.c.h.b16 %v1143
    %v1428 = vunpack.c.l.b16 %v1144
    %v1429 = vunpack.c.l.b16 %v1145
    %v1430 = vunpack.c.h.b16 %v1145
    %v1431 = vunpack.c.l.b16 %v1146
    %v1432 = vunpack.c.l.b16 %v1147
    %v1433 = vunpack.c.h.b16 %v1147
    %v1434 = vunpack.c.l.b16 %v1148
    %v1435 = vunpack.c.l.b16 %v1149
    %v1436 = vunpack.c.h.b16 %v1149
    %v1437 = vunpack.c.l.b16 %v1150
    %v1438 = vunpack.c.l.b16 %v1151
    %v1439 = vunpack.c.h.b16 %v1151
    %v1440 = vunpack.c.l.b16 %v1152
    %v1441 = vunpack.c.l.b16 %v1153
    %v1442 = vunpack.c.h.b16 %v1153
    %v1443 = vunpack.c.l.b16 %v1154
    %v1444 = vunpack.c.l.b16 %v1155
    %v1445 = vunpack.c.h.b16 %v1155
    %v1446 = vunpack.c.l.b16 %v1156
    %v1447 = vunpack.c.l.b16 %v1157
    %v1448 = vunpack.c.h.b16 %v1157
    %v1449 = vunpack.c.l.b16 %v1158
    %v1450 = vunpack.c.l.b16 %v1159
    %v1451 = vunpack.c.h.b16 %v1159
    %v1452 = vunpack.c.l.b16 %v1160
    %v1453 = vunpack.c.l.b16 %v1161
    %v1454 = vunpack.c.h.b16 %v1161
    %v1455 = vunpack.c.l.b16 %v1162
    %v1456 = vunpack.c.l.b16 %v1163
    %v1457 = vunpack.c.h.b16 %v1163
    %v1458 = vunpack.c.l.b16 %v1164
    %v1459 = vunpack.c.l.b16 %v1165
    %v1460 = vunpack.c.h.b16 %v1165
    %v1461 = vunpack.c.l.b16 %v1166
    %v1462 = vunpack.c.l.b16 %v1167
    %v1463 = vunpack.c.h.b16 %v1167
    %v1464 = vunpack.c.l.b16 %v1168
    %v1465 = vunpack.c.l.b16 %v1169
    %v1466 = vunpack.c.h.b16 %v1169
    %v1467 = vunpack.c.l.b16 %v1170
    %v1468 = vunpack.c.l.b16 %v1171
    %v1469 = vunpack.c.h.b16 %v1171
    %v1470 = vunpack.c.l.b16 %v1172
    %v1471 = vunpack.c.l.b16 %v1173
    %v1472 = vunpack.c.h.b16 %v1173
    %v1473 = vunpack.c.l.b16 %v1174
    %v1474 = vunpack.c.l.b16 %v1175
    %v1475 = vunpack.c.h.b16 %v1175
    %v1476 = vunpack.c.l.b16 %v1176
    %v1477 = vunpack.c.l.b16 %v1177
    %v1478 = vunpack.c.h.b16 %v1177
    %v1479 = vunpack.c.l.b16 %v1178
    %v1480 = vunpack.c.l.b16 %v1179
    %v1481 = vunpack.c.h.b16 %v1179
    %v1482 = vunpack.c.l.b16 %v1180
    %v1483 = vunpack.c.l.b16 %v1181
    %v1484 = vunpack.c.h.b16 %v1181
    %v1485 = vunpack.c.l.b16 %v1182
    %v1486 = vunpack.c.l.b16 %v1183
    %v1487 = vunpack.c.h.b16 %v1183
    %v1488 = vunpack.c.l.b16 %v1184
    %v1489 = vunpack.c.l.b16 %v1185
    %v1490 = vunpack.c.h.b16 %v1185
    %v1491 = vunpack.c.l.b16 %v1186
    %v1492 = vunpack.c.l.b16 %v1187
    %v1493 = vunpack.c.h.b16 %v1187
    %v1494 = vunpack.c.l.b16 %v1188
    %v1495 = vunpack.c.l.b16 %v1189
    %v1496 = vunpack.c.h.b16 %v1189
    %v1497 = vunpack.c.l.b16 %v1190
    %v1498 = vunpack.c.l.b16 %v1191
    %v1499 = vunpack.c.h.b16 %v1191
    %v1500 = vunpack.c.l.b16 %v1192
    %v1501 = vunpack.c.l.b16 %v1193
    %v1502 = vunpack.c.h.b16 %v1193
    %v1503 = vunpack.c.l.b16 %v1194
    %v1504 = vunpack.c.l.b16 %v1195
    %v1505 = vunpack.c.h.b16 %v1195
    %v1506 = vunpack.c.l.b16 %v1196
    %v1507 = vunpack.c.l.b16 %v1197
    %v1508 = vunpack.c.h.b16 %v1197
    %v1509 = vunpack.c.l.b16 %v1198
    %v1510 = vunpack.c.l.b16 %v1199
    %v1511 = vunpack.c.h.b16 %v1199
    %v1512 = vunpack.c.l.b16 %v1200
    %v1513 = vunpack.c.l.b16 %v1201
    %v1514 = vunpack.c.h.b16 %v1201
    %v1515 = vunpack.c.l.b16 %v1202
    %v1516 = vunpack.c.l.b16 %v1203
    %v1517 = vunpack.c.h.b16 %v1203
    %v1518 = vunpack.c.l.b16 %v1204
    %v1519 = vunpack.c.l.b16 %v1205
    %v1520 = vunpack.c.h.b16 %v1205
    %v1521 = vunpack.c.l.b16 %v1206
    %v1522 = vunpack.c.l.b16 %v1207
    %v1523 = vunpack.c.h.b16 %v1207
    %v1524 = vunpack.c.l.b16 %v1208
    %v1525 = vunpack.c.l.b16 %v1209
    %v1526 = vunpack.c.h.b16 %v1209
    %v1527 = vunpack.c.l.b16 %v1210
    %v1528 = vunpack.c.l.b16 %v1211
    %v1529 = vunpack.c.h.b16 %v1211
    %v1530 = vunpack.c.l.b16 %v1212
    %v1531 = vunpack.c.l.b16 %v1213
    %v1532 = vunpack.c.h.b16 %v1213
    %v1533 = vunpack.c.l.b16 %v1214
    %v1534 = vunpack.c.l.b16 %v1215
    %v1535 = vunpack.c.h.b16 %v1215
    %v1536 = vunpack.c.l.b16 %v1216
    %v1537 = vunpack.c.l.b16 %v1217
    %v1538 = vunpack.c.h.b16 %v1217
    %v1539 = vunpack.c.l.b16 %v1218
    %v1540 = vunpack.c.l.b16 %v1219
    %v1541 = vunpack.c.h.b16 %v1219
    %v1542 = vunpack.c.l.b16 %v1220
    %v1543 = vunpack.c.l.b16 %v1221
    %v1544 = vunpack.c.h.b16 %v1221
    %v1545 = vunpack.c.l.b16 %v1222
    %v1546 = vunpack.c.l.b16 %v1223
    %v1547 = vunpack.c.h.b16 %v1223
    %v1548 = vunpack.c.l.b16 %v1224
    %v1549 = vunpack.c.l.b16 %v1225
    %v1550 = vunpack.c.h.b16 %v1225
    %v1551 = vunpack.c.l.b16 %v1226
    %v1552 = vunpack.c.l.b16 %v1227
    %v1553 = vunpack.c.h.b16 %v1227
    %v1554 = vunpack.c.l.b16 %v1228
    %v1555 = vunpack.c.l.b16 %v1229
    %v1556 = vunpack.c.h.b16 %v1229
    %v1557 = vunpack.c.l.b16 %v1230
    %v1558 = vunpack.c.l.b16 %v1231
    %v1559 = vunpack.c.h.b16 %v1231
    %v1560 = vunpack.c.l.b16 %v1232
    %v1561 = vunpack.c.l.b16 %v1233
    %v1562 = vunpack.c.h.b16 %v1233
    %v1563 = vunpack.c.l.b16 %v1234
    %v1564 = vunpack.c.l.b16 %v1235
    %v1565 = vunpack.c.h.b16 %v1235
    %v1566 = vunpack.c.l.b16 %v1236
    %v1567 = vunpack.c.l.b16 %v1237
    %v1568 = vunpack.c.h.b16 %v1237
    %v1569 = vunpack.c.l.b16 %v1238
    %v1570 = vunpack.c.l.b16 %v1239
    %v1571 = vunpack.c.h.b16 %v1239
    %v1572 = vunpack.c.l.b16 %v1240
    %v1573 = vunpack.c.l.b16 %v1241
    %v1574 = vunpack.c.h.b16 %v1241
    %v1575 = vunpack.c.l.b16 %v1242
    %v1576 = vunpack.c.l.b16 %v1243
    %v1577 = vunpack.c.h.b16 %v1243
    %v1578 = vunpack.c.l.b16 %v1244
    %v1579 = vunpack.c.l.b16 %v1245
    %v1580 = vunpack.c.h.b16 %v1245
    %v1581 = vunpack.c.l.b16 %v1246
    %v1582 = vunpack.c.l.b16 %v1247
    %v1583 = vunpack.c.h.b16 %v1247
    %v1584 = vunpack.c.l.b16 %v1248
    %v1585 = vunpack.c.l.b16 %v1249
    %v1586 = vunpack.c.h.b16 %v1249
    %v1587 = vunpack.c.l.b16 %v1250
    %v1588 = vpack.c.b16 %v1399, %v1396
    %v1589 = vpack.c.b16 %v1400, %v1397
    %v1590 = vpack.c.b16 %v1401, %v1398
    %v1591 = vpack.c.b16 %v1405, %v1402
    %v1592 = vpack.c.b16 %v1406, %v1403
    %v1593 = vpack.c.b16 %v1407, %v1404
    %v1594 = vpack.c.b16 %v1411, %v1408
    %v1595 = vpack.c.b16 %v1412, %v1409
    %v1596 = vpack.c.b16 %v1413, %v1410
    %v1597 = vpack.c.b16 %v1417, %v1414
    %v1598 = vpack.c.b16 %v1418, %v1415
    %v1599 = vpack.c.b16 %v1419, %v1416
    %v1600 = vpack.c.b16 %v1423, %v1420
    %v1601 = vpack.c.b16 %v1424, %v1421
    %v1602 = vpack.c.b16 %v1425, %v1422
    %v1603 = vpack.c.b16 %v1429, %v1426
    %v1604 = vpack.c.b16 %v1430, %v1427
    %v1605 = vpack.c.b16 %v1431, %v1428
    %v1606 = vpack.c.b16 %v1435, %v1432
    %v1607 = vpack.c.b16 %v1436, %v1433
    %v1608 = vpack.c.b16 %v1437, %v1434
    %v1609 = vpack.c.b16 %v1441, %v1438
    %v1610 = vpack.c.b16 %v1442, %v1439
    %v1611 = vpack.c.b16 %v1443, %v1440
    %v1612 = vpack.c.b16 %v1447, %v1444
    %v1613 = vpack.c.b16 %v1448, %v1445
    %v1614 = vpack.c.b16 %v1449, %v1446
    %v1615 = vpack.c.b16 %v1453, %v1450
    %v1616 = vpack.c.b16 %v1454, %v1451
    %v1617 = vpack.c.b16 %v1455, %v1452
    %v1618 = vpack.c.b16 %v1459, %v1456
    %v1619 = vpack.c.b16 %v1460, %v1457
    %v1620 = vpack.c.b16 %v1461, %v1458
    %v1621 = vpack.c.b16 %v1465, %v1462
    %v1622 = vpack.c.b16 %v1466, %v1463
    %v1623 = vpack.c.b16 %v1467, %v1464
    %v1624 = vpack.c.b16 %v1471, %v1468
    %v1625 = vpack.c.b16 %v1472, %v1469
    %v1626 = vpack.c.b16 %v1473, %v1470
    %v1627 = vpack.c.b16 %v1477, %v1474
    %v1628 = vpack.c.b16 %v1478, %v1475
    %v1629 = vpack.c.b16 %v1479, %v1476
    %v1630 = vpack.c.b16 %v1483, %v1480
    %v1631 = vpack.c.b16 %v1484, %v1481
    %v1632 = vpack.c.b16 %v1485, %v1482
    %v1633 = vpack.c.b16 %v1489, %v1486
    %v1634 = vpack.c.b16 %v1490, %v1487
    %v1635 = vpack.c.b16 %v1491, %v1488
    %v1636 = vpack.c.b16 %v1495, %v1492
    %v1637 = vpack.c.b16 %v1496, %v1493
    %v1638 = vpack.c.b16 %v1497, %v1494
    %v1639 = vpack.c.b16 %v1501, %v1498
    %v1640 = vpack.c.b16 %v1502, %v1499
    %v1641 = vpack.c.b16 %v1503, %v1500
    %v1642 = vpack.c.b16 %v1507, %v1504
    %v1643 = vpack.c.b16 %v1508, %v1505
    %v1644 = vpack.c.b16 %v1509, %v1506
    %v1645 = vpack.c.b16 %v1513, %v1510
    %v1646 = vpack.c.b16 %v1514, %v1511
    %v1647 = vpack.c.b16 %v1515, %v1512
    %v1648 = vpack.c.b16 %v1519, %v1516
    %v1649 = vpack.c.b16 %v1520, %v1517
    %v1650 = vpack.c.b16 %v1521, %v1518
    %v1651 = vpack.c.b16 %v1525, %v1522
    %v1652 = vpack.c.b16 %v1526, %v1523
    %v1653 = vpack.c.b16 %v1527, %v1524
    %v1654 = vpack.c.b16 %v1531, %v1528
    %v1655 = vpack.c.b16 %v1532, %v1529
    %v1656 = vpack.c.b16 %v1533, %v1530
    %v1657 = vpack.c.b16 %v1537, %v1534
    %v1658 = vpack.c.b16 %v1538, %v1535
    %v1659 = vpack.c.b16 %v1539, %v1536
    %v1660 = vpack.c.b16 %v1543, %v1540
    %v1661 = vpack.c.b16 %v1544, %v1541
    %v1662 = vpack.c.b16 %v1545, %v1542
    %v1663 = vpack.c.b16 %v1549, %v1546
    %v1664 = vpack.c.b16 %v1550, %v1547
    %v1665 = vpack.c.b16 %v1551, %v1548
    %v1666 = vpack.c.b16 %v1555, %v1552
    %v1667 = vpack.c.b16 %v1556, %v1553
    %v1668 = vpack.c.b16 %v1557, %v1554
    %v1669 = vpack.c.b16 %v1561, %v1558
    %v1670 = vpack.c.b16 %v1562, %v1559
    %v1671 = vpack.c.b16 %v1563, %v1560
    %v1672 = vpack.c.b16 %v1567, %v1564
    %v1673 = vpack.c.b16 %v1568, %v1565
    %v1674 = vpack.c.b16 %v1569, %v1566
    %v1675 = vpack.c.b16 %v1573, %v1570
    %v1676 = vpack.c.b16 %v1574, %v1571
    %v1677 = vpack.c.b16 %v1575, %v1572
    %v1678 = vpack.c.b16 %v1579, %v1576
    %v1679 = vpack.c.b16 %v1580, %v1577
    %v1680 = vpack.c.b16 %v1581, %v1578
    %v1681 = vpack.c.b16 %v1585, %v1582
    %v1682 = vpack.c.b16 %v1586, %v1583
    %v1683 = vpack.c.b16 %v1587, %v1584
    %1780 = vmatprep.subr.bf16.mxu0 %v1610
    %1781 = vmatpush1.bf16.msra.mxu0 %v1609
    %1782 = vmatprep.subr.bf16.mxu0 %v1607
    %1783 = vmatpush1.bf16.msra.mxu0 %v1606
    %1784 = vmatprep.subr.bf16.mxu0 %v1604
    %1785 = vmatpush1.bf16.msra.mxu0 %v1603
    %1786 = vmatprep.subr.bf16.mxu0 %v1601
    %1787 = vmatpush1.bf16.msra.mxu0 %v1600
    %1788 = vmatprep.subr.bf16.mxu0 %v1598
    %1789 = vmatpush1.bf16.msra.mxu0 %v1597
    %1790 = vmatprep.subr.bf16.mxu0 %v1595
    %1791 = vmatpush1.bf16.msra.mxu0 %v1594
    %1792 = vmatprep.subr.bf16.mxu0 %v1592
    %1793 = vmatpush1.bf16.msra.mxu0 %v1591
    %1794 = vmatprep.subr.bf16.mxu0 %v1589
    %1795 = vmatpush1.bf16.msra.mxu0 %v1588
    %1796 = vmatprep.subr.bf16.mxu0 %v1634
    %1797 = vmatpush2.bf16.msra.mxu0 %v1633
    %1798 = vmatprep.subr.bf16.mxu0 %v1631
    %1799 = vmatpush2.bf16.msra.mxu0 %v1630
    %1800 = vmatprep.subr.bf16.mxu0 %v1628
    %1801 = vmatpush2.bf16.msra.mxu0 %v1627
    %1802 = vmatprep.subr.bf16.mxu0 %v1625
    %1803 = vmatpush2.bf16.msra.mxu0 %v1624
    %1804 = vmatprep.subr.bf16.mxu0 %v1622
    %1805 = vmatpush2.bf16.msra.mxu0 %v1621
    %1806 = vmatprep.subr.bf16.mxu0 %v1619
    %1807 = vmatpush2.bf16.msra.mxu0 %v1618
    %1808 = vmatprep.subr.bf16.mxu0 %v1616
    %1809 = vmatpush2.bf16.msra.mxu0 %v1615
    %1810 = vmatprep.subr.bf16.mxu0 %v1613
    %1811 = vmatpush2.bf16.msra.mxu0 %v1612
    %1812 = vmatprep.mubr.bf16.mxu0 %v1112
    %1813 = vmatmul.mubr.bf16.gmra.mxu0 %v1111
    %v1814 = vpop.f32.mrf.mxu0
    %v1815 = vadd.f32 %v1256, %v1814
    %v1816 = vpop.f32.mrf.mxu0
    %v1817 = vadd.f32 %v1260, %v1816
    %v1818 = vpop.f32.mrf.mxu0
    %v1819 = vadd.f32 %v1256, %v1818
    %v1820 = vpop.f32.mrf.mxu0
    %v1821 = vadd.f32 %v1260, %v1820
    %1822 = vdwg.mxu0
    %1823 = vmatprep.subr.bf16.mxu0 %v1658
    %1824 = vmatpush1.bf16.msra.mxu0 %v1657
    %1825 = vmatprep.subr.bf16.mxu0 %v1655
    %1826 = vmatpush1.bf16.msra.mxu0 %v1654
    %1827 = vmatprep.subr.bf16.mxu0 %v1652
    %1828 = vmatpush1.bf16.msra.mxu0 %v1651
    %1829 = vmatprep.subr.bf16.mxu0 %v1649
    %1830 = vmatpush1.bf16.msra.mxu0 %v1648
    %1831 = vmatprep.subr.bf16.mxu0 %v1646
    %1832 = vmatpush1.bf16.msra.mxu0 %v1645
    %1833 = vmatprep.subr.bf16.mxu0 %v1643
    %1834 = vmatpush1.bf16.msra.mxu0 %v1642
    %1835 = vmatprep.subr.bf16.mxu0 %v1640
    %1836 = vmatpush1.bf16.msra.mxu0 %v1639
    %1837 = vmatprep.subr.bf16.mxu0 %v1637
    %1838 = vmatpush1.bf16.msra.mxu0 %v1636
    %1839 = vmatprep.subr.bf16.mxu0 %v1682
    %1840 = vmatpush2.bf16.msra.mxu0 %v1681
    %1841 = vmatprep.subr.bf16.mxu0 %v1679
    %1842 = vmatpush2.bf16.msra.mxu0 %v1678
    %1843 = vmatprep.subr.bf16.mxu0 %v1676
    %1844 = vmatpush2.bf16.msra.mxu0 %v1675
    %1845 = vmatprep.subr.bf16.mxu0 %v1673
    %1846 = vmatpush2.bf16.msra.mxu0 %v1672
    %1847 = vmatprep.subr.bf16.mxu0 %v1670
    %1848 = vmatpush2.bf16.msra.mxu0 %v1669
    %1849 = vmatprep.subr.bf16.mxu0 %v1667
    %1850 = vmatpush2.bf16.msra.mxu0 %v1666
    %1851 = vmatprep.subr.bf16.mxu0 %v1664
    %1852 = vmatpush2.bf16.msra.mxu0 %v1663
    %1853 = vmatprep.subr.bf16.mxu0 %v1661
    %1854 = vmatpush2.bf16.msra.mxu0 %v1660
    %1855 = vmatprep.mubr.bf16.mxu0 %v1114
    %1856 = vmatmul.mubr.bf16.gmra.mxu0 %v1113
    %v1857 = vpop.f32.mrf.mxu0
    %v1858 = vadd.f32 %v1815, %v1857
    %v1859 = vpop.f32.mrf.mxu0
    %v1860 = vadd.f32 %v1817, %v1859
    %v1861 = vpop.f32.mrf.mxu0
    %v1862 = vadd.f32 %v1819, %v1861
    %v1863 = vpop.f32.mrf.mxu0
    %v1864 = vadd.f32 %v1821, %v1863
    %1865 = vdwg.mxu0
    %1866 = vmatprep.subr.bf16.mxu0 0
    %1867 = vmatpush1.bf16.msra.mxu0 %v1611
    %1868 = vmatprep.subr.bf16.mxu0 0
    %1869 = vmatpush1.bf16.msra.mxu0 %v1608
    %1870 = vmatprep.subr.bf16.mxu0 0
    %1871 = vmatpush1.bf16.msra.mxu0 %v1605
    %1872 = vmatprep.subr.bf16.mxu0 0
    %1873 = vmatpush1.bf16.msra.mxu0 %v1602
    %1874 = vmatprep.subr.bf16.mxu0 0
    %1875 = vmatpush1.bf16.msra.mxu0 %v1599
    %1876 = vmatprep.subr.bf16.mxu0 0
    %1877 = vmatpush1.bf16.msra.mxu0 %v1596
    %1878 = vmatprep.subr.bf16.mxu0 0
    %1879 = vmatpush1.bf16.msra.mxu0 %v1593
    %1880 = vmatprep.subr.bf16.mxu0 0
    %1881 = vmatpush1.bf16.msra.mxu0 %v1590
    %1882 = vmatprep.subr.bf16.mxu0 0
    %1883 = vmatpush2.bf16.msra.mxu0 %v1635
    %1884 = vmatprep.subr.bf16.mxu0 0
    %1885 = vmatpush2.bf16.msra.mxu0 %v1632
    %1886 = vmatprep.subr.bf16.mxu0 0
    %1887 = vmatpush2.bf16.msra.mxu0 %v1629
    %1888 = vmatprep.subr.bf16.mxu0 0
    %1889 = vmatpush2.bf16.msra.mxu0 %v1626
    %1890 = vmatprep.subr.bf16.mxu0 0
    %1891 = vmatpush2.bf16.msra.mxu0 %v1623
    %1892 = vmatprep.subr.bf16.mxu0 0
    %1893 = vmatpush2.bf16.msra.mxu0 %v1620
    %1894 = vmatprep.subr.bf16.mxu0 0
    %1895 = vmatpush2.bf16.msra.mxu0 %v1617
    %1896 = vmatprep.subr.bf16.mxu0 0
    %1897 = vmatpush2.bf16.msra.mxu0 %v1614
    %1898 = vmatprep.mubr.bf16.mxu0 %v1112
    %1899 = vmatmul.mubr.bf16.gmra.mxu0 %v1111
    %v1900 = vpop.f32.mrf.mxu0
    %v1901 = vadd.f32 %v1264, %v1900
    %v1902 = vpop.f32.mrf.mxu0
    %v1903 = vpop.f32.mrf.mxu0
    %v1904 = vadd.f32 %v1264, %v1903
    %v1905 = vpop.f32.mrf.mxu0
    %1906 = vdwg.mxu0
    %1907 = vmatprep.subr.bf16.mxu0 0
    %1908 = vmatpush1.bf16.msra.mxu0 %v1659
    %1909 = vmatprep.subr.bf16.mxu0 0
    %1910 = vmatpush1.bf16.msra.mxu0 %v1656
    %1911 = vmatprep.subr.bf16.mxu0 0
    %1912 = vmatpush1.bf16.msra.mxu0 %v1653
    %1913 = vmatprep.subr.bf16.mxu0 0
    %1914 = vmatpush1.bf16.msra.mxu0 %v1650
    %1915 = vmatprep.subr.bf16.mxu0 0
    %1916 = vmatpush1.bf16.msra.mxu0 %v1647
    %1917 = vmatprep.subr.bf16.mxu0 0
    %1918 = vmatpush1.bf16.msra.mxu0 %v1644
    %1919 = vmatprep.subr.bf16.mxu0 0
    %1920 = vmatpush1.bf16.msra.mxu0 %v1641
    %1921 = vmatprep.subr.bf16.mxu0 0
    %1922 = vmatpush1.bf16.msra.mxu0 %v1638
    %1923 = vmatprep.subr.bf16.mxu0 0
    %1924 = vmatpush2.bf16.msra.mxu0 %v1683
    %1925 = vmatprep.subr.bf16.mxu0 0
    %1926 = vmatpush2.bf16.msra.mxu0 %v1680
    %1927 = vmatprep.subr.bf16.mxu0 0
    %1928 = vmatpush2.bf16.msra.mxu0 %v1677
    %1929 = vmatprep.subr.bf16.mxu0 0
    %1930 = vmatpush2.bf16.msra.mxu0 %v1674
    %1931 = vmatprep.subr.bf16.mxu0 0
    %1932 = vmatpush2.bf16.msra.mxu0 %v1671
    %1933 = vmatprep.subr.bf16.mxu0 0
    %1934 = vmatpush2.bf16.msra.mxu0 %v1668
    %1935 = vmatprep.subr.bf16.mxu0 0
    %1936 = vmatpush2.bf16.msra.mxu0 %v1665
    %1937 = vmatprep.subr.bf16.mxu0 0
    %1938 = vmatpush2.bf16.msra.mxu0 %v1662
    %1939 = vmatprep.mubr.bf16.mxu0 %v1114
    %1940 = vmatmul.mubr.bf16.gmra.mxu0 %v1113
    %v1941 = vpop.f32.mrf.mxu0
    %v1942 = vadd.f32 %v1901, %v1941
    %v1943 = vpop.f32.mrf.mxu0
    %v1944 = vpop.f32.mrf.mxu0
    %v1945 = vadd.f32 %v1904, %v1944
    %v1946 = vpop.f32.mrf.mxu0
    %1947 = vdwg.mxu0
    %v1948 = vld [vmem:[#allocation9] sm:$0xf]
    %v1949 = vld [vmem:[#allocation9 + $0x4] sm:$0xf]
    %v1950 = vld [vmem:[#allocation9 + $0x8] sm:$0xf]
    %v1951 = vld [vmem:[#allocation9 + $0xc] sm:$0xf]
    %v1952 = vld [vmem:[#allocation9 + $0x10] sm:$0xf]
    %v1953 = vld [vmem:[#allocation9 + $0x14] sm:$0xf]
    %v1954 = vld [vmem:[#allocation9 + $0x18] sm:$0xf]
    %v1955 = vld [vmem:[#allocation9 + $0x1c] sm:$0xf]
    %v1956 = vld [vmem:[#allocation9 + $0x20] sm:$0xf]
    %v1957 = vld [vmem:[#allocation9 + $0x24] sm:$0xf]
    %v1958 = vld [vmem:[#allocation9 + $0x28] sm:$0xf]
    %v1959 = vld [vmem:[#allocation9 + $0x2c] sm:$0xf]
    %v1960 = vld [vmem:[#allocation9 + $0x30] sm:$0xf]
    %v1961 = vld [vmem:[#allocation9 + $0x34] sm:$0xf]
    %v1962 = vld [vmem:[#allocation9 + $0x38] sm:$0xf]
    %v1963 = vld [vmem:[#allocation9 + $0x3c] sm:$0xf]
    %v1964 = vld [vmem:[#allocation9 + $0x40] sm:$0xf]
    %v1965 = vld [vmem:[#allocation9 + $0x44] sm:$0xf]
    %v1966 = vld [vmem:[#allocation9 + $0x48] sm:$0xf]
    %v1967 = vld [vmem:[#allocation9 + $0x4c] sm:$0xf]
    %v1968 = vld [vmem:[#allocation9 + $0x50] sm:$0xf]
    %v1969 = vld [vmem:[#allocation9 + $0x54] sm:$0xf]
    %v1970 = vld [vmem:[#allocation9 + $0x58] sm:$0xf]
    %v1971 = vld [vmem:[#allocation9 + $0x5c] sm:$0xf]
    %v1972 = vld [vmem:[#allocation9 + $0x60] sm:$0xf]
    %v1973 = vld [vmem:[#allocation9 + $0x64] sm:$0xf]
    %v1974 = vld [vmem:[#allocation9 + $0x68] sm:$0xf]
    %v1975 = vld [vmem:[#allocation9 + $0x6c] sm:$0xf]
    %v1976 = vld [vmem:[#allocation9 + $0x70] sm:$0xf]
    %v1977 = vld [vmem:[#allocation9 + $0x74] sm:$0xf]
    %v1978 = vld [vmem:[#allocation9 + $0x78] sm:$0xf]
    %v1979 = vld [vmem:[#allocation9 + $0x7c] sm:$0xf]
    %v1980 = vld [vmem:[#allocation9 + $0x80] sm:$0xf]
    %v1981 = vld [vmem:[#allocation9 + $0x84] sm:$0xf]
    %v1982 = vld [vmem:[#allocation9 + $0x88] sm:$0xf]
    %v1983 = vld [vmem:[#allocation9 + $0x8c] sm:$0xf]
    %v1984 = vld [vmem:[#allocation9 + $0x90] sm:$0xf]
    %v1985 = vld [vmem:[#allocation9 + $0x94] sm:$0xf]
    %v1986 = vld [vmem:[#allocation9 + $0x98] sm:$0xf]
    %v1987 = vld [vmem:[#allocation9 + $0x9c] sm:$0xf]
    %v1988 = vld [vmem:[#allocation9 + $0xa0] sm:$0xf]
    %v1989 = vld [vmem:[#allocation9 + $0xa4] sm:$0xf]
    %v1990 = vld [vmem:[#allocation9 + $0xa8] sm:$0xf]
    %v1991 = vld [vmem:[#allocation9 + $0xac] sm:$0xf]
    %v1992 = vld [vmem:[#allocation9 + $0xb0] sm:$0xf]
    %v1993 = vld [vmem:[#allocation9 + $0xb4] sm:$0xf]
    %v1994 = vld [vmem:[#allocation9 + $0xb8] sm:$0xf]
    %v1995 = vld [vmem:[#allocation9 + $0xbc] sm:$0xf]
    %v1996 = vld [vmem:[#allocation9 + $0xc0] sm:$0xf]
    %v1997 = vld [vmem:[#allocation9 + $0xc4] sm:$0xf]
    %v1998 = vld [vmem:[#allocation9 + $0xc8] sm:$0xf]
    %v1999 = vld [vmem:[#allocation9 + $0xcc] sm:$0xf]
    %v2000 = vld [vmem:[#allocation9 + $0xd0] sm:$0xf]
    %v2001 = vld [vmem:[#allocation9 + $0xd4] sm:$0xf]
    %v2002 = vld [vmem:[#allocation9 + $0xd8] sm:$0xf]
    %v2003 = vld [vmem:[#allocation9 + $0xdc] sm:$0xf]
    %v2004 = vld [vmem:[#allocation9 + $0xe0] sm:$0xf]
    %v2005 = vld [vmem:[#allocation9 + $0xe4] sm:$0xf]
    %v2006 = vld [vmem:[#allocation9 + $0xe8] sm:$0xf]
    %v2007 = vld [vmem:[#allocation9 + $0xec] sm:$0xf]
    %v2008 = vld [vmem:[#allocation9 + $0xf0] sm:$0xf]
    %v2009 = vld [vmem:[#allocation9 + $0xf4] sm:$0xf]
    %v2010 = vld [vmem:[#allocation9 + $0xf8] sm:$0xf]
    %v2011 = vld [vmem:[#allocation9 + $0xfc] sm:$0xf]
    %v2012 = vld [vmem:[%s9] sm:$0x1]
    %v2014 = vlaneseq
    %v2015 = vshrl.u32 %v2014, 7
    %v2016 = vsub.s32 0, %v2015
    %v2017 = vrot.slane %v2012, %v2016
    %v2083 = vunpack.c.l.b16 %v1948
    %v2084 = vunpack.c.l.b16 %v1949
    %v2085 = vunpack.c.l.b16 %v1950
    %v2086 = vunpack.c.l.b16 %v1951
    %v2087 = vunpack.c.l.b16 %v1952
    %v2088 = vunpack.c.l.b16 %v1953
    %v2089 = vunpack.c.l.b16 %v1954
    %v2090 = vunpack.c.l.b16 %v1955
    %v2091 = vunpack.c.l.b16 %v1956
    %v2092 = vunpack.c.l.b16 %v1957
    %v2093 = vunpack.c.l.b16 %v1958
    %v2094 = vunpack.c.l.b16 %v1959
    %v2095 = vunpack.c.l.b16 %v1960
    %v2096 = vunpack.c.l.b16 %v1961
    %v2097 = vunpack.c.l.b16 %v1962
    %v2098 = vunpack.c.l.b16 %v1963
    %v2099 = vunpack.c.l.b16 %v1964
    %v2100 = vunpack.c.l.b16 %v1965
    %v2101 = vunpack.c.l.b16 %v1966
    %v2102 = vunpack.c.l.b16 %v1967
    %v2103 = vunpack.c.l.b16 %v1968
    %v2104 = vunpack.c.l.b16 %v1969
    %v2105 = vunpack.c.l.b16 %v1970
    %v2106 = vunpack.c.l.b16 %v1971
    %v2107 = vunpack.c.l.b16 %v1972
    %v2108 = vunpack.c.l.b16 %v1973
    %v2109 = vunpack.c.l.b16 %v1974
    %v2110 = vunpack.c.l.b16 %v1975
    %v2111 = vunpack.c.l.b16 %v1976
    %v2112 = vunpack.c.l.b16 %v1977
    %v2113 = vunpack.c.l.b16 %v1978
    %v2114 = vunpack.c.l.b16 %v1979
    %v2115 = vunpack.c.l.b16 %v1980
    %v2116 = vunpack.c.l.b16 %v1981
    %v2117 = vunpack.c.l.b16 %v1982
    %v2118 = vunpack.c.l.b16 %v1983
    %v2119 = vunpack.c.l.b16 %v1984
    %v2120 = vunpack.c.l.b16 %v1985
    %v2121 = vunpack.c.l.b16 %v1986
    %v2122 = vunpack.c.l.b16 %v1987
    %v2123 = vunpack.c.l.b16 %v1988
    %v2124 = vunpack.c.l.b16 %v1989
    %v2125 = vunpack.c.l.b16 %v1990
    %v2126 = vunpack.c.l.b16 %v1991
    %v2127 = vunpack.c.l.b16 %v1992
    %v2128 = vunpack.c.l.b16 %v1993
    %v2129 = vunpack.c.l.b16 %v1994
    %v2130 = vunpack.c.l.b16 %v1995
    %v2131 = vunpack.c.l.b16 %v1996
    %v2132 = vunpack.c.l.b16 %v1997
    %v2133 = vunpack.c.l.b16 %v1998
    %v2134 = vunpack.c.l.b16 %v1999
    %v2135 = vunpack.c.l.b16 %v2000
    %v2136 = vunpack.c.l.b16 %v2001
    %v2137 = vunpack.c.l.b16 %v2002
    %v2138 = vunpack.c.l.b16 %v2003
    %v2139 = vunpack.c.l.b16 %v2004
    %v2140 = vunpack.c.l.b16 %v2005
    %v2141 = vunpack.c.l.b16 %v2006
    %v2142 = vunpack.c.l.b16 %v2007
    %v2143 = vunpack.c.l.b16 %v2008
    %v2144 = vunpack.c.l.b16 %v2009
    %v2145 = vunpack.c.l.b16 %v2010
    %v2146 = vunpack.c.l.b16 %v2011
    %v2147 = vpack.c.b16 %v2084, %v2083
    %v2148 = vpack.c.b16 %v2086, %v2085
    %v2149 = vpack.c.b16 %v2088, %v2087
    %v2150 = vpack.c.b16 %v2090, %v2089
    %v2151 = vpack.c.b16 %v2092, %v2091
    %v2152 = vpack.c.b16 %v2094, %v2093
    %v2153 = vpack.c.b16 %v2096, %v2095
    %v2154 = vpack.c.b16 %v2098, %v2097
    %v2155 = vpack.c.b16 %v2100, %v2099
    %v2156 = vpack.c.b16 %v2102, %v2101
    %v2157 = vpack.c.b16 %v2104, %v2103
    %v2158 = vpack.c.b16 %v2106, %v2105
    %v2159 = vpack.c.b16 %v2108, %v2107
    %v2160 = vpack.c.b16 %v2110, %v2109
    %v2161 = vpack.c.b16 %v2112, %v2111
    %v2162 = vpack.c.b16 %v2114, %v2113
    %v2163 = vpack.c.b16 %v2116, %v2115
    %v2164 = vpack.c.b16 %v2118, %v2117
    %v2165 = vpack.c.b16 %v2120, %v2119
    %v2166 = vpack.c.b16 %v2122, %v2121
    %v2167 = vpack.c.b16 %v2124, %v2123
    %v2168 = vpack.c.b16 %v2126, %v2125
    %v2169 = vpack.c.b16 %v2128, %v2127
    %v2170 = vpack.c.b16 %v2130, %v2129
    %v2171 = vpack.c.b16 %v2132, %v2131
    %v2172 = vpack.c.b16 %v2134, %v2133
    %v2173 = vpack.c.b16 %v2136, %v2135
    %v2174 = vpack.c.b16 %v2138, %v2137
    %v2175 = vpack.c.b16 %v2140, %v2139
    %v2176 = vpack.c.b16 %v2142, %v2141
    %v2177 = vpack.c.b16 %v2144, %v2143
    %v2178 = vpack.c.b16 %v2146, %v2145
    %2211 = vmatprep.subr.bf16.mxu0 0
    %2212 = vmatpush1.bf16.msra.mxu0 %v2154
    %2213 = vmatprep.subr.bf16.mxu0 0
    %2214 = vmatpush1.bf16.msra.mxu0 %v2153
    %2215 = vmatprep.subr.bf16.mxu0 0
    %2216 = vmatpush1.bf16.msra.mxu0 %v2152
    %2217 = vmatprep.subr.bf16.mxu0 0
    %2218 = vmatpush1.bf16.msra.mxu0 %v2151
    %2219 = vmatprep.subr.bf16.mxu0 0
    %2220 = vmatpush1.bf16.msra.mxu0 %v2150
    %2221 = vmatprep.subr.bf16.mxu0 0
    %2222 = vmatpush1.bf16.msra.mxu0 %v2149
    %2223 = vmatprep.subr.bf16.mxu0 0
    %2224 = vmatpush1.bf16.msra.mxu0 %v2148
    %2225 = vmatprep.subr.bf16.mxu0 0
    %2226 = vmatpush1.bf16.msra.mxu0 %v2147
    %2227 = vmatprep.subr.bf16.mxu0 0
    %2228 = vmatpush2.bf16.msra.mxu0 %v2162
    %2229 = vmatprep.subr.bf16.mxu0 0
    %2230 = vmatpush2.bf16.msra.mxu0 %v2161
    %2231 = vmatprep.subr.bf16.mxu0 0
    %2232 = vmatpush2.bf16.msra.mxu0 %v2160
    %2233 = vmatprep.subr.bf16.mxu0 0
    %2234 = vmatpush2.bf16.msra.mxu0 %v2159
    %2235 = vmatprep.subr.bf16.mxu0 0
    %2236 = vmatpush2.bf16.msra.mxu0 %v2158
    %2237 = vmatprep.subr.bf16.mxu0 0
    %2238 = vmatpush2.bf16.msra.mxu0 %v2157
    %2239 = vmatprep.subr.bf16.mxu0 0
    %2240 = vmatpush2.bf16.msra.mxu0 %v2156
    %2241 = vmatprep.subr.bf16.mxu0 0
    %2242 = vmatpush2.bf16.msra.mxu0 %v2155
    %2243 = vmatprep.mubr.bf16.mxu0 %v1116
    %2244 = vmatmul.mubr.bf16.gmra.mxu0 %v1115
    %v2245 = vpop.f32.mrf.mxu0
    %v2246 = vadd.f32 %v2017, %v2245
    %v2247 = vpop.f32.mrf.mxu0
    %v2248 = vpop.f32.mrf.mxu0
    %v2249 = vadd.f32 %v2017, %v2248
    %v2250 = vpop.f32.mrf.mxu0
    %2251 = vdwg.mxu0
    %2252 = vmatprep.subr.bf16.mxu0 0
    %2253 = vmatpush1.bf16.msra.mxu0 %v2170
    %2254 = vmatprep.subr.bf16.mxu0 0
    %2255 = vmatpush1.bf16.msra.mxu0 %v2169
    %2256 = vmatprep.subr.bf16.mxu0 0
    %2257 = vmatpush1.bf16.msra.mxu0 %v2168
    %2258 = vmatprep.subr.bf16.mxu0 0
    %2259 = vmatpush1.bf16.msra.mxu0 %v2167
    %2260 = vmatprep.subr.bf16.mxu0 0
    %2261 = vmatpush1.bf16.msra.mxu0 %v2166
    %2262 = vmatprep.subr.bf16.mxu0 0
    %2263 = vmatpush1.bf16.msra.mxu0 %v2165
    %2264 = vmatprep.subr.bf16.mxu0 0
    %2265 = vmatpush1.bf16.msra.mxu0 %v2164
    %2266 = vmatprep.subr.bf16.mxu0 0
    %2267 = vmatpush1.bf16.msra.mxu0 %v2163
    %2268 = vmatprep.subr.bf16.mxu0 0
    %2269 = vmatpush2.bf16.msra.mxu0 %v2178
    %2270 = vmatprep.subr.bf16.mxu0 0
    %2271 = vmatpush2.bf16.msra.mxu0 %v2177
    %2272 = vmatprep.subr.bf16.mxu0 0
    %2273 = vmatpush2.bf16.msra.mxu0 %v2176
    %2274 = vmatprep.subr.bf16.mxu0 0
    %2275 = vmatpush2.bf16.msra.mxu0 %v2175
    %2276 = vmatprep.subr.bf16.mxu0 0
    %2277 = vmatpush2.bf16.msra.mxu0 %v2174
    %2278 = vmatprep.subr.bf16.mxu0 0
    %2279 = vmatpush2.bf16.msra.mxu0 %v2173
    %2280 = vmatprep.subr.bf16.mxu0 0
    %2281 = vmatpush2.bf16.msra.mxu0 %v2172
    %2282 = vmatprep.subr.bf16.mxu0 0
    %2283 = vmatpush2.bf16.msra.mxu0 %v2171
    %2284 = vmatprep.mubr.bf16.mxu0 %v1118
    %2285 = vmatmul.mubr.bf16.gmra.mxu0 %v1117
    %v2286 = vpop.f32.mrf.mxu0
    %v2287 = vadd.f32 %v2246, %v2286
    %v2288 = vpop.f32.mrf.mxu0
    %v2289 = vpop.f32.mrf.mxu0
    %v2290 = vadd.f32 %v2249, %v2289
    %v2291 = vpop.f32.mrf.mxu0
    %2292 = vdwg.mxu0
    %v2293 = vld [vmem:[#allocation10] sm:$0xff]
    %v2294 = vld [vmem:[#allocation10 + $0x8] sm:$0xff]
    %v2295 = vld [vmem:[#allocation10 + $0x10] sm:$0xff]
    %v2296 = vld [vmem:[#allocation10 + $0x18] sm:$0xff]
    %v2297 = vld [vmem:[#allocation10 + $0x20] sm:$0xff]
    %v2298 = vld [vmem:[#allocation10 + $0x28] sm:$0xff]
    %v2299 = vld [vmem:[#allocation10 + $0x30] sm:$0xff]
    %v2300 = vld [vmem:[#allocation10 + $0x38] sm:$0xff]
    %v2301 = vld [vmem:[#allocation10 + $0x40] sm:$0xff]
    %v2302 = vld [vmem:[#allocation10 + $0x48] sm:$0xff]
    %v2303 = vld [vmem:[#allocation10 + $0x50] sm:$0xff]
    %v2304 = vld [vmem:[#allocation10 + $0x58] sm:$0xff]
    %v2305 = vld [vmem:[#allocation10 + $0x60] sm:$0xff]
    %v2306 = vld [vmem:[#allocation10 + $0x68] sm:$0xff]
    %v2307 = vld [vmem:[#allocation10 + $0x70] sm:$0xff]
    %v2308 = vld [vmem:[#allocation10 + $0x78] sm:$0xff]
    %v2309 = vld [vmem:[#allocation10 + $0x80] sm:$0xff]
    %v2310 = vld [vmem:[#allocation10 + $0x88] sm:$0xff]
    %v2311 = vld [vmem:[#allocation10 + $0x90] sm:$0xff]
    %v2312 = vld [vmem:[#allocation10 + $0x98] sm:$0xff]
    %v2313 = vld [vmem:[#allocation10 + $0xa0] sm:$0xff]
    %v2314 = vld [vmem:[#allocation10 + $0xa8] sm:$0xff]
    %v2315 = vld [vmem:[#allocation10 + $0xb0] sm:$0xff]
    %v2316 = vld [vmem:[#allocation10 + $0xb8] sm:$0xff]
    %v2317 = vld [vmem:[#allocation10 + $0xc0] sm:$0xff]
    %v2318 = vld [vmem:[#allocation10 + $0xc8] sm:$0xff]
    %v2319 = vld [vmem:[#allocation10 + $0xd0] sm:$0xff]
    %v2320 = vld [vmem:[#allocation10 + $0xd8] sm:$0xff]
    %v2321 = vld [vmem:[#allocation10 + $0xe0] sm:$0xff]
    %v2322 = vld [vmem:[#allocation10 + $0xe8] sm:$0xff]
    %v2323 = vld [vmem:[#allocation10 + $0xf0] sm:$0xff]
    %v2324 = vld [vmem:[#allocation10 + $0xf8] sm:$0xff]
    %v2325 = vld [vmem:[#allocation10 + $0x100] sm:$0xff]
    %v2326 = vld [vmem:[#allocation10 + $0x108] sm:$0xff]
    %v2327 = vld [vmem:[#allocation10 + $0x110] sm:$0xff]
    %v2328 = vld [vmem:[#allocation10 + $0x118] sm:$0xff]
    %v2329 = vld [vmem:[#allocation10 + $0x120] sm:$0xff]
    %v2330 = vld [vmem:[#allocation10 + $0x128] sm:$0xff]
    %v2331 = vld [vmem:[#allocation10 + $0x130] sm:$0xff]
    %v2332 = vld [vmem:[#allocation10 + $0x138] sm:$0xff]
    %v2333 = vld [vmem:[#allocation10 + $0x140] sm:$0xff]
    %v2334 = vld [vmem:[#allocation10 + $0x148] sm:$0xff]
    %v2335 = vld [vmem:[#allocation10 + $0x150] sm:$0xff]
    %v2336 = vld [vmem:[#allocation10 + $0x158] sm:$0xff]
    %v2337 = vld [vmem:[#allocation10 + $0x160] sm:$0xff]
    %v2338 = vld [vmem:[#allocation10 + $0x168] sm:$0xff]
    %v2339 = vld [vmem:[#allocation10 + $0x170] sm:$0xff]
    %v2340 = vld [vmem:[#allocation10 + $0x178] sm:$0xff]
    %v2341 = vld [vmem:[#allocation10 + $0x180] sm:$0xff]
    %v2342 = vld [vmem:[#allocation10 + $0x188] sm:$0xff]
    %v2343 = vld [vmem:[#allocation10 + $0x190] sm:$0xff]
    %v2344 = vld [vmem:[#allocation10 + $0x198] sm:$0xff]
    %v2345 = vld [vmem:[#allocation10 + $0x1a0] sm:$0xff]
    %v2346 = vld [vmem:[#allocation10 + $0x1a8] sm:$0xff]
    %v2347 = vld [vmem:[#allocation10 + $0x1b0] sm:$0xff]
    %v2348 = vld [vmem:[#allocation10 + $0x1b8] sm:$0xff]
    %v2349 = vld [vmem:[#allocation10 + $0x1c0] sm:$0xff]
    %v2350 = vld [vmem:[#allocation10 + $0x1c8] sm:$0xff]
    %v2351 = vld [vmem:[#allocation10 + $0x1d0] sm:$0xff]
    %v2352 = vld [vmem:[#allocation10 + $0x1d8] sm:$0xff]
    %v2353 = vld [vmem:[#allocation10 + $0x1e0] sm:$0xff]
    %v2354 = vld [vmem:[#allocation10 + $0x1e8] sm:$0xff]
    %v2355 = vld [vmem:[#allocation10 + $0x1f0] sm:$0xff]
    %v2356 = vld [vmem:[#allocation10 + $0x1f8] sm:$0xff]
    %v2357 = vld [vmem:[%s11] sm:$0x3]
    %v2359 = vlaneseq
    %v2360 = vshrl.u32 %v2359, 7
    %v2361 = vsub.s32 0, %v2360
    %v2362 = vrot.slane %v2357, %v2361
    %v2363 = vlaneseq
    %v2364 = vshrl.u32 %v2363, 7
    %v2365 = vsub.s32 1, %v2364
    %v2366 = vrot.slane %v2357, %v2365
    %v2433 = vunpack.c.l.b16 %v2293
    %v2434 = vunpack.c.h.b16 %v2293
    %v2435 = vunpack.c.l.b16 %v2294
    %v2436 = vunpack.c.h.b16 %v2294
    %v2437 = vunpack.c.l.b16 %v2295
    %v2438 = vunpack.c.h.b16 %v2295
    %v2439 = vunpack.c.l.b16 %v2296
    %v2440 = vunpack.c.h.b16 %v2296
    %v2441 = vunpack.c.l.b16 %v2297
    %v2442 = vunpack.c.h.b16 %v2297
    %v2443 = vunpack.c.l.b16 %v2298
    %v2444 = vunpack.c.h.b16 %v2298
    %v2445 = vunpack.c.l.b16 %v2299
    %v2446 = vunpack.c.h.b16 %v2299
    %v2447 = vunpack.c.l.b16 %v2300
    %v2448 = vunpack.c.h.b16 %v2300
    %v2449 = vunpack.c.l.b16 %v2301
    %v2450 = vunpack.c.h.b16 %v2301
    %v2451 = vunpack.c.l.b16 %v2302
    %v2452 = vunpack.c.h.b16 %v2302
    %v2453 = vunpack.c.l.b16 %v2303
    %v2454 = vunpack.c.h.b16 %v2303
    %v2455 = vunpack.c.l.b16 %v2304
    %v2456 = vunpack.c.h.b16 %v2304
    %v2457 = vunpack.c.l.b16 %v2305
    %v2458 = vunpack.c.h.b16 %v2305
    %v2459 = vunpack.c.l.b16 %v2306
    %v2460 = vunpack.c.h.b16 %v2306
    %v2461 = vunpack.c.l.b16 %v2307
    %v2462 = vunpack.c.h.b16 %v2307
    %v2463 = vunpack.c.l.b16 %v2308
    %v2464 = vunpack.c.h.b16 %v2308
    %v2465 = vunpack.c.l.b16 %v2309
    %v2466 = vunpack.c.h.b16 %v2309
    %v2467 = vunpack.c.l.b16 %v2310
    %v2468 = vunpack.c.h.b16 %v2310
    %v2469 = vunpack.c.l.b16 %v2311
    %v2470 = vunpack.c.h.b16 %v2311
    %v2471 = vunpack.c.l.b16 %v2312
    %v2472 = vunpack.c.h.b16 %v2312
    %v2473 = vunpack.c.l.b16 %v2313
    %v2474 = vunpack.c.h.b16 %v2313
    %v2475 = vunpack.c.l.b16 %v2314
    %v2476 = vunpack.c.h.b16 %v2314
    %v2477 = vunpack.c.l.b16 %v2315
    %v2478 = vunpack.c.h.b16 %v2315
    %v2479 = vunpack.c.l.b16 %v2316
    %v2480 = vunpack.c.h.b16 %v2316
    %v2481 = vunpack.c.l.b16 %v2317
    %v2482 = vunpack.c.h.b16 %v2317
    %v2483 = vunpack.c.l.b16 %v2318
    %v2484 = vunpack.c.h.b16 %v2318
    %v2485 = vunpack.c.l.b16 %v2319
    %v2486 = vunpack.c.h.b16 %v2319
    %v2487 = vunpack.c.l.b16 %v2320
    %v2488 = vunpack.c.h.b16 %v2320
    %v2489 = vunpack.c.l.b16 %v2321
    %v2490 = vunpack.c.h.b16 %v2321
    %v2491 = vunpack.c.l.b16 %v2322
    %v2492 = vunpack.c.h.b16 %v2322
    %v2493 = vunpack.c.l.b16 %v2323
    %v2494 = vunpack.c.h.b16 %v2323
    %v2495 = vunpack.c.l.b16 %v2324
    %v2496 = vunpack.c.h.b16 %v2324
    %v2497 = vunpack.c.l.b16 %v2325
    %v2498 = vunpack.c.h.b16 %v2325
    %v2499 = vunpack.c.l.b16 %v2326
    %v2500 = vunpack.c.h.b16 %v2326
    %v2501 = vunpack.c.l.b16 %v2327
    %v2502 = vunpack.c.h.b16 %v2327
    %v2503 = vunpack.c.l.b16 %v2328
    %v2504 = vunpack.c.h.b16 %v2328
    %v2505 = vunpack.c.l.b16 %v2329
    %v2506 = vunpack.c.h.b16 %v2329
    %v2507 = vunpack.c.l.b16 %v2330
    %v2508 = vunpack.c.h.b16 %v2330
    %v2509 = vunpack.c.l.b16 %v2331
    %v2510 = vunpack.c.h.b16 %v2331
    %v2511 = vunpack.c.l.b16 %v2332
    %v2512 = vunpack.c.h.b16 %v2332
    %v2513 = vunpack.c.l.b16 %v2333
    %v2514 = vunpack.c.h.b16 %v2333
    %v2515 = vunpack.c.l.b16 %v2334
    %v2516 = vunpack.c.h.b16 %v2334
    %v2517 = vunpack.c.l.b16 %v2335
    %v2518 = vunpack.c.h.b16 %v2335
    %v2519 = vunpack.c.l.b16 %v2336
    %v2520 = vunpack.c.h.b16 %v2336
    %v2521 = vunpack.c.l.b16 %v2337
    %v2522 = vunpack.c.h.b16 %v2337
    %v2523 = vunpack.c.l.b16 %v2338
    %v2524 = vunpack.c.h.b16 %v2338
    %v2525 = vunpack.c.l.b16 %v2339
    %v2526 = vunpack.c.h.b16 %v2339
    %v2527 = vunpack.c.l.b16 %v2340
    %v2528 = vunpack.c.h.b16 %v2340
    %v2529 = vunpack.c.l.b16 %v2341
    %v2530 = vunpack.c.h.b16 %v2341
    %v2531 = vunpack.c.l.b16 %v2342
    %v2532 = vunpack.c.h.b16 %v2342
    %v2533 = vunpack.c.l.b16 %v2343
    %v2534 = vunpack.c.h.b16 %v2343
    %v2535 = vunpack.c.l.b16 %v2344
    %v2536 = vunpack.c.h.b16 %v2344
    %v2537 = vunpack.c.l.b16 %v2345
    %v2538 = vunpack.c.h.b16 %v2345
    %v2539 = vunpack.c.l.b16 %v2346
    %v2540 = vunpack.c.h.b16 %v2346
    %v2541 = vunpack.c.l.b16 %v2347
    %v2542 = vunpack.c.h.b16 %v2347
    %v2543 = vunpack.c.l.b16 %v2348
    %v2544 = vunpack.c.h.b16 %v2348
    %v2545 = vunpack.c.l.b16 %v2349
    %v2546 = vunpack.c.h.b16 %v2349
    %v2547 = vunpack.c.l.b16 %v2350
    %v2548 = vunpack.c.h.b16 %v2350
    %v2549 = vunpack.c.l.b16 %v2351
    %v2550 = vunpack.c.h.b16 %v2351
    %v2551 = vunpack.c.l.b16 %v2352
    %v2552 = vunpack.c.h.b16 %v2352
    %v2553 = vunpack.c.l.b16 %v2353
    %v2554 = vunpack.c.h.b16 %v2353
    %v2555 = vunpack.c.l.b16 %v2354
    %v2556 = vunpack.c.h.b16 %v2354
    %v2557 = vunpack.c.l.b16 %v2355
    %v2558 = vunpack.c.h.b16 %v2355
    %v2559 = vunpack.c.l.b16 %v2356
    %v2560 = vunpack.c.h.b16 %v2356
    %v2561 = vpack.c.b16 %v2435, %v2433
    %v2562 = vpack.c.b16 %v2436, %v2434
    %v2563 = vpack.c.b16 %v2439, %v2437
    %v2564 = vpack.c.b16 %v2440, %v2438
    %v2565 = vpack.c.b16 %v2443, %v2441
    %v2566 = vpack.c.b16 %v2444, %v2442
    %v2567 = vpack.c.b16 %v2447, %v2445
    %v2568 = vpack.c.b16 %v2448, %v2446
    %v2569 = vpack.c.b16 %v2451, %v2449
    %v2570 = vpack.c.b16 %v2452, %v2450
    %v2571 = vpack.c.b16 %v2455, %v2453
    %v2572 = vpack.c.b16 %v2456, %v2454
    %v2573 = vpack.c.b16 %v2459, %v2457
    %v2574 = vpack.c.b16 %v2460, %v2458
    %v2575 = vpack.c.b16 %v2463, %v2461
    %v2576 = vpack.c.b16 %v2464, %v2462
    %v2577 = vpack.c.b16 %v2467, %v2465
    %v2578 = vpack.c.b16 %v2468, %v2466
    %v2579 = vpack.c.b16 %v2471, %v2469
    %v2580 = vpack.c.b16 %v2472, %v2470
    %v2581 = vpack.c.b16 %v2475, %v2473
    %v2582 = vpack.c.b16 %v2476, %v2474
    %v2583 = vpack.c.b16 %v2479, %v2477
    %v2584 = vpack.c.b16 %v2480, %v2478
    %v2585 = vpack.c.b16 %v2483, %v2481
    %v2586 = vpack.c.b16 %v2484, %v2482
    %v2587 = vpack.c.b16 %v2487, %v2485
    %v2588 = vpack.c.b16 %v2488, %v2486
    %v2589 = vpack.c.b16 %v2491, %v2489
    %v2590 = vpack.c.b16 %v2492, %v2490
    %v2591 = vpack.c.b16 %v2495, %v2493
    %v2592 = vpack.c.b16 %v2496, %v2494
    %v2593 = vpack.c.b16 %v2499, %v2497
    %v2594 = vpack.c.b16 %v2500, %v2498
    %v2595 = vpack.c.b16 %v2503, %v2501
    %v2596 = vpack.c.b16 %v2504, %v2502
    %v2597 = vpack.c.b16 %v2507, %v2505
    %v2598 = vpack.c.b16 %v2508, %v2506
    %v2599 = vpack.c.b16 %v2511, %v2509
    %v2600 = vpack.c.b16 %v2512, %v2510
    %v2601 = vpack.c.b16 %v2515, %v2513
    %v2602 = vpack.c.b16 %v2516, %v2514
    %v2603 = vpack.c.b16 %v2519, %v2517
    %v2604 = vpack.c.b16 %v2520, %v2518
    %v2605 = vpack.c.b16 %v2523, %v2521
    %v2606 = vpack.c.b16 %v2524, %v2522
    %v2607 = vpack.c.b16 %v2527, %v2525
    %v2608 = vpack.c.b16 %v2528, %v2526
    %v2609 = vpack.c.b16 %v2531, %v2529
    %v2610 = vpack.c.b16 %v2532, %v2530
    %v2611 = vpack.c.b16 %v2535, %v2533
    %v2612 = vpack.c.b16 %v2536, %v2534
    %v2613 = vpack.c.b16 %v2539, %v2537
    %v2614 = vpack.c.b16 %v2540, %v2538
    %v2615 = vpack.c.b16 %v2543, %v2541
    %v2616 = vpack.c.b16 %v2544, %v2542
    %v2617 = vpack.c.b16 %v2547, %v2545
    %v2618 = vpack.c.b16 %v2548, %v2546
    %v2619 = vpack.c.b16 %v2551, %v2549
    %v2620 = vpack.c.b16 %v2552, %v2550
    %v2621 = vpack.c.b16 %v2555, %v2553
    %v2622 = vpack.c.b16 %v2556, %v2554
    %v2623 = vpack.c.b16 %v2559, %v2557
    %v2624 = vpack.c.b16 %v2560, %v2558
    %2689 = vmatprep.subr.bf16.mxu0 %v2576
    %2690 = vmatpush1.bf16.msra.mxu0 %v2575
    %2691 = vmatprep.subr.bf16.mxu0 %v2574
    %2692 = vmatpush1.bf16.msra.mxu0 %v2573
    %2693 = vmatprep.subr.bf16.mxu0 %v2572
    %2694 = vmatpush1.bf16.msra.mxu0 %v2571
    %2695 = vmatprep.subr.bf16.mxu0 %v2570
    %2696 = vmatpush1.bf16.msra.mxu0 %v2569
    %2697 = vmatprep.subr.bf16.mxu0 %v2568
    %2698 = vmatpush1.bf16.msra.mxu0 %v2567
    %2699 = vmatprep.subr.bf16.mxu0 %v2566
    %2700 = vmatpush1.bf16.msra.mxu0 %v2565
    %2701 = vmatprep.subr.bf16.mxu0 %v2564
    %2702 = vmatpush1.bf16.msra.mxu0 %v2563
    %2703 = vmatprep.subr.bf16.mxu0 %v2562
    %2704 = vmatpush1.bf16.msra.mxu0 %v2561
    %2705 = vmatprep.subr.bf16.mxu0 %v2592
    %2706 = vmatpush2.bf16.msra.mxu0 %v2591
    %2707 = vmatprep.subr.bf16.mxu0 %v2590
    %2708 = vmatpush2.bf16.msra.mxu0 %v2589
    %2709 = vmatprep.subr.bf16.mxu0 %v2588
    %2710 = vmatpush2.bf16.msra.mxu0 %v2587
    %2711 = vmatprep.subr.bf16.mxu0 %v2586
    %2712 = vmatpush2.bf16.msra.mxu0 %v2585
    %2713 = vmatprep.subr.bf16.mxu0 %v2584
    %2714 = vmatpush2.bf16.msra.mxu0 %v2583
    %2715 = vmatprep.subr.bf16.mxu0 %v2582
    %2716 = vmatpush2.bf16.msra.mxu0 %v2581
    %2717 = vmatprep.subr.bf16.mxu0 %v2580
    %2718 = vmatpush2.bf16.msra.mxu0 %v2579
    %2719 = vmatprep.subr.bf16.mxu0 %v2578
    %2720 = vmatpush2.bf16.msra.mxu0 %v2577
    %2721 = vmatprep.mubr.bf16.mxu0 %v1120
    %2722 = vmatmul.mubr.bf16.gmra.mxu0 %v1119
    %v2723 = vpop.f32.mrf.mxu0
    %v2724 = vadd.f32 %v2362, %v2723
    %v2725 = vpop.f32.mrf.mxu0
    %v2726 = vadd.f32 %v2366, %v2725
    %v2727 = vpop.f32.mrf.mxu0
    %v2728 = vadd.f32 %v2362, %v2727
    %v2729 = vpop.f32.mrf.mxu0
    %v2730 = vadd.f32 %v2366, %v2729
    %2731 = vdwg.mxu0
    %2732 = vmatprep.subr.bf16.mxu0 %v2608
    %2733 = vmatpush1.bf16.msra.mxu0 %v2607
    %2734 = vmatprep.subr.bf16.mxu0 %v2606
    %2735 = vmatpush1.bf16.msra.mxu0 %v2605
    %2736 = vmatprep.subr.bf16.mxu0 %v2604
    %2737 = vmatpush1.bf16.msra.mxu0 %v2603
    %2738 = vmatprep.subr.bf16.mxu0 %v2602
    %2739 = vmatpush1.bf16.msra.mxu0 %v2601
    %2740 = vmatprep.subr.bf16.mxu0 %v2600
    %2741 = vmatpush1.bf16.msra.mxu0 %v2599
    %2742 = vmatprep.subr.bf16.mxu0 %v2598
    %2743 = vmatpush1.bf16.msra.mxu0 %v2597
    %2744 = vmatprep.subr.bf16.mxu0 %v2596
    %2745 = vmatpush1.bf16.msra.mxu0 %v2595
    %2746 = vmatprep.subr.bf16.mxu0 %v2594
    %2747 = vmatpush1.bf16.msra.mxu0 %v2593
    %2748 = vmatprep.subr.bf16.mxu0 %v2624
    %2749 = vmatpush2.bf16.msra.mxu0 %v2623
    %2750 = vmatprep.subr.bf16.mxu0 %v2622
    %2751 = vmatpush2.bf16.msra.mxu0 %v2621
    %2752 = vmatprep.subr.bf16.mxu0 %v2620
    %2753 = vmatpush2.bf16.msra.mxu0 %v2619
    %2754 = vmatprep.subr.bf16.mxu0 %v2618
    %2755 = vmatpush2.bf16.msra.mxu0 %v2617
    %2756 = vmatprep.subr.bf16.mxu0 %v2616
    %2757 = vmatpush2.bf16.msra.mxu0 %v2615
    %2758 = vmatprep.subr.bf16.mxu0 %v2614
    %2759 = vmatpush2.bf16.msra.mxu0 %v2613
    %2760 = vmatprep.subr.bf16.mxu0 %v2612
    %2761 = vmatpush2.bf16.msra.mxu0 %v2611
    %2762 = vmatprep.subr.bf16.mxu0 %v2610
    %2763 = vmatpush2.bf16.msra.mxu0 %v2609
    %2764 = vmatprep.mubr.bf16.mxu0 %v1122
    %2765 = vmatmul.mubr.bf16.gmra.mxu0 %v1121
    %v2766 = vpop.f32.mrf.mxu0
    %v2767 = vadd.f32 %v2724, %v2766
    %v2768 = vpop.f32.mrf.mxu0
    %v2769 = vadd.f32 %v2726, %v2768
    %v2770 = vpop.f32.mrf.mxu0
    %v2771 = vadd.f32 %v2728, %v2770
    %v2772 = vpop.f32.mrf.mxu0
    %v2773 = vadd.f32 %v2730, %v2772
    %2774 = vdwg.mxu0
    %v2775 = vld [vmem:[%s2] sm:$0xff]
    %v2776 = vld [vmem:[%s2 + $0x8] sm:$0xff]
    %v2777 = vld [vmem:[#allocation2] sm:$0xff]
    %v2778 = vld [vmem:[#allocation2 + $0x8] sm:$0xff]
    %v2779 = vld [vmem:[#allocation2 + $0x80] sm:$0xff]
    %v2780 = vld [vmem:[#allocation2 + $0x88] sm:$0xff]
    %v2781 = vunpack.c.l.bf16 %v2777
    %v2782 = vunpack.c.h.bf16 %v2777
    %v2783 = vunpack.c.l.bf16 %v2778
    %v2784 = vunpack.c.h.bf16 %v2778
    %v2785 = vunpack.c.l.bf16 %v2779
    %v2786 = vunpack.c.h.bf16 %v2779
    %v2787 = vunpack.c.l.bf16 %v2780
    %v2788 = vunpack.c.h.bf16 %v2780
    %v2789 = vmul.f32 %v1095, %v2781
    %v2790 = vmul.f32 %v1096, %v2782
    %v2791 = vmul.f32 %v1097, %v2783
    %v2792 = vmul.f32 %v1098, %v2784
    %v2793 = vmul.f32 %v1107, %v2785
    %v2794 = vmul.f32 %v1108, %v2786
    %v2795 = vmul.f32 %v1109, %v2787
    %v2796 = vmul.f32 %v1110, %v2788
    %v2797 = vadd.f32 %v2789, %v2790
    %v2798 = vadd.f32 %v2797, %v2791
    %v2799 = vadd.f32 %v2798, %v2792
    %2800 = vadd.xlane.f32.xlu0 %v2799
    %v2801 = vpop.xlane.xlu0 %2800
    %v2802 = vadd.f32 %v2793, %v2794
    %v2803 = vadd.f32 %v2802, %v2795
    %v2804 = vadd.f32 %v2803, %v2796
    %2805 = vadd.xlane.f32.xlu0 %v2804
    %v2806 = vpop.xlane.xlu0 %2805
    %v2807 = vadd.f32 %v2801, %v2775
    %v2808 = vadd.f32 %v2806, %v2776
    %2810 = vset.pattern.permute.xlu0 0
    %2811 = vperm.xlu0 %2810, %v2807
    %v2812 = vpop.permute.xlu0 %2811
    %2815 = vset.pattern.permute.xlu0 0
    %2816 = vperm.xlu0 %2815, %v2808
    %v2817 = vpop.permute.xlu0 %2816
    %v2819 = vmul.f32 %v2812, %v2767
    %v2820 = vmul.f32 %v2817, %v2771
    %v2821 = vld [vmem:[#allocation2 + $0x10] sm:$0xff]
    %v2822 = vld [vmem:[#allocation2 + $0x18] sm:$0xff]
    %v2823 = vld [vmem:[#allocation2 + $0x90] sm:$0xff]
    %v2824 = vld [vmem:[#allocation2 + $0x98] sm:$0xff]
    %v2825 = vunpack.c.l.bf16 %v2821
    %v2826 = vunpack.c.h.bf16 %v2821
    %v2827 = vunpack.c.l.bf16 %v2822
    %v2828 = vunpack.c.h.bf16 %v2822
    %v2829 = vunpack.c.l.bf16 %v2823
    %v2830 = vunpack.c.h.bf16 %v2823
    %v2831 = vunpack.c.l.bf16 %v2824
    %v2832 = vunpack.c.h.bf16 %v2824
    %v2833 = vmul.f32 %v1095, %v2825
    %v2834 = vmul.f32 %v1096, %v2826
    %v2835 = vmul.f32 %v1097, %v2827
    %v2836 = vmul.f32 %v1098, %v2828
    %v2837 = vmul.f32 %v1107, %v2829
    %v2838 = vmul.f32 %v1108, %v2830
    %v2839 = vmul.f32 %v1109, %v2831
    %v2840 = vmul.f32 %v1110, %v2832
    %v2841 = vadd.f32 %v2833, %v2834
    %v2842 = vadd.f32 %v2841, %v2835
    %v2843 = vadd.f32 %v2842, %v2836
    %2844 = vadd.xlane.f32.xlu0 %v2843
    %v2845 = vpop.xlane.xlu0 %2844
    %v2846 = vadd.f32 %v2837, %v2838
    %v2847 = vadd.f32 %v2846, %v2839
    %v2848 = vadd.f32 %v2847, %v2840
    %2849 = vadd.xlane.f32.xlu0 %v2848
    %v2850 = vpop.xlane.xlu0 %2849
    %v2851 = vadd.f32 %v2845, %v2775
    %v2852 = vadd.f32 %v2850, %v2776
    %2854 = vset.pattern.permute.xlu0 1
    %2855 = vperm.xlu0 %2854, %v2851
    %v2856 = vpop.permute.xlu0 %2855
    %2859 = vset.pattern.permute.xlu0 1
    %2860 = vperm.xlu0 %2859, %v2852
    %v2861 = vpop.permute.xlu0 %2860
    %v2863 = vmul.f32 %v2856, %v2767
    %v2864 = vmul.f32 %v2861, %v2771
    %2867 = vrot.lane.b32.xlu0 %v2863, 96
    %v2868 = vpop.permute.xlu0 %2867
    %2869 = vrot.lane.b32.xlu0 %v2864, 96
    %v2870 = vpop.permute.xlu0 %2869
    %v2873 = vadd.f32 %v2819, %v2868
    %v2874 = vadd.f32 %v2820, %v2870
    %v2875 = vld [vmem:[#allocation2 + $0x20] sm:$0xff]
    %v2876 = vld [vmem:[#allocation2 + $0x28] sm:$0xff]
    %v2877 = vld [vmem:[#allocation2 + $0xa0] sm:$0xff]
    %v2878 = vld [vmem:[#allocation2 + $0xa8] sm:$0xff]
    %v2879 = vunpack.c.l.bf16 %v2875
    %v2880 = vunpack.c.h.bf16 %v2875
    %v2881 = vunpack.c.l.bf16 %v2876
    %v2882 = vunpack.c.h.bf16 %v2876
    %v2883 = vunpack.c.l.bf16 %v2877
    %v2884 = vunpack.c.h.bf16 %v2877
    %v2885 = vunpack.c.l.bf16 %v2878
    %v2886 = vunpack.c.h.bf16 %v2878
    %v2887 = vmul.f32 %v1095, %v2879
    %v2888 = vmul.f32 %v1096, %v2880
    %v2889 = vmul.f32 %v1097, %v2881
    %v2890 = vmul.f32 %v1098, %v2882
    %v2891 = vmul.f32 %v1107, %v2883
    %v2892 = vmul.f32 %v1108, %v2884
    %v2893 = vmul.f32 %v1109, %v2885
    %v2894 = vmul.f32 %v1110, %v2886
    %v2895 = vadd.f32 %v2887, %v2888
    %v2896 = vadd.f32 %v2895, %v2889
    %v2897 = vadd.f32 %v2896, %v2890
    %2898 = vadd.xlane.f32.xlu0 %v2897
    %v2899 = vpop.xlane.xlu0 %2898
    %v2900 = vadd.f32 %v2891, %v2892
    %v2901 = vadd.f32 %v2900, %v2893
    %v2902 = vadd.f32 %v2901, %v2894
    %2903 = vadd.xlane.f32.xlu0 %v2902
    %v2904 = vpop.xlane.xlu0 %2903
    %v2905 = vadd.f32 %v2899, %v2775
    %v2906 = vadd.f32 %v2904, %v2776
    %2908 = vset.pattern.permute.xlu0 2
    %2909 = vperm.xlu0 %2908, %v2905
    %v2910 = vpop.permute.xlu0 %2909
    %2913 = vset.pattern.permute.xlu0 2
    %2914 = vperm.xlu0 %2913, %v2906
    %v2915 = vpop.permute.xlu0 %2914
    %v2917 = vmul.f32 %v2910, %v2767
    %v2918 = vmul.f32 %v2915, %v2771
    %2921 = vrot.lane.b32.xlu0 %v2917, 64
    %v2922 = vpop.permute.xlu0 %2921
    %2923 = vrot.lane.b32.xlu0 %v2918, 64
    %v2924 = vpop.permute.xlu0 %2923
    %v2927 = vadd.f32 %v2873, %v2922
    %v2928 = vadd.f32 %v2874, %v2924
    %v2929 = vld [vmem:[#allocation2 + $0x30] sm:$0xff]
    %v2930 = vld [vmem:[#allocation2 + $0x38] sm:$0xff]
    %v2931 = vld [vmem:[#allocation2 + $0xb0] sm:$0xff]
    %v2932 = vld [vmem:[#allocation2 + $0xb8] sm:$0xff]
    %v2933 = vunpack.c.l.bf16 %v2929
    %v2934 = vunpack.c.h.bf16 %v2929
    %v2935 = vunpack.c.l.bf16 %v2930
    %v2936 = vunpack.c.h.bf16 %v2930
    %v2937 = vunpack.c.l.bf16 %v2931
    %v2938 = vunpack.c.h.bf16 %v2931
    %v2939 = vunpack.c.l.bf16 %v2932
    %v2940 = vunpack.c.h.bf16 %v2932
    %v2941 = vmul.f32 %v1095, %v2933
    %v2942 = vmul.f32 %v1096, %v2934
    %v2943 = vmul.f32 %v1097, %v2935
    %v2944 = vmul.f32 %v1098, %v2936
    %v2945 = vmul.f32 %v1107, %v2937
    %v2946 = vmul.f32 %v1108, %v2938
    %v2947 = vmul.f32 %v1109, %v2939
    %v2948 = vmul.f32 %v1110, %v2940
    %v2949 = vadd.f32 %v2941, %v2942
    %v2950 = vadd.f32 %v2949, %v2943
    %v2951 = vadd.f32 %v2950, %v2944
    %2952 = vadd.xlane.f32.xlu0 %v2951
    %v2953 = vpop.xlane.xlu0 %2952
    %v2954 = vadd.f32 %v2945, %v2946
    %v2955 = vadd.f32 %v2954, %v2947
    %v2956 = vadd.f32 %v2955, %v2948
    %2957 = vadd.xlane.f32.xlu0 %v2956
    %v2958 = vpop.xlane.xlu0 %2957
    %v2959 = vadd.f32 %v2953, %v2775
    %v2960 = vadd.f32 %v2958, %v2776
    %2962 = vset.pattern.permute.xlu0 3
    %2963 = vperm.xlu0 %2962, %v2959
    %v2964 = vpop.permute.xlu0 %2963
    %2967 = vset.pattern.permute.xlu0 3
    %2968 = vperm.xlu0 %2967, %v2960
    %v2969 = vpop.permute.xlu0 %2968
    %v2971 = vmul.f32 %v2964, %v2767
    %v2972 = vmul.f32 %v2969, %v2771
    %2975 = vrot.lane.b32.xlu0 %v2971, 32
    %v2976 = vpop.permute.xlu0 %2975
    %2977 = vrot.lane.b32.xlu0 %v2972, 32
    %v2978 = vpop.permute.xlu0 %2977
    %v2981 = vadd.f32 %v2927, %v2976
    %v2982 = vadd.f32 %v2928, %v2978
    %v2983 = vld [vmem:[#allocation2 + $0x40] sm:$0xff]
    %v2984 = vld [vmem:[#allocation2 + $0x48] sm:$0xff]
    %v2985 = vld [vmem:[#allocation2 + $0xc0] sm:$0xff]
    %v2986 = vld [vmem:[#allocation2 + $0xc8] sm:$0xff]
    %v2987 = vunpack.c.l.bf16 %v2983
    %v2988 = vunpack.c.h.bf16 %v2983
    %v2989 = vunpack.c.l.bf16 %v2984
    %v2990 = vunpack.c.h.bf16 %v2984
    %v2991 = vunpack.c.l.bf16 %v2985
    %v2992 = vunpack.c.h.bf16 %v2985
    %v2993 = vunpack.c.l.bf16 %v2986
    %v2994 = vunpack.c.h.bf16 %v2986
    %v2995 = vmul.f32 %v1095, %v2987
    %v2996 = vmul.f32 %v1096, %v2988
    %v2997 = vmul.f32 %v1097, %v2989
    %v2998 = vmul.f32 %v1098, %v2990
    %v2999 = vmul.f32 %v1107, %v2991
    %v3000 = vmul.f32 %v1108, %v2992
    %v3001 = vmul.f32 %v1109, %v2993
    %v3002 = vmul.f32 %v1110, %v2994
    %v3003 = vadd.f32 %v2995, %v2996
    %v3004 = vadd.f32 %v3003, %v2997
    %v3005 = vadd.f32 %v3004, %v2998
    %3006 = vadd.xlane.f32.xlu0 %v3005
    %v3007 = vpop.xlane.xlu0 %3006
    %v3008 = vadd.f32 %v2999, %v3000
    %v3009 = vadd.f32 %v3008, %v3001
    %v3010 = vadd.f32 %v3009, %v3002
    %3011 = vadd.xlane.f32.xlu0 %v3010
    %v3012 = vpop.xlane.xlu0 %3011
    %v3013 = vadd.f32 %v3007, %v2775
    %v3014 = vadd.f32 %v3012, %v2776
    %3016 = vset.pattern.permute.xlu0 4
    %3017 = vperm.xlu0 %3016, %v3013
    %v3018 = vpop.permute.xlu0 %3017
    %3021 = vset.pattern.permute.xlu0 4
    %3022 = vperm.xlu0 %3021, %v3014
    %v3023 = vpop.permute.xlu0 %3022
    %v3025 = vmul.f32 %v3018, %v2769
    %v3026 = vmul.f32 %v3023, %v2773
    %v3027 = vadd.f32 %v2981, %v3025
    %v3028 = vadd.f32 %v2982, %v3026
    %v3029 = vld [vmem:[#allocation2 + $0x50] sm:$0xff]
    %v3030 = vld [vmem:[#allocation2 + $0x58] sm:$0xff]
    %v3031 = vld [vmem:[#allocation2 + $0xd0] sm:$0xff]
    %v3032 = vld [vmem:[#allocation2 + $0xd8] sm:$0xff]
    %v3033 = vunpack.c.l.bf16 %v3029
    %v3034 = vunpack.c.h.bf16 %v3029
    %v3035 = vunpack.c.l.bf16 %v3030
    %v3036 = vunpack.c.h.bf16 %v3030
    %v3037 = vunpack.c.l.bf16 %v3031
    %v3038 = vunpack.c.h.bf16 %v3031
    %v3039 = vunpack.c.l.bf16 %v3032
    %v3040 = vunpack.c.h.bf16 %v3032
    %v3041 = vmul.f32 %v1095, %v3033
    %v3042 = vmul.f32 %v1096, %v3034
    %v3043 = vmul.f32 %v1097, %v3035
    %v3044 = vmul.f32 %v1098, %v3036
    %v3045 = vmul.f32 %v1107, %v3037
    %v3046 = vmul.f32 %v1108, %v3038
    %v3047 = vmul.f32 %v1109, %v3039
    %v3048 = vmul.f32 %v1110, %v3040
    %v3049 = vadd.f32 %v3041, %v3042
    %v3050 = vadd.f32 %v3049, %v3043
    %v3051 = vadd.f32 %v3050, %v3044
    %3052 = vadd.xlane.f32.xlu0 %v3051
    %v3053 = vpop.xlane.xlu0 %3052
    %v3054 = vadd.f32 %v3045, %v3046
    %v3055 = vadd.f32 %v3054, %v3047
    %v3056 = vadd.f32 %v3055, %v3048
    %3057 = vadd.xlane.f32.xlu0 %v3056
    %v3058 = vpop.xlane.xlu0 %3057
    %v3059 = vadd.f32 %v3053, %v2775
    %v3060 = vadd.f32 %v3058, %v2776
    %3062 = vset.pattern.permute.xlu0 5
    %3063 = vperm.xlu0 %3062, %v3059
    %v3064 = vpop.permute.xlu0 %3063
    %3067 = vset.pattern.permute.xlu0 5
    %3068 = vperm.xlu0 %3067, %v3060
    %v3069 = vpop.permute.xlu0 %3068
    %v3071 = vmul.f32 %v3064, %v2769
    %v3072 = vmul.f32 %v3069, %v2773
    %3075 = vrot.lane.b32.xlu0 %v3071, 96
    %v3076 = vpop.permute.xlu0 %3075
    %3077 = vrot.lane.b32.xlu0 %v3072, 96
    %v3078 = vpop.permute.xlu0 %3077
    %v3081 = vadd.f32 %v3027, %v3076
    %v3082 = vadd.f32 %v3028, %v3078
    %v3083 = vld [vmem:[#allocation2 + $0x60] sm:$0xff]
    %v3084 = vld [vmem:[#allocation2 + $0x68] sm:$0xff]
    %v3085 = vld [vmem:[#allocation2 + $0xe0] sm:$0xff]
    %v3086 = vld [vmem:[#allocation2 + $0xe8] sm:$0xff]
    %v3087 = vunpack.c.l.bf16 %v3083
    %v3088 = vunpack.c.h.bf16 %v3083
    %v3089 = vunpack.c.l.bf16 %v3084
    %v3090 = vunpack.c.h.bf16 %v3084
    %v3091 = vunpack.c.l.bf16 %v3085
    %v3092 = vunpack.c.h.bf16 %v3085
    %v3093 = vunpack.c.l.bf16 %v3086
    %v3094 = vunpack.c.h.bf16 %v3086
    %v3095 = vmul.f32 %v1095, %v3087
    %v3096 = vmul.f32 %v1096, %v3088
    %v3097 = vmul.f32 %v1097, %v3089
    %v3098 = vmul.f32 %v1098, %v3090
    %v3099 = vmul.f32 %v1107, %v3091
    %v3100 = vmul.f32 %v1108, %v3092
    %v3101 = vmul.f32 %v1109, %v3093
    %v3102 = vmul.f32 %v1110, %v3094
    %v3103 = vadd.f32 %v3095, %v3096
    %v3104 = vadd.f32 %v3103, %v3097
    %v3105 = vadd.f32 %v3104, %v3098
    %3106 = vadd.xlane.f32.xlu0 %v3105
    %v3107 = vpop.xlane.xlu0 %3106
    %v3108 = vadd.f32 %v3099, %v3100
    %v3109 = vadd.f32 %v3108, %v3101
    %v3110 = vadd.f32 %v3109, %v3102
    %3111 = vadd.xlane.f32.xlu0 %v3110
    %v3112 = vpop.xlane.xlu0 %3111
    %v3113 = vadd.f32 %v3107, %v2775
    %v3114 = vadd.f32 %v3112, %v2776
    %3116 = vset.pattern.permute.xlu0 6
    %3117 = vperm.xlu0 %3116, %v3113
    %v3118 = vpop.permute.xlu0 %3117
    %3121 = vset.pattern.permute.xlu0 6
    %3122 = vperm.xlu0 %3121, %v3114
    %v3123 = vpop.permute.xlu0 %3122
    %v3125 = vmul.f32 %v3118, %v2769
    %v3126 = vmul.f32 %v3123, %v2773
    %3129 = vrot.lane.b32.xlu0 %v3125, 64
    %v3130 = vpop.permute.xlu0 %3129
    %3131 = vrot.lane.b32.xlu0 %v3126, 64
    %v3132 = vpop.permute.xlu0 %3131
    %v3135 = vadd.f32 %v3081, %v3130
    %v3136 = vadd.f32 %v3082, %v3132
    %v3137 = vld [vmem:[#allocation2 + $0x70] sm:$0xff]
    %v3138 = vld [vmem:[#allocation2 + $0x78] sm:$0xff]
    %v3139 = vld [vmem:[#allocation2 + $0xf0] sm:$0xff]
    %v3140 = vld [vmem:[#allocation2 + $0xf8] sm:$0xff]
    %v3141 = vunpack.c.l.bf16 %v3137
    %v3142 = vunpack.c.h.bf16 %v3137
    %v3143 = vunpack.c.l.bf16 %v3138
    %v3144 = vunpack.c.h.bf16 %v3138
    %v3145 = vunpack.c.l.bf16 %v3139
    %v3146 = vunpack.c.h.bf16 %v3139
    %v3147 = vunpack.c.l.bf16 %v3140
    %v3148 = vunpack.c.h.bf16 %v3140
    %v3149 = vmul.f32 %v1095, %v3141
    %v3150 = vmul.f32 %v1096, %v3142
    %v3151 = vmul.f32 %v1097, %v3143
    %v3152 = vmul.f32 %v1098, %v3144
    %v3153 = vmul.f32 %v1107, %v3145
    %v3154 = vmul.f32 %v1108, %v3146
    %v3155 = vmul.f32 %v1109, %v3147
    %v3156 = vmul.f32 %v1110, %v3148
    %v3157 = vadd.f32 %v3149, %v3150
    %v3158 = vadd.f32 %v3157, %v3151
    %v3159 = vadd.f32 %v3158, %v3152
    %3160 = vadd.xlane.f32.xlu0 %v3159
    %v3161 = vpop.xlane.xlu0 %3160
    %v3162 = vadd.f32 %v3153, %v3154
    %v3163 = vadd.f32 %v3162, %v3155
    %v3164 = vadd.f32 %v3163, %v3156
    %3165 = vadd.xlane.f32.xlu0 %v3164
    %v3166 = vpop.xlane.xlu0 %3165
    %v3167 = vadd.f32 %v3161, %v2775
    %v3168 = vadd.f32 %v3166, %v2776
    %3170 = vset.pattern.permute.xlu0 7
    %3171 = vperm.xlu0 %3170, %v3167
    %v3172 = vpop.permute.xlu0 %3171
    %3175 = vset.pattern.permute.xlu0 7
    %3176 = vperm.xlu0 %3175, %v3168
    %v3177 = vpop.permute.xlu0 %3176
    %v3179 = vmul.f32 %v3172, %v2769
    %v3180 = vmul.f32 %v3177, %v2773
    %3183 = vrot.lane.b32.xlu0 %v3179, 32
    %v3184 = vpop.permute.xlu0 %3183
    %3185 = vrot.lane.b32.xlu0 %v3180, 32
    %v3186 = vpop.permute.xlu0 %3185
    %v3189 = vadd.f32 %v3135, %v3184
    %v3190 = vadd.f32 %v3136, %v3186
    %v3191 = vmul.f32 %v3189, %v1858
    %v3192 = vmul.f32 %v3190, %v1862
    %v3193 = vsel %vm143, %v3191, 0.0
    %3194 = vadd.xlane.f32.xlu0 %v3193
    %v3195 = vpop.xlane.xlu0 %3194
    %v3196 = vsel %vm143, %v3192, 0.0
    %3197 = vadd.xlane.f32.xlu0 %v3196
    %v3198 = vpop.xlane.xlu0 %3197
    %v3199 = vadd.f32 %v3195, %v1942
    %v3200 = vadd.f32 %v3198, %v1945
    %v3201 = vmax.f32 %v3199, 0.0
    %v3202 = vmax.f32 %v3200, 0.0
    %v3203 = vmul.f32 %v3201, %v2287
    %v3204 = vmul.f32 %v3202, %v2290
    %3207 = vrot.lane.b32.xlu0 %v3203, 8
    %v3208 = vpop.permute.xlu0 %3207
    %3209 = vrot.lane.b32.xlu0 %v3204, 8
    %v3210 = vpop.permute.xlu0 %3209
    %v3213 = vadd.f32 %v2287, %v3208
    %v3214 = vadd.f32 %v2290, %v3210
    %3217 = vrot.lane.b32.xlu0 %v1858, 96
    %v3218 = vpop.permute.xlu0 %3217
    %3219 = vrot.lane.b32.xlu0 %v1862, 96
    %v3220 = vpop.permute.xlu0 %3219
    %v3223 = vmul.f32 %v3189, %v3218
    %v3224 = vmul.f32 %v3190, %v3220
    %v3225 = vsel %vm143, %v3223, 0.0
    %3226 = vadd.xlane.f32.xlu0 %v3225
    %v3227 = vpop.xlane.xlu0 %3226
    %v3228 = vsel %vm143, %v3224, 0.0
    %3229 = vadd.xlane.f32.xlu0 %v3228
    %v3230 = vpop.xlane.xlu0 %3229
    %v3231 = vadd.f32 %v3227, %v1942
    %v3232 = vadd.f32 %v3230, %v1945
    %v3233 = vmax.f32 %v3231, 0.0
    %v3234 = vmax.f32 %v3232, 0.0
    %v3235 = vmul.f32 %v3233, %v2287
    %v3236 = vmul.f32 %v3234, %v2290
    %3239 = vrot.lane.b32.xlu0 %v3235, 7
    %v3240 = vpop.permute.xlu0 %3239
    %3241 = vrot.lane.b32.xlu0 %v3236, 7
    %v3242 = vpop.permute.xlu0 %3241
    %v3245 = vadd.f32 %v3213, %v3240
    %v3246 = vadd.f32 %v3214, %v3242
    %3247 = vrot.lane.b32.xlu0 %v1858, 64
    %v3248 = vpop.permute.xlu0 %3247
    %3249 = vrot.lane.b32.xlu0 %v1862, 64
    %v3250 = vpop.permute.xlu0 %3249
    %v3253 = vmul.f32 %v3189, %v3248
    %v3254 = vmul.f32 %v3190, %v3250
    %v3255 = vsel %vm143, %v3253, 0.0
    %3256 = vadd.xlane.f32.xlu0 %v3255
    %v3257 = vpop.xlane.xlu0 %3256
    %v3258 = vsel %vm143, %v3254, 0.0
    %3259 = vadd.xlane.f32.xlu0 %v3258
    %v3260 = vpop.xlane.xlu0 %3259
    %v3261 = vadd.f32 %v3257, %v1942
    %v3262 = vadd.f32 %v3260, %v1945
    %v3263 = vmax.f32 %v3261, 0.0
    %v3264 = vmax.f32 %v3262, 0.0
    %v3265 = vmul.f32 %v3263, %v2287
    %v3266 = vmul.f32 %v3264, %v2290
    %3269 = vrot.lane.b32.xlu0 %v3265, 6
    %v3270 = vpop.permute.xlu0 %3269
    %3271 = vrot.lane.b32.xlu0 %v3266, 6
    %v3272 = vpop.permute.xlu0 %3271
    %v3275 = vadd.f32 %v3245, %v3270
    %v3276 = vadd.f32 %v3246, %v3272
    %3277 = vrot.lane.b32.xlu0 %v1858, 32
    %v3278 = vpop.permute.xlu0 %3277
    %3279 = vrot.lane.b32.xlu0 %v1862, 32
    %v3280 = vpop.permute.xlu0 %3279
    %v3283 = vmul.f32 %v3189, %v3278
    %v3284 = vmul.f32 %v3190, %v3280
    %v3285 = vsel %vm143, %v3283, 0.0
    %3286 = vadd.xlane.f32.xlu0 %v3285
    %v3287 = vpop.xlane.xlu0 %3286
    %v3288 = vsel %vm143, %v3284, 0.0
    %3289 = vadd.xlane.f32.xlu0 %v3288
    %v3290 = vpop.xlane.xlu0 %3289
    %v3291 = vadd.f32 %v3287, %v1942
    %v3292 = vadd.f32 %v3290, %v1945
    %v3293 = vmax.f32 %v3291, 0.0
    %v3294 = vmax.f32 %v3292, 0.0
    %v3295 = vmul.f32 %v3293, %v2287
    %v3296 = vmul.f32 %v3294, %v2290
    %3299 = vrot.lane.b32.xlu0 %v3295, 5
    %v3300 = vpop.permute.xlu0 %3299
    %3301 = vrot.lane.b32.xlu0 %v3296, 5
    %v3302 = vpop.permute.xlu0 %3301
    %v3305 = vadd.f32 %v3275, %v3300
    %v3306 = vadd.f32 %v3276, %v3302
    %v3307 = vmul.f32 %v3189, %v1860
    %v3308 = vmul.f32 %v3190, %v1864
    %v3309 = vsel %vm143, %v3307, 0.0
    %3310 = vadd.xlane.f32.xlu0 %v3309
    %v3311 = vpop.xlane.xlu0 %3310
    %v3312 = vsel %vm143, %v3308, 0.0
    %3313 = vadd.xlane.f32.xlu0 %v3312
    %v3314 = vpop.xlane.xlu0 %3313
    %v3315 = vadd.f32 %v3311, %v1942
    %v3316 = vadd.f32 %v3314, %v1945
    %v3317 = vmax.f32 %v3315, 0.0
    %v3318 = vmax.f32 %v3316, 0.0
    %v3319 = vmul.f32 %v3317, %v2287
    %v3320 = vmul.f32 %v3318, %v2290
    %3323 = vrot.lane.b32.xlu0 %v3319, 4
    %v3324 = vpop.permute.xlu0 %3323
    %3325 = vrot.lane.b32.xlu0 %v3320, 4
    %v3326 = vpop.permute.xlu0 %3325
    %v3329 = vadd.f32 %v3305, %v3324
    %v3330 = vadd.f32 %v3306, %v3326
    %3333 = vrot.lane.b32.xlu0 %v1860, 96
    %v3334 = vpop.permute.xlu0 %3333
    %3335 = vrot.lane.b32.xlu0 %v1864, 96
    %v3336 = vpop.permute.xlu0 %3335
    %v3339 = vmul.f32 %v3189, %v3334
    %v3340 = vmul.f32 %v3190, %v3336
    %v3341 = vsel %vm143, %v3339, 0.0
    %3342 = vadd.xlane.f32.xlu0 %v3341
    %v3343 = vpop.xlane.xlu0 %3342
    %v3344 = vsel %vm143, %v3340, 0.0
    %3345 = vadd.xlane.f32.xlu0 %v3344
    %v3346 = vpop.xlane.xlu0 %3345
    %v3347 = vadd.f32 %v3343, %v1942
    %v3348 = vadd.f32 %v3346, %v1945
    %v3349 = vmax.f32 %v3347, 0.0
    %v3350 = vmax.f32 %v3348, 0.0
    %v3351 = vmul.f32 %v3349, %v2287
    %v3352 = vmul.f32 %v3350, %v2290
    %3355 = vrot.lane.b32.xlu0 %v3351, 3
    %v3356 = vpop.permute.xlu0 %3355
    %3357 = vrot.lane.b32.xlu0 %v3352, 3
    %v3358 = vpop.permute.xlu0 %3357
    %v3361 = vadd.f32 %v3329, %v3356
    %v3362 = vadd.f32 %v3330, %v3358
    %3363 = vrot.lane.b32.xlu0 %v1860, 64
    %v3364 = vpop.permute.xlu0 %3363
    %3365 = vrot.lane.b32.xlu0 %v1864, 64
    %v3366 = vpop.permute.xlu0 %3365
    %v3369 = vmul.f32 %v3189, %v3364
    %v3370 = vmul.f32 %v3190, %v3366
    %v3371 = vsel %vm143, %v3369, 0.0
    %3372 = vadd.xlane.f32.xlu0 %v3371
    %v3373 = vpop.xlane.xlu0 %3372
    %v3374 = vsel %vm143, %v3370, 0.0
    %3375 = vadd.xlane.f32.xlu0 %v3374
    %v3376 = vpop.xlane.xlu0 %3375
    %v3377 = vadd.f32 %v3373, %v1942
    %v3378 = vadd.f32 %v3376, %v1945
    %v3379 = vmax.f32 %v3377, 0.0
    %v3380 = vmax.f32 %v3378, 0.0
    %v3381 = vmul.f32 %v3379, %v2287
    %v3382 = vmul.f32 %v3380, %v2290
    %3385 = vrot.lane.b32.xlu0 %v3381, 2
    %v3386 = vpop.permute.xlu0 %3385
    %3387 = vrot.lane.b32.xlu0 %v3382, 2
    %v3388 = vpop.permute.xlu0 %3387
    %v3391 = vadd.f32 %v3361, %v3386
    %v3392 = vadd.f32 %v3362, %v3388
    %3393 = vrot.lane.b32.xlu0 %v1860, 32
    %v3394 = vpop.permute.xlu0 %3393
    %3395 = vrot.lane.b32.xlu0 %v1864, 32
    %v3396 = vpop.permute.xlu0 %3395
    %v3399 = vmul.f32 %v3189, %v3394
    %v3400 = vmul.f32 %v3190, %v3396
    %v3401 = vsel %vm143, %v3399, 0.0
    %3402 = vadd.xlane.f32.xlu0 %v3401
    %v3403 = vpop.xlane.xlu0 %3402
    %v3404 = vsel %vm143, %v3400, 0.0
    %3405 = vadd.xlane.f32.xlu0 %v3404
    %v3406 = vpop.xlane.xlu0 %3405
    %v3407 = vadd.f32 %v3403, %v1942
    %v3408 = vadd.f32 %v3406, %v1945
    %v3409 = vmax.f32 %v3407, 0.0
    %v3410 = vmax.f32 %v3408, 0.0
    %v3411 = vmul.f32 %v3409, %v2287
    %v3412 = vmul.f32 %v3410, %v2290
    %3415 = vrot.lane.b32.xlu0 %v3411, 1
    %v3416 = vpop.permute.xlu0 %3415
    %3417 = vrot.lane.b32.xlu0 %v3412, 1
    %v3418 = vpop.permute.xlu0 %3417
    %v3421 = vadd.f32 %v3391, %v3416
    %v3422 = vadd.f32 %v3392, %v3418
    %3425 = vrot.lane.b32.xlu0 %v3421, 120
    %v3426 = vpop.permute.xlu0 %3425
    %3427 = vrot.lane.b32.xlu0 %v3422, 120
    %v3428 = vpop.permute.xlu0 %3427
    %vm3431 = vcmask 7168
    %3432 = vst.msk [vmem:[%s12] sm:$0xff] %vm3431, %v3426
    %3433 = vst.msk [vmem:[%s12 + $0x8] sm:$0xff] %vm3431, %v3428
    // Predicated region
    $region74: #{tpu_custom_call.1} parent=1 // pred_check
      _
    $region75: #{tpu_custom_call.1} parent=1 // pred_check_branch
      %3435 = sbr.rel (0) target = $region77
    $region76: #{tpu_custom_call.1} parent=1 // pred_region
      _
    $region77: #{tpu_custom_call.1} parent=1 // pred_fallthru
      _
    // Predicated region
    $region78: #{tpu_custom_call.1} parent=1 // pred_check
      _
    $region79: #{tpu_custom_call.1} parent=1 // pred_check_branch
      %3437 = sbr.rel (0) target = $region81
    $region80: #{tpu_custom_call.1} parent=1 // pred_region
      _
    $region81: #{tpu_custom_call.1} parent=1 // pred_fallthru
      _
    %3438 = vsyncpa [#allocation3], 1
    %3439 = vsyncpa [#allocation5], 1
    %3440 = vsyncpa [#allocation8], 1
    %3441 = vsyncpa [#allocation11], 1

</llo_original>
